<compile_context>
chip_gen: v5e
topology: v5e:2x2
jax: 0.10.0
libtpu: 0.0.40
codegen_flags: <defaults>
</compile_context>

<pallas_src>
import functools

import numpy as np

import jax
import jax.numpy as jnp
from jax import lax
from jax.experimental import pallas as pl
from jax.experimental.pallas import tpu as pltpu


# ----------------------------------------------------------------------------
# Fused Pallas kernel: conv0 -> relu -> [conv -> BF_BN -> relu]* -> conv_last
# ----------------------------------------------------------------------------
def _bf_cnn_fused_kernel(x_ref, mask_ref, w_first_ref, w_mid_ref, g_ref,
                         w_last_ref, o_ref, *, num_layers, first_layer_linear,
                         W):
    """Entire BF_CNN forward in one program; channel-major (C, N*H*W) layout.

    x_ref      : (Cin, NHW)    bf16  input, channel-major flattened (n,h,w)
    mask_ref   : (9, 1, NHW)   bf16  {0,1} validity mask per 3x3 tap
    w_first_ref: (K, 9*Cin)    bf16  layer-0 weight, columns (dy, dx, cin)
    w_mid_ref  : (L-2, K, 9K)  bf16  mid-layer weights
    g_ref      : (L-2, K, 1)   f32   BF_batchNorm gammas
    w_last_ref : (Cout, 9K)    bf16  last-layer weight
    o_ref      : (Cout, NHW)   f32   output, channel-major flattened
    """
    NHW = x_ref.shape[1]
    PAD = 128                      # lane-aligned flat halo, > W + 1

    # Tap masks are layer-independent; load the 9 (1, NHW) rows once.
    masks = [mask_ref[t] for t in range(9)]

    def conv3x3(act_bf16, w):
        """'same' 3x3 cross-correlation: one (Cout, 9C) x (9C, NHW) matmul.

        The (dy, dx) tap is a lane shift of the flattened activation by
        dy*W + dx; row/image-boundary wrap-around is zeroed by the mask.
        """
        rows = act_bf16.shape[0]
        zpad = jnp.zeros((rows, PAD), jnp.bfloat16)
        padded = jnp.concatenate([zpad, act_bf16, zpad], axis=1)
        taps = []
        t = 0
        for dy in (-1, 0, 1):
            for dx in (-1, 0, 1):
                if dy == 0 and dx == 0:
                    taps.append(act_bf16)        # center tap: no shift, valid
                else:
                    off = dy * W + dx
                    sl = padded[:, PAD + off:PAD + off + NHW]
                    taps.append(sl * masks[t])
                t += 1
        patches = jnp.concatenate(taps, axis=0)              # (9*rows, NHW)
        return jnp.dot(w, patches,
                       preferred_element_type=jnp.float32)   # (Cout, NHW) f32

    h = conv3x3(x_ref[...], w_first_ref[...])                # (K, NHW) f32
    if not first_layer_linear:
        h = jnp.maximum(h, 0.0)

    inv_n = 1.0 / float(NHW)
    for l in range(num_layers - 2):
        h = conv3x3(h.astype(jnp.bfloat16), w_mid_ref[l])    # (K, NHW) f32
        # BF_batchNorm (training): x / sqrt(var_{N,H,W} + 1e-5) * gamma,
        # realized as a (K,1) per-channel scale (exact rsqrt, f32 stats).
        mean = jnp.sum(h, axis=1, keepdims=True) * inv_n         # (K, 1)
        ex2 = jnp.sum(h * h, axis=1, keepdims=True) * inv_n      # (K, 1)
        var = ex2 - mean * mean                                  # unbiased=False
        scale = g_ref[l] * lax.rsqrt(var + 1e-5)                 # (K, 1)
        h = jnp.maximum(h * scale, 0.0)      # scale BEFORE relu (gamma may be <0)

    out = conv3x3(h.astype(jnp.bfloat16), w_last_ref[...])   # (Cout, NHW) f32
    o_ref[...] = out.astype(o_ref.dtype)


# ----------------------------------------------------------------------------
# Wrapper: NCHW in/out, channel-major flattening, one pallas_call for the net
# ----------------------------------------------------------------------------
def _tap_masks(N, H, W):
    """{0,1} validity masks for the 9 taps of a 3x3 'same' conv, flattened."""
    hh, ww = np.meshgrid(np.arange(H), np.arange(W), indexing="ij")
    rows = []
    for dy in (-1, 0, 1):
        for dx in (-1, 0, 1):
            m = ((hh + dy >= 0) & (hh + dy < H) &
                 (ww + dx >= 0) & (ww + dx < W)).astype(np.float32)
            rows.append(np.broadcast_to(m, (N, H, W)).reshape(1, N * H * W))
    return np.stack(rows, axis=0)                           # (9, 1, N*H*W)


def bf_cnn_forward(x_nchw, conv_ws, gammas, *, first_layer_linear=False):
    num_layers = len(conv_ws)
    assert num_layers >= 3, "fused kernel assumes at least one BF_batchNorm layer"
    N, Cin, H, W = x_nchw.shape
    K = conv_ws[0].shape[-1]              # num_kernels (weights are HWIO)
    L2 = num_layers - 2
    NHW = N * H * W

    # Channel-major flattened activations (C, N*H*W): lane-dense everywhere.
    # bf16 feeds the MXU (reference applies the identical casts).
    x_t = jnp.transpose(x_nchw, (1, 0, 2, 3)).reshape(Cin, NHW)
    x_t = x_t.astype(jnp.bfloat16)

    masks = jnp.asarray(_tap_masks(N, H, W), dtype=jnp.bfloat16)    # (9,1,NHW)

    def flat_w(w):
        # HWIO (3,3,I,O) -> (O, 9*I); columns ordered (dy, dx, cin) to match
        # the kernel's tap concatenation order.
        kh, kw, ci, co = w.shape
        return (jnp.transpose(w, (3, 0, 1, 2))
                .reshape(co, kh * kw * ci).astype(jnp.bfloat16))

    w_first = flat_w(conv_ws[0])                                    # (K, 9*Cin)
    w_mid = jnp.stack([flat_w(conv_ws[l]) for l in range(1, num_layers - 1)])
    w_last = flat_w(conv_ws[-1])                                    # (Cin, 9K)
    g = jnp.stack([gg.reshape(K, 1) for gg in gammas])              # (L2, K, 1)

    kernel = functools.partial(_bf_cnn_fused_kernel, num_layers=num_layers,
                               first_layer_linear=first_layer_linear, W=W)
    out_flat = pl.pallas_call(
        kernel,
        out_shape=jax.ShapeDtypeStruct((Cin, NHW), jnp.float32),
        grid=(1,),
        in_specs=[
            pl.BlockSpec((Cin, NHW), lambda i: (0, 0)),
            pl.BlockSpec((9, 1, NHW), lambda i: (0, 0, 0)),
            pl.BlockSpec((K, 9 * Cin), lambda i: (0, 0)),
            pl.BlockSpec((L2, K, 9 * K), lambda i: (0, 0, 0)),
            pl.BlockSpec((L2, K, 1), lambda i: (0, 0, 0)),
            pl.BlockSpec((Cin, 9 * K), lambda i: (0, 0)),
        ],
        out_specs=pl.BlockSpec((Cin, NHW), lambda i: (0, 0)),
        compiler_params=pltpu.CompilerParams(
            dimension_semantics=("arbitrary",),
            vmem_limit_bytes=32 * 1024 * 1024),
    )(x_t, masks, w_first, w_mid, g, w_last)

    out = out_flat.reshape(Cin, N, H, W)
    return jnp.transpose(out, (1, 0, 2, 3)).astype(x_nchw.dtype)    # -> NCHW


# ----------------------------------------------------------------------------
# Pure-JAX reference with matching bf16 conv inputs (for correctness check)
# ----------------------------------------------------------------------------
def reference_forward(x_nchw, conv_ws, gammas, *, first_layer_linear):
    dn = ("NHWC", "HWIO", "NHWC")

    def conv(h, w):
        return lax.conv_general_dilated(
            h.astype(jnp.bfloat16), w.astype(jnp.bfloat16), (1, 1), "SAME",
            dimension_numbers=dn, preferred_element_type=jnp.float32)

    h = jnp.transpose(x_nchw, (0, 2, 3, 1))
    h = conv(h, conv_ws[0])
    if not first_layer_linear:
        h = jnp.maximum(h, 0.0)
    for l in range(1, len(conv_ws) - 1):
        h = conv(h, conv_ws[l])
        var = jnp.var(h, axis=(0, 1, 2), keepdims=True)   # unbiased=False
        sd = jnp.sqrt(var + 1e-5)
        h = h / sd * gammas[l - 1].reshape(1, 1, 1, -1)
        h = jnp.maximum(h, 0.0)
    h = conv(h, conv_ws[-1])
    return jnp.transpose(h, (0, 3, 1, 2))


# ----------------------------------------------------------------------------
# Deterministic parameter init (shapes per BF_CNN.__init__)
# ----------------------------------------------------------------------------
def init_params(key, num_layers, num_channels, num_kernels, ksize):
    conv_ws = []
    gammas = []
    io_dims = ([(num_channels, num_kernels)]
               + [(num_kernels, num_kernels)] * (num_layers - 2)
               + [(num_kernels, num_channels)])
    for (cin, cout) in io_dims:
        key, k = jax.random.split(key)
        fan_in = cin * ksize * ksize
        bound = 1.0 / jnp.sqrt(float(fan_in))
        w = jax.random.uniform(k, (ksize, ksize, cin, cout),
                               jnp.float32, -bound, bound)
        conv_ws.append(w)
    for _ in range(num_layers - 2):
        key, k = jax.random.split(key)
        g = jnp.clip(jax.random.normal(k, (num_kernels,), jnp.float32)
                     * (2.0 / 9.0 / 64.0), -0.025, 0.025)
        gammas.append(g)
    return conv_ws, gammas


if __name__ == "__main__":
    # args: num_layers=4, num_channels=4, num_kernels=32, kernel_size=3,
    #       padding=1, first_layer_linear=False
    N, C, H, W = 2, 4, 16, 16
    num_layers, num_kernels, ksize = 4, 32, 3
    first_layer_linear = False

    root = jax.random.PRNGKey(0)
    k_x, k_p = jax.random.split(root)
    x = jax.random.normal(k_x, (N, C, H, W), jnp.float32)
    conv_ws, gammas = init_params(k_p, num_layers, C, num_kernels, ksize)

    fwd = jax.jit(functools.partial(bf_cnn_forward,
                                    first_layer_linear=first_layer_linear))
    out = jax.block_until_ready(fwd(x, conv_ws, gammas))

    ref = jax.block_until_ready(
        reference_forward(x, conv_ws, gammas,
                          first_layer_linear=first_layer_linear))

    assert out.shape == (N, C, H, W), out.shape
    max_err = float(jnp.max(jnp.abs(out - ref)))
    assert jnp.allclose(out, ref, rtol=5e-3, atol=3e-5), max_err
    print("KERNEL_OK")
</pallas_src>

<mosaic_0001>
module attributes {stable_mosaic.version = 11 : i64} {
  func.func @_bf_cnn_fused_kernel(%arg0: i32, %arg1: memref<4x512xbf16, #tpu.memory_space<vmem>>, %arg2: memref<9x1x512xbf16, #tpu.memory_space<vmem>>, %arg3: memref<32x36xbf16, #tpu.memory_space<vmem>>, %arg4: memref<2x32x288xbf16, #tpu.memory_space<vmem>>, %arg5: memref<2x32x1xf32, #tpu.memory_space<vmem>>, %arg6: memref<4x288xbf16, #tpu.memory_space<vmem>>, %arg7: memref<4x512xf32, #tpu.memory_space<vmem>>) attributes {dimension_semantics = [#tpu.dimension_semantics<arbitrary>], iteration_bounds = array<i64: 1>, scalar_prefetch = 0 : i64, scratch_operands = 0 : i64, tpu.core_type = #tpu.core_type<tc>, window_params = [{pipeline_mode = #tpu.pipeline_mode<synchronous>, transform_indices = @transform_0, window_bounds = array<i64: 4, 512>}, {pipeline_mode = #tpu.pipeline_mode<synchronous>, transform_indices = @transform_1, window_bounds = array<i64: 9, 1, 512>}, {pipeline_mode = #tpu.pipeline_mode<synchronous>, transform_indices = @transform_2, window_bounds = array<i64: 32, 36>}, {pipeline_mode = #tpu.pipeline_mode<synchronous>, transform_indices = @transform_3, window_bounds = array<i64: 2, 32, 288>}, {pipeline_mode = #tpu.pipeline_mode<synchronous>, transform_indices = @transform_4, window_bounds = array<i64: 2, 32, 1>}, {pipeline_mode = #tpu.pipeline_mode<synchronous>, transform_indices = @transform_5, window_bounds = array<i64: 4, 288>}, {pipeline_mode = #tpu.pipeline_mode<synchronous>, transform_indices = @transform_6, window_bounds = array<i64: 4, 512>}]} {
    %c0 = arith.constant 0 : index
    %c0_0 = arith.constant 0 : index
    %c0_1 = arith.constant 0 : index
    %0 = vector.load %arg2[%c0, %c0_0, %c0_1] : memref<9x1x512xbf16, #tpu.memory_space<vmem>>, vector<1x1x512xbf16>
    %1 = vector.shape_cast %0 : vector<1x1x512xbf16> to vector<1x512xbf16>
    %c1 = arith.constant 1 : index
    %c0_2 = arith.constant 0 : index
    %c0_3 = arith.constant 0 : index
    %2 = vector.load %arg2[%c1, %c0_2, %c0_3] : memref<9x1x512xbf16, #tpu.memory_space<vmem>>, vector<1x1x512xbf16>
    %3 = vector.shape_cast %2 : vector<1x1x512xbf16> to vector<1x512xbf16>
    %c2 = arith.constant 2 : index
    %c0_4 = arith.constant 0 : index
    %c0_5 = arith.constant 0 : index
    %4 = vector.load %arg2[%c2, %c0_4, %c0_5] : memref<9x1x512xbf16, #tpu.memory_space<vmem>>, vector<1x1x512xbf16>
    %5 = vector.shape_cast %4 : vector<1x1x512xbf16> to vector<1x512xbf16>
    %c3 = arith.constant 3 : index
    %c0_6 = arith.constant 0 : index
    %c0_7 = arith.constant 0 : index
    %6 = vector.load %arg2[%c3, %c0_6, %c0_7] : memref<9x1x512xbf16, #tpu.memory_space<vmem>>, vector<1x1x512xbf16>
    %7 = vector.shape_cast %6 : vector<1x1x512xbf16> to vector<1x512xbf16>
    %c5 = arith.constant 5 : index
    %c0_8 = arith.constant 0 : index
    %c0_9 = arith.constant 0 : index
    %8 = vector.load %arg2[%c5, %c0_8, %c0_9] : memref<9x1x512xbf16, #tpu.memory_space<vmem>>, vector<1x1x512xbf16>
    %9 = vector.shape_cast %8 : vector<1x1x512xbf16> to vector<1x512xbf16>
    %c6 = arith.constant 6 : index
    %c0_10 = arith.constant 0 : index
    %c0_11 = arith.constant 0 : index
    %10 = vector.load %arg2[%c6, %c0_10, %c0_11] : memref<9x1x512xbf16, #tpu.memory_space<vmem>>, vector<1x1x512xbf16>
    %11 = vector.shape_cast %10 : vector<1x1x512xbf16> to vector<1x512xbf16>
    %c7 = arith.constant 7 : index
    %c0_12 = arith.constant 0 : index
    %c0_13 = arith.constant 0 : index
    %12 = vector.load %arg2[%c7, %c0_12, %c0_13] : memref<9x1x512xbf16, #tpu.memory_space<vmem>>, vector<1x1x512xbf16>
    %13 = vector.shape_cast %12 : vector<1x1x512xbf16> to vector<1x512xbf16>
    %c8 = arith.constant 8 : index
    %c0_14 = arith.constant 0 : index
    %c0_15 = arith.constant 0 : index
    %14 = vector.load %arg2[%c8, %c0_14, %c0_15] : memref<9x1x512xbf16, #tpu.memory_space<vmem>>, vector<1x1x512xbf16>
    %15 = vector.shape_cast %14 : vector<1x1x512xbf16> to vector<1x512xbf16>
    %c0_16 = arith.constant 0 : index
    %c0_17 = arith.constant 0 : index
    %16 = vector.load %arg1[%c0_16, %c0_17] : memref<4x512xbf16, #tpu.memory_space<vmem>>, vector<4x512xbf16>
    %c0_18 = arith.constant 0 : index
    %c0_19 = arith.constant 0 : index
    %17 = vector.load %arg3[%c0_18, %c0_19] : memref<32x36xbf16, #tpu.memory_space<vmem>>, vector<32x36xbf16>
    %cst = arith.constant 0.000000e+00 : bf16
    %18 = vector.broadcast %cst : bf16 to vector<4x128xbf16>
    %19 = tpu.concatenate %18, %16, %18 in 1 : vector<4x128xbf16>, vector<4x512xbf16>, vector<4x128xbf16> -> vector<4x768xbf16>
    %20 = vector.extract_strided_slice %19 {offsets = [0, 111], sizes = [4, 512], strides = [1, 1]} : vector<4x768xbf16> to vector<4x512xbf16>
    %21 = vector.broadcast %1 : vector<1x512xbf16> to vector<4x512xbf16>
    %22 = arith.mulf %20, %21 : vector<4x512xbf16>
    %23 = vector.extract_strided_slice %19 {offsets = [0, 112], sizes = [4, 512], strides = [1, 1]} : vector<4x768xbf16> to vector<4x512xbf16>
    %24 = vector.broadcast %3 : vector<1x512xbf16> to vector<4x512xbf16>
    %25 = arith.mulf %23, %24 : vector<4x512xbf16>
    %26 = vector.extract_strided_slice %19 {offsets = [0, 113], sizes = [4, 512], strides = [1, 1]} : vector<4x768xbf16> to vector<4x512xbf16>
    %27 = vector.broadcast %5 : vector<1x512xbf16> to vector<4x512xbf16>
    %28 = arith.mulf %26, %27 : vector<4x512xbf16>
    %29 = vector.extract_strided_slice %19 {offsets = [0, 127], sizes = [4, 512], strides = [1, 1]} : vector<4x768xbf16> to vector<4x512xbf16>
    %30 = vector.broadcast %7 : vector<1x512xbf16> to vector<4x512xbf16>
    %31 = arith.mulf %29, %30 : vector<4x512xbf16>
    %32 = vector.extract_strided_slice %19 {offsets = [0, 129], sizes = [4, 512], strides = [1, 1]} : vector<4x768xbf16> to vector<4x512xbf16>
    %33 = vector.broadcast %9 : vector<1x512xbf16> to vector<4x512xbf16>
    %34 = arith.mulf %32, %33 : vector<4x512xbf16>
    %35 = vector.extract_strided_slice %19 {offsets = [0, 143], sizes = [4, 512], strides = [1, 1]} : vector<4x768xbf16> to vector<4x512xbf16>
    %36 = vector.broadcast %11 : vector<1x512xbf16> to vector<4x512xbf16>
    %37 = arith.mulf %35, %36 : vector<4x512xbf16>
    %38 = vector.extract_strided_slice %19 {offsets = [0, 144], sizes = [4, 512], strides = [1, 1]} : vector<4x768xbf16> to vector<4x512xbf16>
    %39 = vector.broadcast %13 : vector<1x512xbf16> to vector<4x512xbf16>
    %40 = arith.mulf %38, %39 : vector<4x512xbf16>
    %41 = vector.extract_strided_slice %19 {offsets = [0, 145], sizes = [4, 512], strides = [1, 1]} : vector<4x768xbf16> to vector<4x512xbf16>
    %42 = vector.broadcast %15 : vector<1x512xbf16> to vector<4x512xbf16>
    %43 = arith.mulf %41, %42 : vector<4x512xbf16>
    %44 = tpu.concatenate %22, %25, %28, %31, %16, %34, %37, %40, %43 in 0 : vector<4x512xbf16>, vector<4x512xbf16>, vector<4x512xbf16>, vector<4x512xbf16>, vector<4x512xbf16>, vector<4x512xbf16>, vector<4x512xbf16>, vector<4x512xbf16>, vector<4x512xbf16> -> vector<36x512xbf16>
    %cst_20 = arith.constant dense<0.000000e+00> : vector<32x512xf32>
    %45 = tpu.matmul %17, %44, %cst_20 {dimension_numbers = #tpu.dot_dimension_numbers<[1], [0], [0], [1], [0, 0, 1, 1], [], []>} : vector<32x36xbf16>, vector<36x512xbf16>, vector<32x512xf32> -> vector<32x512xf32>
    %cst_21 = arith.constant 0.000000e+00 : f32
    %46 = vector.broadcast %cst_21 : f32 to vector<32x512xf32>
    %47 = arith.maximumf %45, %46 : vector<32x512xf32>
    %48 = arith.truncf %47 : vector<32x512xf32> to vector<32x512xbf16>
    %c0_22 = arith.constant 0 : index
    %c0_23 = arith.constant 0 : index
    %c0_24 = arith.constant 0 : index
    %49 = vector.load %arg4[%c0_22, %c0_23, %c0_24] : memref<2x32x288xbf16, #tpu.memory_space<vmem>>, vector<1x32x288xbf16>
    %50 = vector.shape_cast %49 : vector<1x32x288xbf16> to vector<32x288xbf16>
    %cst_25 = arith.constant 0.000000e+00 : bf16
    %51 = vector.broadcast %cst_25 : bf16 to vector<32x128xbf16>
    %52 = tpu.concatenate %51, %48, %51 in 1 : vector<32x128xbf16>, vector<32x512xbf16>, vector<32x128xbf16> -> vector<32x768xbf16>
    %53 = vector.extract_strided_slice %52 {offsets = [0, 111], sizes = [32, 512], strides = [1, 1]} : vector<32x768xbf16> to vector<32x512xbf16>
    %54 = vector.broadcast %1 : vector<1x512xbf16> to vector<32x512xbf16>
    %55 = arith.mulf %53, %54 : vector<32x512xbf16>
    %56 = vector.extract_strided_slice %52 {offsets = [0, 112], sizes = [32, 512], strides = [1, 1]} : vector<32x768xbf16> to vector<32x512xbf16>
    %57 = vector.broadcast %3 : vector<1x512xbf16> to vector<32x512xbf16>
    %58 = arith.mulf %56, %57 : vector<32x512xbf16>
    %59 = vector.extract_strided_slice %52 {offsets = [0, 113], sizes = [32, 512], strides = [1, 1]} : vector<32x768xbf16> to vector<32x512xbf16>
    %60 = vector.broadcast %5 : vector<1x512xbf16> to vector<32x512xbf16>
    %61 = arith.mulf %59, %60 : vector<32x512xbf16>
    %62 = vector.extract_strided_slice %52 {offsets = [0, 127], sizes = [32, 512], strides = [1, 1]} : vector<32x768xbf16> to vector<32x512xbf16>
    %63 = vector.broadcast %7 : vector<1x512xbf16> to vector<32x512xbf16>
    %64 = arith.mulf %62, %63 : vector<32x512xbf16>
    %65 = vector.extract_strided_slice %52 {offsets = [0, 129], sizes = [32, 512], strides = [1, 1]} : vector<32x768xbf16> to vector<32x512xbf16>
    %66 = vector.broadcast %9 : vector<1x512xbf16> to vector<32x512xbf16>
    %67 = arith.mulf %65, %66 : vector<32x512xbf16>
    %68 = vector.extract_strided_slice %52 {offsets = [0, 143], sizes = [32, 512], strides = [1, 1]} : vector<32x768xbf16> to vector<32x512xbf16>
    %69 = vector.broadcast %11 : vector<1x512xbf16> to vector<32x512xbf16>
    %70 = arith.mulf %68, %69 : vector<32x512xbf16>
    %71 = vector.extract_strided_slice %52 {offsets = [0, 144], sizes = [32, 512], strides = [1, 1]} : vector<32x768xbf16> to vector<32x512xbf16>
    %72 = vector.broadcast %13 : vector<1x512xbf16> to vector<32x512xbf16>
    %73 = arith.mulf %71, %72 : vector<32x512xbf16>
    %74 = vector.extract_strided_slice %52 {offsets = [0, 145], sizes = [32, 512], strides = [1, 1]} : vector<32x768xbf16> to vector<32x512xbf16>
    %75 = vector.broadcast %15 : vector<1x512xbf16> to vector<32x512xbf16>
    %76 = arith.mulf %74, %75 : vector<32x512xbf16>
    %77 = tpu.concatenate %55, %58, %61, %64, %48, %67, %70, %73, %76 in 0 : vector<32x512xbf16>, vector<32x512xbf16>, vector<32x512xbf16>, vector<32x512xbf16>, vector<32x512xbf16>, vector<32x512xbf16>, vector<32x512xbf16>, vector<32x512xbf16>, vector<32x512xbf16> -> vector<288x512xbf16>
    %cst_26 = arith.constant dense<0.000000e+00> : vector<32x512xf32>
    %78 = tpu.matmul %50, %77, %cst_26 {dimension_numbers = #tpu.dot_dimension_numbers<[1], [0], [0], [1], [0, 0, 1, 1], [], []>} : vector<32x288xbf16>, vector<288x512xbf16>, vector<32x512xf32> -> vector<32x512xf32>
    %cst_27 = arith.constant dense<0.000000e+00> : vector<32xf32>
    %79 = vector.multi_reduction <add>, %78, %cst_27 [1] : vector<32x512xf32> to vector<32xf32>
    %80 = vector.shape_cast %79 : vector<32xf32> to vector<32x1xf32>
    %cst_28 = arith.constant 0.001953125 : f32
    %81 = vector.broadcast %cst_28 : f32 to vector<32x1xf32>
    %82 = arith.mulf %80, %81 : vector<32x1xf32>
    %83 = arith.mulf %78, %78 : vector<32x512xf32>
    %cst_29 = arith.constant dense<0.000000e+00> : vector<32xf32>
    %84 = vector.multi_reduction <add>, %83, %cst_29 [1] : vector<32x512xf32> to vector<32xf32>
    %85 = vector.shape_cast %84 : vector<32xf32> to vector<32x1xf32>
    %cst_30 = arith.constant 0.001953125 : f32
    %86 = vector.broadcast %cst_30 : f32 to vector<32x1xf32>
    %87 = arith.mulf %85, %86 : vector<32x1xf32>
    %88 = arith.mulf %82, %82 : vector<32x1xf32>
    %89 = arith.subf %87, %88 : vector<32x1xf32>
    %c0_31 = arith.constant 0 : index
    %c0_32 = arith.constant 0 : index
    %c0_33 = arith.constant 0 : index
    %90 = vector.load %arg5[%c0_31, %c0_32, %c0_33] : memref<2x32x1xf32, #tpu.memory_space<vmem>>, vector<1x32x1xf32>
    %91 = vector.shape_cast %90 : vector<1x32x1xf32> to vector<32x1xf32>
    %cst_34 = arith.constant 9.99999974E-6 : f32
    %92 = vector.broadcast %cst_34 : f32 to vector<32x1xf32>
    %93 = arith.addf %89, %92 : vector<32x1xf32>
    %94 = math.rsqrt %93 : vector<32x1xf32>
    %95 = arith.mulf %91, %94 : vector<32x1xf32>
    %96 = vector.broadcast %95 : vector<32x1xf32> to vector<32x512xf32>
    %97 = arith.mulf %78, %96 : vector<32x512xf32>
    %cst_35 = arith.constant 0.000000e+00 : f32
    %98 = vector.broadcast %cst_35 : f32 to vector<32x512xf32>
    %99 = arith.maximumf %97, %98 : vector<32x512xf32>
    %100 = arith.truncf %99 : vector<32x512xf32> to vector<32x512xbf16>
    %c1_36 = arith.constant 1 : index
    %c0_37 = arith.constant 0 : index
    %c0_38 = arith.constant 0 : index
    %101 = vector.load %arg4[%c1_36, %c0_37, %c0_38] : memref<2x32x288xbf16, #tpu.memory_space<vmem>>, vector<1x32x288xbf16>
    %102 = vector.shape_cast %101 : vector<1x32x288xbf16> to vector<32x288xbf16>
    %cst_39 = arith.constant 0.000000e+00 : bf16
    %103 = vector.broadcast %cst_39 : bf16 to vector<32x128xbf16>
    %104 = tpu.concatenate %103, %100, %103 in 1 : vector<32x128xbf16>, vector<32x512xbf16>, vector<32x128xbf16> -> vector<32x768xbf16>
    %105 = vector.extract_strided_slice %104 {offsets = [0, 111], sizes = [32, 512], strides = [1, 1]} : vector<32x768xbf16> to vector<32x512xbf16>
    %106 = vector.broadcast %1 : vector<1x512xbf16> to vector<32x512xbf16>
    %107 = arith.mulf %105, %106 : vector<32x512xbf16>
    %108 = vector.extract_strided_slice %104 {offsets = [0, 112], sizes = [32, 512], strides = [1, 1]} : vector<32x768xbf16> to vector<32x512xbf16>
    %109 = vector.broadcast %3 : vector<1x512xbf16> to vector<32x512xbf16>
    %110 = arith.mulf %108, %109 : vector<32x512xbf16>
    %111 = vector.extract_strided_slice %104 {offsets = [0, 113], sizes = [32, 512], strides = [1, 1]} : vector<32x768xbf16> to vector<32x512xbf16>
    %112 = vector.broadcast %5 : vector<1x512xbf16> to vector<32x512xbf16>
    %113 = arith.mulf %111, %112 : vector<32x512xbf16>
    %114 = vector.extract_strided_slice %104 {offsets = [0, 127], sizes = [32, 512], strides = [1, 1]} : vector<32x768xbf16> to vector<32x512xbf16>
    %115 = vector.broadcast %7 : vector<1x512xbf16> to vector<32x512xbf16>
    %116 = arith.mulf %114, %115 : vector<32x512xbf16>
    %117 = vector.extract_strided_slice %104 {offsets = [0, 129], sizes = [32, 512], strides = [1, 1]} : vector<32x768xbf16> to vector<32x512xbf16>
    %118 = vector.broadcast %9 : vector<1x512xbf16> to vector<32x512xbf16>
    %119 = arith.mulf %117, %118 : vector<32x512xbf16>
    %120 = vector.extract_strided_slice %104 {offsets = [0, 143], sizes = [32, 512], strides = [1, 1]} : vector<32x768xbf16> to vector<32x512xbf16>
    %121 = vector.broadcast %11 : vector<1x512xbf16> to vector<32x512xbf16>
    %122 = arith.mulf %120, %121 : vector<32x512xbf16>
    %123 = vector.extract_strided_slice %104 {offsets = [0, 144], sizes = [32, 512], strides = [1, 1]} : vector<32x768xbf16> to vector<32x512xbf16>
    %124 = vector.broadcast %13 : vector<1x512xbf16> to vector<32x512xbf16>
    %125 = arith.mulf %123, %124 : vector<32x512xbf16>
    %126 = vector.extract_strided_slice %104 {offsets = [0, 145], sizes = [32, 512], strides = [1, 1]} : vector<32x768xbf16> to vector<32x512xbf16>
    %127 = vector.broadcast %15 : vector<1x512xbf16> to vector<32x512xbf16>
    %128 = arith.mulf %126, %127 : vector<32x512xbf16>
    %129 = tpu.concatenate %107, %110, %113, %116, %100, %119, %122, %125, %128 in 0 : vector<32x512xbf16>, vector<32x512xbf16>, vector<32x512xbf16>, vector<32x512xbf16>, vector<32x512xbf16>, vector<32x512xbf16>, vector<32x512xbf16>, vector<32x512xbf16>, vector<32x512xbf16> -> vector<288x512xbf16>
    %cst_40 = arith.constant dense<0.000000e+00> : vector<32x512xf32>
    %130 = tpu.matmul %102, %129, %cst_40 {dimension_numbers = #tpu.dot_dimension_numbers<[1], [0], [0], [1], [0, 0, 1, 1], [], []>} : vector<32x288xbf16>, vector<288x512xbf16>, vector<32x512xf32> -> vector<32x512xf32>
    %cst_41 = arith.constant dense<0.000000e+00> : vector<32xf32>
    %131 = vector.multi_reduction <add>, %130, %cst_41 [1] : vector<32x512xf32> to vector<32xf32>
    %132 = vector.shape_cast %131 : vector<32xf32> to vector<32x1xf32>
    %cst_42 = arith.constant 0.001953125 : f32
    %133 = vector.broadcast %cst_42 : f32 to vector<32x1xf32>
    %134 = arith.mulf %132, %133 : vector<32x1xf32>
    %135 = arith.mulf %130, %130 : vector<32x512xf32>
    %cst_43 = arith.constant dense<0.000000e+00> : vector<32xf32>
    %136 = vector.multi_reduction <add>, %135, %cst_43 [1] : vector<32x512xf32> to vector<32xf32>
    %137 = vector.shape_cast %136 : vector<32xf32> to vector<32x1xf32>
    %cst_44 = arith.constant 0.001953125 : f32
    %138 = vector.broadcast %cst_44 : f32 to vector<32x1xf32>
    %139 = arith.mulf %137, %138 : vector<32x1xf32>
    %140 = arith.mulf %134, %134 : vector<32x1xf32>
    %141 = arith.subf %139, %140 : vector<32x1xf32>
    %c1_45 = arith.constant 1 : index
    %c0_46 = arith.constant 0 : index
    %c0_47 = arith.constant 0 : index
    %142 = vector.load %arg5[%c1_45, %c0_46, %c0_47] : memref<2x32x1xf32, #tpu.memory_space<vmem>>, vector<1x32x1xf32>
    %143 = vector.shape_cast %142 : vector<1x32x1xf32> to vector<32x1xf32>
    %cst_48 = arith.constant 9.99999974E-6 : f32
    %144 = vector.broadcast %cst_48 : f32 to vector<32x1xf32>
    %145 = arith.addf %141, %144 : vector<32x1xf32>
    %146 = math.rsqrt %145 : vector<32x1xf32>
    %147 = arith.mulf %143, %146 : vector<32x1xf32>
    %148 = vector.broadcast %147 : vector<32x1xf32> to vector<32x512xf32>
    %149 = arith.mulf %130, %148 : vector<32x512xf32>
    %cst_49 = arith.constant 0.000000e+00 : f32
    %150 = vector.broadcast %cst_49 : f32 to vector<32x512xf32>
    %151 = arith.maximumf %149, %150 : vector<32x512xf32>
    %152 = arith.truncf %151 : vector<32x512xf32> to vector<32x512xbf16>
    %c0_50 = arith.constant 0 : index
    %c0_51 = arith.constant 0 : index
    %153 = vector.load %arg6[%c0_50, %c0_51] : memref<4x288xbf16, #tpu.memory_space<vmem>>, vector<4x288xbf16>
    %cst_52 = arith.constant 0.000000e+00 : bf16
    %154 = vector.broadcast %cst_52 : bf16 to vector<32x128xbf16>
    %155 = tpu.concatenate %154, %152, %154 in 1 : vector<32x128xbf16>, vector<32x512xbf16>, vector<32x128xbf16> -> vector<32x768xbf16>
    %156 = vector.extract_strided_slice %155 {offsets = [0, 111], sizes = [32, 512], strides = [1, 1]} : vector<32x768xbf16> to vector<32x512xbf16>
    %157 = vector.broadcast %1 : vector<1x512xbf16> to vector<32x512xbf16>
    %158 = arith.mulf %156, %157 : vector<32x512xbf16>
    %159 = vector.extract_strided_slice %155 {offsets = [0, 112], sizes = [32, 512], strides = [1, 1]} : vector<32x768xbf16> to vector<32x512xbf16>
    %160 = vector.broadcast %3 : vector<1x512xbf16> to vector<32x512xbf16>
    %161 = arith.mulf %159, %160 : vector<32x512xbf16>
    %162 = vector.extract_strided_slice %155 {offsets = [0, 113], sizes = [32, 512], strides = [1, 1]} : vector<32x768xbf16> to vector<32x512xbf16>
    %163 = vector.broadcast %5 : vector<1x512xbf16> to vector<32x512xbf16>
    %164 = arith.mulf %162, %163 : vector<32x512xbf16>
    %165 = vector.extract_strided_slice %155 {offsets = [0, 127], sizes = [32, 512], strides = [1, 1]} : vector<32x768xbf16> to vector<32x512xbf16>
    %166 = vector.broadcast %7 : vector<1x512xbf16> to vector<32x512xbf16>
    %167 = arith.mulf %165, %166 : vector<32x512xbf16>
    %168 = vector.extract_strided_slice %155 {offsets = [0, 129], sizes = [32, 512], strides = [1, 1]} : vector<32x768xbf16> to vector<32x512xbf16>
    %169 = vector.broadcast %9 : vector<1x512xbf16> to vector<32x512xbf16>
    %170 = arith.mulf %168, %169 : vector<32x512xbf16>
    %171 = vector.extract_strided_slice %155 {offsets = [0, 143], sizes = [32, 512], strides = [1, 1]} : vector<32x768xbf16> to vector<32x512xbf16>
    %172 = vector.broadcast %11 : vector<1x512xbf16> to vector<32x512xbf16>
    %173 = arith.mulf %171, %172 : vector<32x512xbf16>
    %174 = vector.extract_strided_slice %155 {offsets = [0, 144], sizes = [32, 512], strides = [1, 1]} : vector<32x768xbf16> to vector<32x512xbf16>
    %175 = vector.broadcast %13 : vector<1x512xbf16> to vector<32x512xbf16>
    %176 = arith.mulf %174, %175 : vector<32x512xbf16>
    %177 = vector.extract_strided_slice %155 {offsets = [0, 145], sizes = [32, 512], strides = [1, 1]} : vector<32x768xbf16> to vector<32x512xbf16>
    %178 = vector.broadcast %15 : vector<1x512xbf16> to vector<32x512xbf16>
    %179 = arith.mulf %177, %178 : vector<32x512xbf16>
    %180 = tpu.concatenate %158, %161, %164, %167, %152, %170, %173, %176, %179 in 0 : vector<32x512xbf16>, vector<32x512xbf16>, vector<32x512xbf16>, vector<32x512xbf16>, vector<32x512xbf16>, vector<32x512xbf16>, vector<32x512xbf16>, vector<32x512xbf16>, vector<32x512xbf16> -> vector<288x512xbf16>
    %cst_53 = arith.constant dense<0.000000e+00> : vector<4x512xf32>
    %181 = tpu.matmul %153, %180, %cst_53 {dimension_numbers = #tpu.dot_dimension_numbers<[1], [0], [0], [1], [0, 0, 1, 1], [], []>} : vector<4x288xbf16>, vector<288x512xbf16>, vector<4x512xf32> -> vector<4x512xf32>
    %c0_54 = arith.constant 0 : index
    %c0_55 = arith.constant 0 : index
    %182 = vector.load %arg7[%c0_54, %c0_55] : memref<4x512xf32, #tpu.memory_space<vmem>>, vector<4x512xf32>
    tpu.vector_store %arg7[%c0_54, %c0_55], %181 {strides = array<i32>} : memref<4x512xf32, #tpu.memory_space<vmem>>, vector<4x512xf32>,
    return
  }
  func.func @transform_0(%arg0: i32) -> (i32, i32) {
    %c0_i32 = arith.constant 0 : i32
    %c0_i32_0 = arith.constant 0 : i32
    %c0_i32_1 = arith.constant 0 : i32
    return %c0_i32, %c0_i32_0 : i32, i32
  }
  func.func @transform_1(%arg0: i32) -> (i32, i32, i32) {
    %c0_i32 = arith.constant 0 : i32
    %c0_i32_0 = arith.constant 0 : i32
    %c0_i32_1 = arith.constant 0 : i32
    %c0_i32_2 = arith.constant 0 : i32
    return %c0_i32, %c0_i32_0, %c0_i32_1 : i32, i32, i32
  }
  func.func @transform_2(%arg0: i32) -> (i32, i32) {
    %c0_i32 = arith.constant 0 : i32
    %c0_i32_0 = arith.constant 0 : i32
    %c0_i32_1 = arith.constant 0 : i32
    return %c0_i32, %c0_i32_0 : i32, i32
  }
  func.func @transform_3(%arg0: i32) -> (i32, i32, i32) {
    %c0_i32 = arith.constant 0 : i32
    %c0_i32_0 = arith.constant 0 : i32
    %c0_i32_1 = arith.constant 0 : i32
    %c0_i32_2 = arith.constant 0 : i32
    return %c0_i32, %c0_i32_0, %c0_i32_1 : i32, i32, i32
  }
  func.func @transform_4(%arg0: i32) -> (i32, i32, i32) {
    %c0_i32 = arith.constant 0 : i32
    %c0_i32_0 = arith.constant 0 : i32
    %c0_i32_1 = arith.constant 0 : i32
    %c0_i32_2 = arith.constant 0 : i32
    return %c0_i32, %c0_i32_0, %c0_i32_1 : i32, i32, i32
  }
  func.func @transform_5(%arg0: i32) -> (i32, i32) {
    %c0_i32 = arith.constant 0 : i32
    %c0_i32_0 = arith.constant 0 : i32
    %c0_i32_1 = arith.constant 0 : i32
    return %c0_i32, %c0_i32_0 : i32, i32
  }
  func.func @transform_6(%arg0: i32) -> (i32, i32) {
    %c0_i32 = arith.constant 0 : i32
    %c0_i32_0 = arith.constant 0 : i32
    %c0_i32_1 = arith.constant 0 : i32
    return %c0_i32, %c0_i32_0 : i32, i32
  }
}

</mosaic_0001>

<llo_original>
// kernel: bf_cnn_forward.1
$region0: #{bf_cnn_forward.1}
  #allocation0 [shape = 'u32[]', space=smem, size = 0x4, offset = 0x4, fixed_abs, tag = 'smem constant byte address 0x4 - core index']
  #allocation1 [shape = 'u32[72,128]{1,0:T(1,128)}', space=vmem, size = 0x9000, scoped, tag = 'internal scratch']
  %s0 = inlined_call_operand.vmem [shape: bf16[4,512], index: 0, kind: input, shape index: {}]
  %s1 = inlined_call_operand.vmem [shape: bf16[9,1,512], index: 1, kind: input, shape index: {}]
  %s2 = inlined_call_operand.vmem [shape: bf16[32,36], index: 2, kind: input, shape index: {}]
  %s3 = inlined_call_operand.vmem [shape: bf16[2,32,288], index: 3, kind: input, shape index: {}]
  %s4 = inlined_call_operand.vmem [shape: f32[2,32,1], index: 4, kind: input, shape index: {}]
  %s5 = inlined_call_operand.vmem [shape: bf16[4,288], index: 5, kind: input, shape index: {}]
  %s6 = inlined_call_operand.vmem [shape: f32[4,512], index: 6, kind: output, shape index: {}]
  %s7 = sld [smem:[#allocation0]]
  $region34: #{bf_cnn_forward.1} parent=0
    _
  %s9 = ssub.s32 1, %s7
  %s10 = scalar_select 0, %s9, %s7
  // Predicated region
  $region2: #{bf_cnn_forward.1} parent=0 // pred_check
    _
  $region3: #{bf_cnn_forward.1} parent=0 // pred_check_branch
    %12 = sbr.rel (0) target = $region5
  $region4: #{bf_cnn_forward.1} parent=0 // pred_region
    _
  $region5: #{bf_cnn_forward.1} parent=0 // pred_fallthru
    _
  // Predicated region
  $region6: #{bf_cnn_forward.1} parent=0 // pred_check
    _
  $region7: #{bf_cnn_forward.1} parent=0 // pred_check_branch
    %14 = sbr.rel (0) target = $region9
  $region8: #{bf_cnn_forward.1} parent=0 // pred_region
    _
  $region9: #{bf_cnn_forward.1} parent=0 // pred_fallthru
    _
  // Predicated region
  $region10: #{bf_cnn_forward.1} parent=0 // pred_check
    _
  $region11: #{bf_cnn_forward.1} parent=0 // pred_check_branch
    %16 = sbr.rel (0) target = $region13
  $region12: #{bf_cnn_forward.1} parent=0 // pred_region
    _
  $region13: #{bf_cnn_forward.1} parent=0 // pred_fallthru
    _
  // Predicated region
  $region14: #{bf_cnn_forward.1} parent=0 // pred_check
    _
  $region15: #{bf_cnn_forward.1} parent=0 // pred_check_branch
    %18 = sbr.rel (0) target = $region17
  $region16: #{bf_cnn_forward.1} parent=0 // pred_region
    _
  $region17: #{bf_cnn_forward.1} parent=0 // pred_fallthru
    _
  // Predicated region
  $region18: #{bf_cnn_forward.1} parent=0 // pred_check
    _
  $region19: #{bf_cnn_forward.1} parent=0 // pred_check_branch
    %20 = sbr.rel (0) target = $region21
  $region20: #{bf_cnn_forward.1} parent=0 // pred_region
    _
  $region21: #{bf_cnn_forward.1} parent=0 // pred_fallthru
    _
  // Predicated region
  $region22: #{bf_cnn_forward.1} parent=0 // pred_check
    _
  $region23: #{bf_cnn_forward.1} parent=0 // pred_check_branch
    %22 = sbr.rel (0) target = $region25
  $region24: #{bf_cnn_forward.1} parent=0 // pred_region
    _
  $region25: #{bf_cnn_forward.1} parent=0 // pred_fallthru
    _
  %v24 = vld [vmem:[%s1] sm:$0xf]
  %s25 = scalar_lea.vmem %s1, 4
  %v26 = vld [vmem:[%s25] sm:$0xf]
  %s27 = scalar_lea.vmem %s1, 8
  %v28 = vld [vmem:[%s27] sm:$0xf]
  %s29 = scalar_lea.vmem %s1, 12
  %v30 = vld [vmem:[%s29] sm:$0xf]
  %s31 = scalar_lea.vmem %s1, 20
  %v32 = vld [vmem:[%s31] sm:$0xf]
  %s33 = scalar_lea.vmem %s1, 24
  %v34 = vld [vmem:[%s33] sm:$0xf]
  %s35 = scalar_lea.vmem %s1, 28
  %v36 = vld [vmem:[%s35] sm:$0xf]
  %s37 = scalar_lea.vmem %s1, 32
  %v38 = vld [vmem:[%s37] sm:$0xf]
  %v39 = vld [vmem:[%s0] sm:$0xff]
  %v40 = vld [vmem:[%s2] sm:$0xf]
  %v41 = vld [vmem:[%s2 + $0x4] sm:$0xf]
  %v42 = vld [vmem:[%s2 + $0x8] sm:$0xf]
  %v43 = vld [vmem:[%s2 + $0xc] sm:$0xf]
  %45 = vst [vmem:[#allocation1] ss:$4 sm:$0xff] %v39
  %v46 = vld.sshfl [vmem:[#allocation1] sm:$0xff pattern:$0x73625140]
  %v47 = vld.sshfl [vmem:[#allocation1 + $0x8] sm:$0xff pattern:$0x73625140]
  %v48 = vld.sshfl [vmem:[#allocation1 + $0x10] sm:$0xff pattern:$0x73625140]
  %v49 = vld.sshfl [vmem:[#allocation1 + $0x18] sm:$0xff pattern:$0x73625140]
  %55 = vst [vmem:[#allocation1] ss:$9 sm:$0xff] %v24
  %v56 = vld [vmem:[#allocation1] sm:$0xff]
  %v57 = vld [vmem:[#allocation1 + $0x9] sm:$0xff]
  %v58 = vld [vmem:[#allocation1 + $0x12] sm:$0xff]
  %v59 = vld [vmem:[#allocation1 + $0x1b] sm:$0xff]
  %v60 = vpack.i.b16 %v56, %v56
  %v62 = vperm.slane %v60, 0
  %v63 = vpack.i.b16 %v57, %v57
  %v65 = vperm.slane %v63, 0
  %v66 = vpack.i.b16 %v58, %v58
  %v68 = vperm.slane %v66, 0
  %v69 = vpack.i.b16 %v59, %v59
  %v71 = vperm.slane %v69, 0
  %v72 = vunpack.c.l.bf16 0
  %v73 = vunpack.c.l.bf16 %v46
  %v74 = vunpack.c.l.bf16 %v47
  %v75 = vunpack.c.l.bf16 %v48
  %v76 = vunpack.c.l.bf16 %v49
  %v77 = vunpack.c.l.bf16 %v62
  %v78 = vunpack.c.l.bf16 %v65
  %v79 = vunpack.c.l.bf16 %v68
  %v80 = vunpack.c.l.bf16 %v71
  %85 = vrot.lane.b32.xlu0 %v77, 111
  %v86 = vpop.permute.xlu0 %85
  %87 = vrot.lane.b32.xlu0 %v78, 111
  %v88 = vpop.permute.xlu0 %87
  %89 = vrot.lane.b32.xlu0 %v79, 111
  %v90 = vpop.permute.xlu0 %89
  %91 = vrot.lane.b32.xlu0 %v80, 111
  %v92 = vpop.permute.xlu0 %91
  %vm93 = vcmask 908288
  %v94 = vsel %vm93, %v86, %v88
  %v95 = vsel %vm93, %v88, %v90
  %v96 = vsel %vm93, %v90, %v92
  %v102 = vmul.f32 %v72, %v86
  %v103 = vmul.f32 %v73, %v94
  %v104 = vmul.f32 %v74, %v95
  %v105 = vmul.f32 %v75, %v96
  %v106 = vmul.f32 %v76, %v92
  %v107 = vpack.c.bf16 %v103, %v102
  %v108 = vpack.c.bf16 %v105, %v104
  %v109 = vpack.c.bf16 %v106, %v106
  %111 = vst [vmem:[#allocation1] ss:$9 sm:$0xff] %v26
  %v112 = vld [vmem:[#allocation1] sm:$0xff]
  %v113 = vld [vmem:[#allocation1 + $0x9] sm:$0xff]
  %v114 = vld [vmem:[#allocation1 + $0x12] sm:$0xff]
  %v115 = vld [vmem:[#allocation1 + $0x1b] sm:$0xff]
  %v116 = vpack.i.b16 %v112, %v112
  %v118 = vperm.slane %v116, 0
  %v119 = vpack.i.b16 %v113, %v113
  %v121 = vperm.slane %v119, 0
  %v122 = vpack.i.b16 %v114, %v114
  %v124 = vperm.slane %v122, 0
  %v125 = vpack.i.b16 %v115, %v115
  %v127 = vperm.slane %v125, 0
  %v128 = vunpack.c.l.bf16 %v118
  %v129 = vunpack.c.l.bf16 %v121
  %v130 = vunpack.c.l.bf16 %v124
  %v131 = vunpack.c.l.bf16 %v127
  %136 = vrot.lane.b32.xlu0 %v128, 112
  %v137 = vpop.permute.xlu0 %136
  %138 = vrot.lane.b32.xlu0 %v129, 112
  %v139 = vpop.permute.xlu0 %138
  %140 = vrot.lane.b32.xlu0 %v130, 112
  %v141 = vpop.permute.xlu0 %140
  %142 = vrot.lane.b32.xlu0 %v131, 112
  %v143 = vpop.permute.xlu0 %142
  %vm144 = vcmask 916480
  %v145 = vsel %vm144, %v137, %v139
  %v146 = vsel %vm144, %v139, %v141
  %v147 = vsel %vm144, %v141, %v143
  %v153 = vmul.f32 %v72, %v137
  %v154 = vmul.f32 %v73, %v145
  %v155 = vmul.f32 %v74, %v146
  %v156 = vmul.f32 %v75, %v147
  %v157 = vmul.f32 %v76, %v143
  %v158 = vpack.c.bf16 %v154, %v153
  %v159 = vpack.c.bf16 %v156, %v155
  %v160 = vpack.c.bf16 %v157, %v157
  %162 = vst [vmem:[#allocation1] ss:$9 sm:$0xff] %v28
  %v163 = vld [vmem:[#allocation1] sm:$0xff]
  %v164 = vld [vmem:[#allocation1 + $0x9] sm:$0xff]
  %v165 = vld [vmem:[#allocation1 + $0x12] sm:$0xff]
  %v166 = vld [vmem:[#allocation1 + $0x1b] sm:$0xff]
  %v167 = vpack.i.b16 %v163, %v163
  %v169 = vperm.slane %v167, 0
  %v170 = vpack.i.b16 %v164, %v164
  %v172 = vperm.slane %v170, 0
  %v173 = vpack.i.b16 %v165, %v165
  %v175 = vperm.slane %v173, 0
  %v176 = vpack.i.b16 %v166, %v166
  %v178 = vperm.slane %v176, 0
  %v179 = vunpack.c.l.bf16 %v169
  %v180 = vunpack.c.l.bf16 %v172
  %v181 = vunpack.c.l.bf16 %v175
  %v182 = vunpack.c.l.bf16 %v178
  %187 = vrot.lane.b32.xlu0 %v179, 113
  %v188 = vpop.permute.xlu0 %187
  %189 = vrot.lane.b32.xlu0 %v180, 113
  %v190 = vpop.permute.xlu0 %189
  %191 = vrot.lane.b32.xlu0 %v181, 113
  %v192 = vpop.permute.xlu0 %191
  %193 = vrot.lane.b32.xlu0 %v182, 113
  %v194 = vpop.permute.xlu0 %193
  %vm195 = vcmask 924672
  %v196 = vsel %vm195, %v188, %v190
  %v197 = vsel %vm195, %v190, %v192
  %v198 = vsel %vm195, %v192, %v194
  %v204 = vmul.f32 %v72, %v188
  %v205 = vmul.f32 %v73, %v196
  %v206 = vmul.f32 %v74, %v197
  %v207 = vmul.f32 %v75, %v198
  %v208 = vmul.f32 %v76, %v194
  %v209 = vpack.c.bf16 %v205, %v204
  %v210 = vpack.c.bf16 %v207, %v206
  %v211 = vpack.c.bf16 %v208, %v208
  %213 = vst [vmem:[#allocation1] ss:$9 sm:$0xff] %v30
  %v214 = vld [vmem:[#allocation1] sm:$0xff]
  %v215 = vld [vmem:[#allocation1 + $0x9] sm:$0xff]
  %v216 = vld [vmem:[#allocation1 + $0x12] sm:$0xff]
  %v217 = vld [vmem:[#allocation1 + $0x1b] sm:$0xff]
  %v218 = vpack.i.b16 %v214, %v214
  %v220 = vperm.slane %v218, 0
  %v221 = vpack.i.b16 %v215, %v215
  %v223 = vperm.slane %v221, 0
  %v224 = vpack.i.b16 %v216, %v216
  %v226 = vperm.slane %v224, 0
  %v227 = vpack.i.b16 %v217, %v217
  %v229 = vperm.slane %v227, 0
  %v230 = vunpack.c.l.bf16 %v220
  %v231 = vunpack.c.l.bf16 %v223
  %v232 = vunpack.c.l.bf16 %v226
  %v233 = vunpack.c.l.bf16 %v229
  %238 = vrot.lane.b32.xlu0 %v230, 127
  %v239 = vpop.permute.xlu0 %238
  %240 = vrot.lane.b32.xlu0 %v231, 127
  %v241 = vpop.permute.xlu0 %240
  %242 = vrot.lane.b32.xlu0 %v232, 127
  %v243 = vpop.permute.xlu0 %242
  %244 = vrot.lane.b32.xlu0 %v233, 127
  %v245 = vpop.permute.xlu0 %244
  %vm246 = vcmask 1039360
  %v247 = vsel %vm246, %v239, %v241
  %v248 = vsel %vm246, %v241, %v243
  %v249 = vsel %vm246, %v243, %v245
  %v255 = vmul.f32 %v72, %v239
  %v256 = vmul.f32 %v73, %v247
  %v257 = vmul.f32 %v74, %v248
  %v258 = vmul.f32 %v75, %v249
  %v259 = vmul.f32 %v76, %v245
  %v260 = vpack.c.bf16 %v256, %v255
  %v261 = vpack.c.bf16 %v258, %v257
  %v262 = vpack.c.bf16 %v259, %v259
  %264 = vst [vmem:[#allocation1] ss:$9 sm:$0xff] %v32
  %v265 = vld [vmem:[#allocation1] sm:$0xff]
  %v266 = vld [vmem:[#allocation1 + $0x9] sm:$0xff]
  %v267 = vld [vmem:[#allocation1 + $0x12] sm:$0xff]
  %v268 = vld [vmem:[#allocation1 + $0x1b] sm:$0xff]
  %v269 = vpack.i.b16 %v265, %v265
  %v271 = vperm.slane %v269, 0
  %v272 = vpack.i.b16 %v266, %v266
  %v274 = vperm.slane %v272, 0
  %v275 = vpack.i.b16 %v267, %v267
  %v277 = vperm.slane %v275, 0
  %v278 = vpack.i.b16 %v268, %v268
  %v280 = vperm.slane %v278, 0
  %v281 = vunpack.c.l.bf16 %v271
  %v282 = vunpack.c.l.bf16 %v274
  %v283 = vunpack.c.l.bf16 %v277
  %v284 = vunpack.c.l.bf16 %v280
  %289 = vrot.lane.b32.xlu0 %v281, 1
  %v290 = vpop.permute.xlu0 %289
  %291 = vrot.lane.b32.xlu0 %v282, 1
  %v292 = vpop.permute.xlu0 %291
  %293 = vrot.lane.b32.xlu0 %v283, 1
  %v294 = vpop.permute.xlu0 %293
  %295 = vrot.lane.b32.xlu0 %v284, 1
  %v296 = vpop.permute.xlu0 %295
  %vm297 = vcmask 7168
  %v298 = vsel %vm297, %v290, %v292
  %v299 = vsel %vm297, %v292, %v294
  %v300 = vsel %vm297, %v294, %v296
  %v306 = vmul.f32 %v73, %v290
  %v307 = vmul.f32 %v74, %v298
  %v308 = vmul.f32 %v75, %v299
  %v309 = vmul.f32 %v76, %v300
  %v310 = vmul.f32 %v72, %v296
  %v311 = vpack.c.bf16 %v307, %v306
  %v312 = vpack.c.bf16 %v309, %v308
  %v313 = vpack.c.bf16 %v310, %v310
  %315 = vst [vmem:[#allocation1] ss:$9 sm:$0xff] %v34
  %v316 = vld [vmem:[#allocation1] sm:$0xff]
  %v317 = vld [vmem:[#allocation1 + $0x9] sm:$0xff]
  %v318 = vld [vmem:[#allocation1 + $0x12] sm:$0xff]
  %v319 = vld [vmem:[#allocation1 + $0x1b] sm:$0xff]
  %v320 = vpack.i.b16 %v316, %v316
  %v322 = vperm.slane %v320, 0
  %v323 = vpack.i.b16 %v317, %v317
  %v325 = vperm.slane %v323, 0
  %v326 = vpack.i.b16 %v318, %v318
  %v328 = vperm.slane %v326, 0
  %v329 = vpack.i.b16 %v319, %v319
  %v331 = vperm.slane %v329, 0
  %v332 = vunpack.c.l.bf16 %v322
  %v333 = vunpack.c.l.bf16 %v325
  %v334 = vunpack.c.l.bf16 %v328
  %v335 = vunpack.c.l.bf16 %v331
  %340 = vrot.lane.b32.xlu0 %v332, 15
  %v341 = vpop.permute.xlu0 %340
  %342 = vrot.lane.b32.xlu0 %v333, 15
  %v343 = vpop.permute.xlu0 %342
  %344 = vrot.lane.b32.xlu0 %v334, 15
  %v345 = vpop.permute.xlu0 %344
  %346 = vrot.lane.b32.xlu0 %v335, 15
  %v347 = vpop.permute.xlu0 %346
  %vm348 = vcmask 121856
  %v349 = vsel %vm348, %v341, %v343
  %v350 = vsel %vm348, %v343, %v345
  %v351 = vsel %vm348, %v345, %v347
  %v357 = vmul.f32 %v73, %v341
  %v358 = vmul.f32 %v74, %v349
  %v359 = vmul.f32 %v75, %v350
  %v360 = vmul.f32 %v76, %v351
  %v361 = vmul.f32 %v72, %v347
  %v362 = vpack.c.bf16 %v358, %v357
  %v363 = vpack.c.bf16 %v360, %v359
  %v364 = vpack.c.bf16 %v361, %v361
  %366 = vst [vmem:[#allocation1] ss:$9 sm:$0xff] %v36
  %v367 = vld [vmem:[#allocation1] sm:$0xff]
  %v368 = vld [vmem:[#allocation1 + $0x9] sm:$0xff]
  %v369 = vld [vmem:[#allocation1 + $0x12] sm:$0xff]
  %v370 = vld [vmem:[#allocation1 + $0x1b] sm:$0xff]
  %v371 = vpack.i.b16 %v367, %v367
  %v373 = vperm.slane %v371, 0
  %v374 = vpack.i.b16 %v368, %v368
  %v376 = vperm.slane %v374, 0
  %v377 = vpack.i.b16 %v369, %v369
  %v379 = vperm.slane %v377, 0
  %v380 = vpack.i.b16 %v370, %v370
  %v382 = vperm.slane %v380, 0
  %v383 = vunpack.c.l.bf16 %v373
  %v384 = vunpack.c.l.bf16 %v376
  %v385 = vunpack.c.l.bf16 %v379
  %v386 = vunpack.c.l.bf16 %v382
  %391 = vrot.lane.b32.xlu0 %v383, 16
  %v392 = vpop.permute.xlu0 %391
  %393 = vrot.lane.b32.xlu0 %v384, 16
  %v394 = vpop.permute.xlu0 %393
  %395 = vrot.lane.b32.xlu0 %v385, 16
  %v396 = vpop.permute.xlu0 %395
  %397 = vrot.lane.b32.xlu0 %v386, 16
  %v398 = vpop.permute.xlu0 %397
  %vm399 = vcmask 130048
  %v400 = vsel %vm399, %v392, %v394
  %v401 = vsel %vm399, %v394, %v396
  %v402 = vsel %vm399, %v396, %v398
  %v408 = vmul.f32 %v73, %v392
  %v409 = vmul.f32 %v74, %v400
  %v410 = vmul.f32 %v75, %v401
  %v411 = vmul.f32 %v76, %v402
  %v412 = vmul.f32 %v72, %v398
  %v413 = vpack.c.bf16 %v409, %v408
  %v414 = vpack.c.bf16 %v411, %v410
  %v415 = vpack.c.bf16 %v412, %v412
  %417 = vst [vmem:[#allocation1] ss:$9 sm:$0xff] %v38
  %v418 = vld [vmem:[#allocation1] sm:$0xff]
  %v419 = vld [vmem:[#allocation1 + $0x9] sm:$0xff]
  %v420 = vld [vmem:[#allocation1 + $0x12] sm:$0xff]
  %v421 = vld [vmem:[#allocation1 + $0x1b] sm:$0xff]
  %v422 = vpack.i.b16 %v418, %v418
  %v424 = vperm.slane %v422, 0
  %v425 = vpack.i.b16 %v419, %v419
  %v427 = vperm.slane %v425, 0
  %v428 = vpack.i.b16 %v420, %v420
  %v430 = vperm.slane %v428, 0
  %v431 = vpack.i.b16 %v421, %v421
  %v433 = vperm.slane %v431, 0
  %v434 = vunpack.c.l.bf16 %v424
  %v435 = vunpack.c.l.bf16 %v427
  %v436 = vunpack.c.l.bf16 %v430
  %v437 = vunpack.c.l.bf16 %v433
  %442 = vrot.lane.b32.xlu0 %v434, 17
  %v443 = vpop.permute.xlu0 %442
  %444 = vrot.lane.b32.xlu0 %v435, 17
  %v445 = vpop.permute.xlu0 %444
  %446 = vrot.lane.b32.xlu0 %v436, 17
  %v447 = vpop.permute.xlu0 %446
  %448 = vrot.lane.b32.xlu0 %v437, 17
  %v449 = vpop.permute.xlu0 %448
  %vm450 = vcmask 138240
  %v451 = vsel %vm450, %v443, %v445
  %v452 = vsel %vm450, %v445, %v447
  %v453 = vsel %vm450, %v447, %v449
  %v459 = vmul.f32 %v73, %v443
  %v460 = vmul.f32 %v74, %v451
  %v461 = vmul.f32 %v75, %v452
  %v462 = vmul.f32 %v76, %v453
  %v463 = vmul.f32 %v72, %v449
  %v464 = vpack.c.bf16 %v460, %v459
  %v465 = vpack.c.bf16 %v462, %v461
  %v466 = vpack.c.bf16 %v463, %v463
  %v470 = vunpack.c.l.b16 %v107
  %v471 = vunpack.c.h.b16 %v107
  %v472 = vunpack.c.l.b16 %v108
  %v473 = vunpack.c.h.b16 %v108
  %v474 = vunpack.c.l.b16 %v109
  %v475 = vpack.c.b16 %v470, %v470
  %v476 = vpack.c.b16 %v471, %v471
  %v477 = vpack.c.b16 %v472, %v472
  %v478 = vpack.c.b16 %v473, %v473
  %v479 = vpack.c.b16 %v474, %v474
  %v483 = vunpack.c.l.b16 %v158
  %v484 = vunpack.c.h.b16 %v158
  %v485 = vunpack.c.l.b16 %v159
  %v486 = vunpack.c.h.b16 %v159
  %v487 = vunpack.c.l.b16 %v160
  %v488 = vpack.c.b16 %v483, %v483
  %v489 = vpack.c.b16 %v484, %v484
  %v490 = vpack.c.b16 %v485, %v485
  %v491 = vpack.c.b16 %v486, %v486
  %v492 = vpack.c.b16 %v487, %v487
  %v493 = vrot.slane %v488, 6
  %v494 = vrot.slane %v489, 6
  %v495 = vrot.slane %v490, 6
  %v496 = vrot.slane %v491, 6
  %v497 = vrot.slane %v492, 6
  %498 = vrot.lane.b32.xlu0 %v493, 127
  %v499 = vpop.permute.xlu0 %498
  %500 = vrot.lane.b32.xlu0 %v494, 127
  %v501 = vpop.permute.xlu0 %500
  %502 = vrot.lane.b32.xlu0 %v495, 127
  %v503 = vpop.permute.xlu0 %502
  %504 = vrot.lane.b32.xlu0 %v496, 127
  %v505 = vpop.permute.xlu0 %504
  %506 = vrot.lane.b32.xlu0 %v497, 127
  %v507 = vpop.permute.xlu0 %506
  %vm508 = vcmask 1039360
  %v509 = vsel %vm508, %v499, %v501
  %v510 = vsel %vm508, %v501, %v503
  %v511 = vsel %vm508, %v503, %v505
  %v512 = vsel %vm508, %v505, %v507
  %v516 = vunpack.c.l.b16 %v209
  %v517 = vunpack.c.h.b16 %v209
  %v518 = vunpack.c.l.b16 %v210
  %v519 = vunpack.c.h.b16 %v210
  %v520 = vunpack.c.l.b16 %v211
  %v521 = vpack.c.b16 %v516, %v516
  %v522 = vpack.c.b16 %v517, %v517
  %v523 = vpack.c.b16 %v518, %v518
  %v524 = vpack.c.b16 %v519, %v519
  %v525 = vpack.c.b16 %v520, %v520
  %526 = vrot.lane.b32.xlu0 %v521, 126
  %v527 = vpop.permute.xlu0 %526
  %528 = vrot.lane.b32.xlu0 %v522, 126
  %v529 = vpop.permute.xlu0 %528
  %530 = vrot.lane.b32.xlu0 %v523, 126
  %v531 = vpop.permute.xlu0 %530
  %532 = vrot.lane.b32.xlu0 %v524, 126
  %v533 = vpop.permute.xlu0 %532
  %534 = vrot.lane.b32.xlu0 %v525, 126
  %v535 = vpop.permute.xlu0 %534
  %vm536 = vcmask 1031168
  %v537 = vsel %vm536, %v527, %v529
  %v538 = vsel %vm536, %v529, %v531
  %v539 = vsel %vm536, %v531, %v533
  %v540 = vsel %vm536, %v533, %v535
  %v544 = vunpack.c.l.b16 %v260
  %v545 = vunpack.c.h.b16 %v260
  %v546 = vunpack.c.l.b16 %v261
  %v547 = vunpack.c.h.b16 %v261
  %v548 = vunpack.c.l.b16 %v262
  %v549 = vpack.c.b16 %v544, %v544
  %v550 = vpack.c.b16 %v545, %v545
  %v551 = vpack.c.b16 %v546, %v546
  %v552 = vpack.c.b16 %v547, %v547
  %v553 = vpack.c.b16 %v548, %v548
  %v554 = vrot.slane %v549, 2
  %v555 = vrot.slane %v550, 2
  %v556 = vrot.slane %v551, 2
  %v557 = vrot.slane %v552, 2
  %v558 = vrot.slane %v553, 2
  %559 = vrot.lane.b32.xlu0 %v554, 112
  %v560 = vpop.permute.xlu0 %559
  %561 = vrot.lane.b32.xlu0 %v555, 112
  %v562 = vpop.permute.xlu0 %561
  %563 = vrot.lane.b32.xlu0 %v556, 112
  %v564 = vpop.permute.xlu0 %563
  %565 = vrot.lane.b32.xlu0 %v557, 112
  %v566 = vpop.permute.xlu0 %565
  %567 = vrot.lane.b32.xlu0 %v558, 112
  %v568 = vpop.permute.xlu0 %567
  %vm569 = vcmask 916480
  %v570 = vsel %vm569, %v560, %v562
  %v571 = vsel %vm569, %v562, %v564
  %v572 = vsel %vm569, %v564, %v566
  %v573 = vsel %vm569, %v566, %v568
  %574 = vst [vmem:[#allocation1] ss:$4 sm:$0xff] %v39
  %v575 = vld.sshfl [vmem:[#allocation1] sm:$0xff pattern:$0x73625140]
  %v577 = vld.sshfl [vmem:[#allocation1 + $0x8] sm:$0xff pattern:$0x73625140]
  %v579 = vld.sshfl [vmem:[#allocation1 + $0x10] sm:$0xff pattern:$0x73625140]
  %v581 = vld.sshfl [vmem:[#allocation1 + $0x18] sm:$0xff pattern:$0x73625140]
  %583 = vrot.lane.b32.xlu0 %v575, 111
  %v584 = vpop.permute.xlu0 %583
  %585 = vrot.lane.b32.xlu0 %v577, 111
  %v586 = vpop.permute.xlu0 %585
  %587 = vrot.lane.b32.xlu0 %v579, 111
  %v588 = vpop.permute.xlu0 %587
  %589 = vrot.lane.b32.xlu0 %v581, 111
  %v590 = vpop.permute.xlu0 %589
  %vm591 = vcmask 908288
  %v592 = vsel %vm591, %v584, %v586
  %v593 = vsel %vm591, %v586, %v588
  %v594 = vsel %vm591, %v588, %v590
  %v598 = vunpack.c.l.b16 %v311
  %v599 = vunpack.c.h.b16 %v311
  %v600 = vunpack.c.l.b16 %v312
  %v601 = vunpack.c.h.b16 %v312
  %v602 = vunpack.c.l.b16 %v313
  %v603 = vpack.c.b16 %v598, %v598
  %v604 = vpack.c.b16 %v599, %v599
  %v605 = vpack.c.b16 %v600, %v600
  %v606 = vpack.c.b16 %v601, %v601
  %v607 = vpack.c.b16 %v602, %v602
  %v608 = vrot.slane %v603, 6
  %v609 = vrot.slane %v604, 6
  %v610 = vrot.slane %v605, 6
  %v611 = vrot.slane %v606, 6
  %v612 = vrot.slane %v607, 6
  %613 = vrot.lane.b32.xlu0 %v608, 110
  %v614 = vpop.permute.xlu0 %613
  %615 = vrot.lane.b32.xlu0 %v609, 110
  %v616 = vpop.permute.xlu0 %615
  %617 = vrot.lane.b32.xlu0 %v610, 110
  %v618 = vpop.permute.xlu0 %617
  %619 = vrot.lane.b32.xlu0 %v611, 110
  %v620 = vpop.permute.xlu0 %619
  %621 = vrot.lane.b32.xlu0 %v612, 110
  %v622 = vpop.permute.xlu0 %621
  %vm623 = vcmask 900096
  %v624 = vsel %vm623, %v614, %v616
  %v625 = vsel %vm623, %v616, %v618
  %v626 = vsel %vm623, %v618, %v620
  %v627 = vsel %vm623, %v620, %v622
  %v631 = vunpack.c.l.b16 %v362
  %v632 = vunpack.c.h.b16 %v362
  %v633 = vunpack.c.l.b16 %v363
  %v634 = vunpack.c.h.b16 %v363
  %v635 = vunpack.c.l.b16 %v364
  %v636 = vpack.c.b16 %v631, %v631
  %v637 = vpack.c.b16 %v632, %v632
  %v638 = vpack.c.b16 %v633, %v633
  %v639 = vpack.c.b16 %v634, %v634
  %v640 = vpack.c.b16 %v635, %v635
  %641 = vrot.lane.b32.xlu0 %v636, 96
  %v642 = vpop.permute.xlu0 %641
  %643 = vrot.lane.b32.xlu0 %v637, 96
  %v644 = vpop.permute.xlu0 %643
  %645 = vrot.lane.b32.xlu0 %v638, 96
  %v646 = vpop.permute.xlu0 %645
  %647 = vrot.lane.b32.xlu0 %v639, 96
  %v648 = vpop.permute.xlu0 %647
  %649 = vrot.lane.b32.xlu0 %v640, 96
  %v650 = vpop.permute.xlu0 %649
  %vm651 = vcmask 785408
  %v652 = vsel %vm651, %v642, %v644
  %v653 = vsel %vm651, %v644, %v646
  %v654 = vsel %vm651, %v646, %v648
  %v655 = vsel %vm651, %v648, %v650
  %v659 = vunpack.c.l.b16 %v413
  %v660 = vunpack.c.h.b16 %v413
  %v661 = vunpack.c.l.b16 %v414
  %v662 = vunpack.c.h.b16 %v414
  %v663 = vunpack.c.l.b16 %v415
  %v664 = vpack.c.b16 %v659, %v659
  %v665 = vpack.c.b16 %v660, %v660
  %v666 = vpack.c.b16 %v661, %v661
  %v667 = vpack.c.b16 %v662, %v662
  %v668 = vpack.c.b16 %v663, %v663
  %v669 = vrot.slane %v664, 2
  %v670 = vrot.slane %v665, 2
  %v671 = vrot.slane %v666, 2
  %v672 = vrot.slane %v667, 2
  %v673 = vrot.slane %v668, 2
  %674 = vrot.lane.b32.xlu0 %v669, 95
  %v675 = vpop.permute.xlu0 %674
  %676 = vrot.lane.b32.xlu0 %v670, 95
  %v677 = vpop.permute.xlu0 %676
  %678 = vrot.lane.b32.xlu0 %v671, 95
  %v679 = vpop.permute.xlu0 %678
  %680 = vrot.lane.b32.xlu0 %v672, 95
  %v681 = vpop.permute.xlu0 %680
  %682 = vrot.lane.b32.xlu0 %v673, 95
  %v683 = vpop.permute.xlu0 %682
  %vm684 = vcmask 777216
  %v685 = vsel %vm684, %v675, %v677
  %v686 = vsel %vm684, %v677, %v679
  %v687 = vsel %vm684, %v679, %v681
  %v688 = vsel %vm684, %v681, %v683
  %v692 = vunpack.c.l.b16 %v464
  %v693 = vunpack.c.h.b16 %v464
  %v694 = vunpack.c.l.b16 %v465
  %v695 = vunpack.c.h.b16 %v465
  %v696 = vunpack.c.l.b16 %v466
  %v697 = vpack.c.b16 %v692, %v692
  %v698 = vpack.c.b16 %v693, %v693
  %v699 = vpack.c.b16 %v694, %v694
  %v700 = vpack.c.b16 %v695, %v695
  %v701 = vpack.c.b16 %v696, %v696
  %702 = vrot.lane.b32.xlu0 %v697, 94
  %v703 = vpop.permute.xlu0 %702
  %704 = vrot.lane.b32.xlu0 %v698, 94
  %v705 = vpop.permute.xlu0 %704
  %706 = vrot.lane.b32.xlu0 %v699, 94
  %v707 = vpop.permute.xlu0 %706
  %708 = vrot.lane.b32.xlu0 %v700, 94
  %v709 = vpop.permute.xlu0 %708
  %710 = vrot.lane.b32.xlu0 %v701, 94
  %v711 = vpop.permute.xlu0 %710
  %vm712 = vcmask 769024
  %v713 = vsel %vm712, %v703, %v705
  %v714 = vsel %vm712, %v705, %v707
  %v715 = vsel %vm712, %v707, %v709
  %v716 = vsel %vm712, %v709, %v711
  %vm717 = vcmask 1041408
  %v720 = vsel %vm717, %v475, %v509
  %v723 = vsel %vm717, %v476, %v510
  %v726 = vsel %vm717, %v477, %v511
  %v729 = vsel %vm717, %v478, %v512
  %v732 = vsel %vm717, %v479, %v507
  %vm733 = vcmask 1043456
  %v735 = vsel %vm733, %v720, %v537
  %v737 = vsel %vm733, %v723, %v538
  %v739 = vsel %vm733, %v726, %v539
  %v741 = vsel %vm733, %v729, %v540
  %v743 = vsel %vm733, %v732, %v535
  %vm744 = vcmask 1045504
  %v746 = vsel %vm744, %v735, %v570
  %v748 = vsel %vm744, %v737, %v571
  %v750 = vsel %vm744, %v739, %v572
  %v752 = vsel %vm744, %v741, %v573
  %v754 = vsel %vm744, %v743, %v568
  %v757 = vsel %vm717, %v584, %v614
  %v760 = vsel %vm717, %v592, %v624
  %v763 = vsel %vm717, %v593, %v625
  %v766 = vsel %vm717, %v594, %v626
  %v769 = vsel %vm717, %v590, %v627
  %v771 = vsel %vm733, %v757, %v642
  %v773 = vsel %vm733, %v760, %v652
  %v775 = vsel %vm733, %v763, %v653
  %v777 = vsel %vm733, %v766, %v654
  %v779 = vsel %vm733, %v769, %v655
  %v781 = vsel %vm744, %v771, %v675
  %v783 = vsel %vm744, %v773, %v685
  %v785 = vsel %vm744, %v775, %v686
  %v787 = vsel %vm744, %v777, %v687
  %v789 = vsel %vm744, %v779, %v688
  %v794 = vunpack.c.l.b16 %v40
  %v795 = vunpack.c.l.b16 %v41
  %v796 = vunpack.c.l.b16 %v42
  %v797 = vunpack.c.l.b16 %v43
  %v798 = vpack.c.b16 %v795, %v794
  %v799 = vpack.c.b16 %v797, %v796
  %810 = vrot.lane.b32.xlu0 %v746, 17
  %v811 = vpop.permute.xlu0 %810
  %812 = vrot.lane.b32.xlu0 %v748, 17
  %v813 = vpop.permute.xlu0 %812
  %814 = vrot.lane.b32.xlu0 %v750, 17
  %v815 = vpop.permute.xlu0 %814
  %816 = vrot.lane.b32.xlu0 %v752, 17
  %v817 = vpop.permute.xlu0 %816
  %818 = vrot.lane.b32.xlu0 %v754, 17
  %v819 = vpop.permute.xlu0 %818
  %820 = vrot.lane.b32.xlu0 %v781, 17
  %v821 = vpop.permute.xlu0 %820
  %822 = vrot.lane.b32.xlu0 %v783, 17
  %v823 = vpop.permute.xlu0 %822
  %824 = vrot.lane.b32.xlu0 %v785, 17
  %v825 = vpop.permute.xlu0 %824
  %826 = vrot.lane.b32.xlu0 %v787, 17
  %v827 = vpop.permute.xlu0 %826
  %828 = vrot.lane.b32.xlu0 %v789, 17
  %v829 = vpop.permute.xlu0 %828
  %830 = vrot.lane.b32.xlu0 %v703, 17
  %v831 = vpop.permute.xlu0 %830
  %832 = vrot.lane.b32.xlu0 %v713, 17
  %v833 = vpop.permute.xlu0 %832
  %834 = vrot.lane.b32.xlu0 %v714, 17
  %v835 = vpop.permute.xlu0 %834
  %836 = vrot.lane.b32.xlu0 %v715, 17
  %v837 = vpop.permute.xlu0 %836
  %838 = vrot.lane.b32.xlu0 %v716, 17
  %v839 = vpop.permute.xlu0 %838
  %vm840 = vcmask 138240
  %v841 = vsel %vm840, %v811, %v813
  %v842 = vsel %vm840, %v813, %v815
  %v843 = vsel %vm840, %v815, %v817
  %v844 = vsel %vm840, %v817, %v819
  %v845 = vsel %vm840, %v821, %v823
  %v846 = vsel %vm840, %v823, %v825
  %v847 = vsel %vm840, %v825, %v827
  %v848 = vsel %vm840, %v827, %v829
  %v849 = vsel %vm840, %v831, %v833
  %v850 = vsel %vm840, %v833, %v835
  %v851 = vsel %vm840, %v835, %v837
  %v852 = vsel %vm840, %v837, %v839
  %vm861 = vcmask 293888
  %v863 = vsel %vm861, %v798, 0
  %v866 = vsel %vm861, %v799, 0
  %v869 = vsel %vm717, %v849, 0
  %v872 = vsel %vm717, %v850, 0
  %v875 = vsel %vm717, %v851, 0
  %v878 = vsel %vm717, %v852, 0
  %880 = vmatpush.bf16.msra.mxu0 0
  %881 = vmatpush.bf16.msra.mxu0 0
  %882 = vmatpush.bf16.msra.mxu0 0
  %883 = vmatpush.bf16.msra.mxu0 0
  %884 = vmatpush.bf16.msra.mxu0 0
  %885 = vmatpush.bf16.msra.mxu0 %v869
  %886 = vmatpush.bf16.msra.mxu0 %v845
  %887 = vmatpush.bf16.msra.mxu0 %v841
  %888 = vmatmul.bf16.gmra.mxu0 %v863
  %v889 = vpop.f32.mrf.mxu0
  %v890 = vadd.f32 0.0, %v889
  %v891 = vpop.f32.mrf.mxu0
  %v892 = vadd.f32 0.0, %v891
  %893 = vmatmul.bf16.gmra.mxu0 %v866
  %v894 = vpop.f32.mrf.mxu0
  %v895 = vadd.f32 0.0, %v894
  %v896 = vpop.f32.mrf.mxu0
  %v897 = vadd.f32 0.0, %v896
  %898 = vdwg.mxu0
  %899 = vmatpush.bf16.msra.mxu0 0
  %900 = vmatpush.bf16.msra.mxu0 0
  %901 = vmatpush.bf16.msra.mxu0 0
  %902 = vmatpush.bf16.msra.mxu0 0
  %903 = vmatpush.bf16.msra.mxu0 0
  %904 = vmatpush.bf16.msra.mxu0 %v872
  %905 = vmatpush.bf16.msra.mxu0 %v846
  %906 = vmatpush.bf16.msra.mxu0 %v842
  %907 = vmatmul.bf16.gmra.mxu0 %v863
  %v908 = vpop.f32.mrf.mxu0
  %v909 = vadd.f32 0.0, %v908
  %v910 = vpop.f32.mrf.mxu0
  %v911 = vadd.f32 0.0, %v910
  %912 = vmatmul.bf16.gmra.mxu0 %v866
  %v913 = vpop.f32.mrf.mxu0
  %v914 = vadd.f32 0.0, %v913
  %v915 = vpop.f32.mrf.mxu0
  %v916 = vadd.f32 0.0, %v915
  %917 = vdwg.mxu0
  %918 = vmatpush.bf16.msra.mxu0 0
  %919 = vmatpush.bf16.msra.mxu0 0
  %920 = vmatpush.bf16.msra.mxu0 0
  %921 = vmatpush.bf16.msra.mxu0 0
  %922 = vmatpush.bf16.msra.mxu0 0
  %923 = vmatpush.bf16.msra.mxu0 %v875
  %924 = vmatpush.bf16.msra.mxu0 %v847
  %925 = vmatpush.bf16.msra.mxu0 %v843
  %926 = vmatmul.bf16.gmra.mxu0 %v863
  %v927 = vpop.f32.mrf.mxu0
  %v928 = vadd.f32 0.0, %v927
  %v929 = vpop.f32.mrf.mxu0
  %v930 = vadd.f32 0.0, %v929
  %931 = vmatmul.bf16.gmra.mxu0 %v866
  %v932 = vpop.f32.mrf.mxu0
  %v933 = vadd.f32 0.0, %v932
  %v934 = vpop.f32.mrf.mxu0
  %v935 = vadd.f32 0.0, %v934
  %936 = vdwg.mxu0
  %937 = vmatpush.bf16.msra.mxu0 0
  %938 = vmatpush.bf16.msra.mxu0 0
  %939 = vmatpush.bf16.msra.mxu0 0
  %940 = vmatpush.bf16.msra.mxu0 0
  %941 = vmatpush.bf16.msra.mxu0 0
  %942 = vmatpush.bf16.msra.mxu0 %v878
  %943 = vmatpush.bf16.msra.mxu0 %v848
  %944 = vmatpush.bf16.msra.mxu0 %v844
  %945 = vmatmul.bf16.gmra.mxu0 %v863
  %v946 = vpop.f32.mrf.mxu0
  %v947 = vadd.f32 0.0, %v946
  %v948 = vpop.f32.mrf.mxu0
  %v949 = vadd.f32 0.0, %v948
  %950 = vmatmul.bf16.gmra.mxu0 %v866
  %v951 = vpop.f32.mrf.mxu0
  %v952 = vadd.f32 0.0, %v951
  %v953 = vpop.f32.mrf.mxu0
  %v954 = vadd.f32 0.0, %v953
  %955 = vdwg.mxu0
  %v956 = vmax.f32 %v890, 0.0
  %v957 = vmax.f32 %v909, 0.0
  %v958 = vmax.f32 %v928, 0.0
  %v959 = vmax.f32 %v947, 0.0
  %v960 = vmax.f32 %v892, 0.0
  %v961 = vmax.f32 %v911, 0.0
  %v962 = vmax.f32 %v930, 0.0
  %v963 = vmax.f32 %v949, 0.0
  %v964 = vmax.f32 %v895, 0.0
  %v965 = vmax.f32 %v914, 0.0
  %v966 = vmax.f32 %v933, 0.0
  %v967 = vmax.f32 %v952, 0.0
  %v968 = vmax.f32 %v897, 0.0
  %v969 = vmax.f32 %v916, 0.0
  %v970 = vmax.f32 %v935, 0.0
  %v971 = vmax.f32 %v954, 0.0
  %v972 = vpack.c.bf16 %v957, %v956
  %v973 = vpack.c.bf16 %v959, %v958
  %v974 = vpack.c.bf16 %v961, %v960
  %v975 = vpack.c.bf16 %v963, %v962
  %v976 = vpack.c.bf16 %v965, %v964
  %v977 = vpack.c.bf16 %v967, %v966
  %v978 = vpack.c.bf16 %v969, %v968
  %v979 = vpack.c.bf16 %v971, %v970
  %v980 = vld [vmem:[%s3] sm:$0xff]
  %v981 = vld [vmem:[%s3 + $0x8] sm:$0xf]
  %v982 = vld [vmem:[%s3 + $0xc] sm:$0xff]
  %v983 = vld [vmem:[%s3 + $0x14] sm:$0xf]
  %v984 = vld [vmem:[%s3 + $0x18] sm:$0xff]
  %v985 = vld [vmem:[%s3 + $0x20] sm:$0xf]
  %v986 = vld [vmem:[%s3 + $0x24] sm:$0xff]
  %v987 = vld [vmem:[%s3 + $0x2c] sm:$0xf]
  %v996 = vunpack.c.l.b16 %v972
  %v997 = vunpack.c.h.b16 %v972
  %v998 = vunpack.c.l.b16 %v973
  %v999 = vunpack.c.h.b16 %v973
  %v1000 = vunpack.c.l.b16 %v974
  %v1001 = vunpack.c.h.b16 %v974
  %v1002 = vunpack.c.l.b16 %v975
  %v1003 = vunpack.c.h.b16 %v975
  %v1004 = vunpack.c.l.b16 %v976
  %v1005 = vunpack.c.h.b16 %v976
  %v1006 = vunpack.c.l.b16 %v977
  %v1007 = vunpack.c.h.b16 %v977
  %v1008 = vunpack.c.l.b16 %v978
  %v1009 = vunpack.c.h.b16 %v978
  %v1010 = vunpack.c.l.b16 %v979
  %v1011 = vunpack.c.h.b16 %v979
  %v1012 = vpack.c.b16 %v1000, %v996
  %v1013 = vpack.c.b16 %v1001, %v997
  %v1014 = vpack.c.b16 %v1002, %v998
  %v1015 = vpack.c.b16 %v1003, %v999
  %v1016 = vpack.c.b16 %v1008, %v1004
  %v1017 = vpack.c.b16 %v1009, %v1005
  %v1018 = vpack.c.b16 %v1010, %v1006
  %v1019 = vpack.c.b16 %v1011, %v1007
  %1028 = vst [vmem:[#allocation1] ss:$9 sm:$0xff] %v24
  %v1029 = vld [vmem:[#allocation1] sm:$0xff]
  %v1030 = vld [vmem:[#allocation1 + $0x9] sm:$0xff]
  %v1031 = vld [vmem:[#allocation1 + $0x12] sm:$0xff]
  %v1032 = vld [vmem:[#allocation1 + $0x1b] sm:$0xff]
  %v1033 = vpack.i.b16 %v1029, %v1029
  %v1035 = vperm.slane %v1033, 0
  %v1036 = vpack.i.b16 %v1030, %v1030
  %v1038 = vperm.slane %v1036, 0
  %v1039 = vpack.i.b16 %v1031, %v1031
  %v1041 = vperm.slane %v1039, 0
  %v1042 = vpack.i.b16 %v1032, %v1032
  %v1044 = vperm.slane %v1042, 0
  %v1045 = vunpack.c.l.bf16 %v1012
  %v1046 = vunpack.c.l.bf16 %v1013
  %v1047 = vunpack.c.l.bf16 %v1014
  %v1048 = vunpack.c.l.bf16 %v1015
  %v1049 = vunpack.c.h.bf16 0
  %v1050 = vunpack.c.h.bf16 %v1012
  %v1051 = vunpack.c.h.bf16 %v1013
  %v1052 = vunpack.c.h.bf16 %v1014
  %v1053 = vunpack.c.h.bf16 %v1015
  %v1054 = vunpack.c.l.bf16 %v1016
  %v1055 = vunpack.c.l.bf16 %v1017
  %v1056 = vunpack.c.l.bf16 %v1018
  %v1057 = vunpack.c.l.bf16 %v1019
  %v1058 = vunpack.c.h.bf16 %v1016
  %v1059 = vunpack.c.h.bf16 %v1017
  %v1060 = vunpack.c.h.bf16 %v1018
  %v1061 = vunpack.c.h.bf16 %v1019
  %v1062 = vunpack.c.l.bf16 %v1035
  %v1063 = vunpack.c.l.bf16 %v1038
  %v1064 = vunpack.c.l.bf16 %v1041
  %v1065 = vunpack.c.l.bf16 %v1044
  %1070 = vrot.lane.b32.xlu0 %v1062, 111
  %v1071 = vpop.permute.xlu0 %1070
  %1072 = vrot.lane.b32.xlu0 %v1063, 111
  %v1073 = vpop.permute.xlu0 %1072
  %1074 = vrot.lane.b32.xlu0 %v1064, 111
  %v1075 = vpop.permute.xlu0 %1074
  %1076 = vrot.lane.b32.xlu0 %v1065, 111
  %v1077 = vpop.permute.xlu0 %1076
  %v1078 = vsel %vm93, %v1071, %v1073
  %v1079 = vsel %vm93, %v1073, %v1075
  %v1080 = vsel %vm93, %v1075, %v1077
  %v1086 = vmul.f32 %v72, %v1071
  %v1087 = vmul.f32 %v1045, %v1078
  %v1088 = vmul.f32 %v1046, %v1079
  %v1089 = vmul.f32 %v1047, %v1080
  %v1090 = vmul.f32 %v1048, %v1077
  %v1091 = vmul.f32 %v1049, %v1071
  %v1092 = vmul.f32 %v1050, %v1078
  %v1093 = vmul.f32 %v1051, %v1079
  %v1094 = vmul.f32 %v1052, %v1080
  %v1095 = vmul.f32 %v1053, %v1077
  %v1096 = vmul.f32 %v1054, %v1078
  %v1097 = vmul.f32 %v1055, %v1079
  %v1098 = vmul.f32 %v1056, %v1080
  %v1099 = vmul.f32 %v1057, %v1077
  %v1100 = vmul.f32 %v1058, %v1078
  %v1101 = vmul.f32 %v1059, %v1079
  %v1102 = vmul.f32 %v1060, %v1080
  %v1103 = vmul.f32 %v1061, %v1077
  %v1104 = vpack.c.bf16 %v1087, %v1086
  %v1105 = vpack.c.bf16 %v1089, %v1088
  %v1106 = vpack.c.bf16 %v1090, %v1090
  %v1107 = vpack.c.bf16 %v1092, %v1091
  %v1108 = vpack.c.bf16 %v1094, %v1093
  %v1109 = vpack.c.bf16 %v1095, %v1095
  %v1110 = vpack.c.bf16 %v1096, %v1086
  %v1111 = vpack.c.bf16 %v1098, %v1097
  %v1112 = vpack.c.bf16 %v1099, %v1099
  %v1113 = vpack.c.bf16 %v1100, %v1091
  %v1114 = vpack.c.bf16 %v1102, %v1101
  %v1115 = vpack.c.bf16 %v1103, %v1103
  %1116 = vst [vmem:[#allocation1] ss:$9 sm:$0xff] %v26
  %v1117 = vld [vmem:[#allocation1] sm:$0xff]
  %v1118 = vld [vmem:[#allocation1 + $0x9] sm:$0xff]
  %v1119 = vld [vmem:[#allocation1 + $0x12] sm:$0xff]
  %v1120 = vld [vmem:[#allocation1 + $0x1b] sm:$0xff]
  %v1121 = vpack.i.b16 %v1117, %v1117
  %v1123 = vperm.slane %v1121, 0
  %v1124 = vpack.i.b16 %v1118, %v1118
  %v1126 = vperm.slane %v1124, 0
  %v1127 = vpack.i.b16 %v1119, %v1119
  %v1129 = vperm.slane %v1127, 0
  %v1130 = vpack.i.b16 %v1120, %v1120
  %v1132 = vperm.slane %v1130, 0
  %v1133 = vunpack.c.l.bf16 %v1123
  %v1134 = vunpack.c.l.bf16 %v1126
  %v1135 = vunpack.c.l.bf16 %v1129
  %v1136 = vunpack.c.l.bf16 %v1132
  %1141 = vrot.lane.b32.xlu0 %v1133, 112
  %v1142 = vpop.permute.xlu0 %1141
  %1143 = vrot.lane.b32.xlu0 %v1134, 112
  %v1144 = vpop.permute.xlu0 %1143
  %1145 = vrot.lane.b32.xlu0 %v1135, 112
  %v1146 = vpop.permute.xlu0 %1145
  %1147 = vrot.lane.b32.xlu0 %v1136, 112
  %v1148 = vpop.permute.xlu0 %1147
  %v1149 = vsel %vm144, %v1142, %v1144
  %v1150 = vsel %vm144, %v1144, %v1146
  %v1151 = vsel %vm144, %v1146, %v1148
  %v1157 = vmul.f32 %v72, %v1142
  %v1158 = vmul.f32 %v1045, %v1149
  %v1159 = vmul.f32 %v1046, %v1150
  %v1160 = vmul.f32 %v1047, %v1151
  %v1161 = vmul.f32 %v1048, %v1148
  %v1162 = vmul.f32 %v1049, %v1142
  %v1163 = vmul.f32 %v1050, %v1149
  %v1164 = vmul.f32 %v1051, %v1150
  %v1165 = vmul.f32 %v1052, %v1151
  %v1166 = vmul.f32 %v1053, %v1148
  %v1167 = vmul.f32 %v1054, %v1149
  %v1168 = vmul.f32 %v1055, %v1150
  %v1169 = vmul.f32 %v1056, %v1151
  %v1170 = vmul.f32 %v1057, %v1148
  %v1171 = vmul.f32 %v1058, %v1149
  %v1172 = vmul.f32 %v1059, %v1150
  %v1173 = vmul.f32 %v1060, %v1151
  %v1174 = vmul.f32 %v1061, %v1148
  %v1175 = vpack.c.bf16 %v1158, %v1157
  %v1176 = vpack.c.bf16 %v1160, %v1159
  %v1177 = vpack.c.bf16 %v1161, %v1161
  %v1178 = vpack.c.bf16 %v1163, %v1162
  %v1179 = vpack.c.bf16 %v1165, %v1164
  %v1180 = vpack.c.bf16 %v1166, %v1166
  %v1181 = vpack.c.bf16 %v1167, %v1157
  %v1182 = vpack.c.bf16 %v1169, %v1168
  %v1183 = vpack.c.bf16 %v1170, %v1170
  %v1184 = vpack.c.bf16 %v1171, %v1162
  %v1185 = vpack.c.bf16 %v1173, %v1172
  %v1186 = vpack.c.bf16 %v1174, %v1174
  %1187 = vst [vmem:[#allocation1] ss:$9 sm:$0xff] %v28
  %v1188 = vld [vmem:[#allocation1] sm:$0xff]
  %v1189 = vld [vmem:[#allocation1 + $0x9] sm:$0xff]
  %v1190 = vld [vmem:[#allocation1 + $0x12] sm:$0xff]
  %v1191 = vld [vmem:[#allocation1 + $0x1b] sm:$0xff]
  %v1192 = vpack.i.b16 %v1188, %v1188
  %v1194 = vperm.slane %v1192, 0
  %v1195 = vpack.i.b16 %v1189, %v1189
  %v1197 = vperm.slane %v1195, 0
  %v1198 = vpack.i.b16 %v1190, %v1190
  %v1200 = vperm.slane %v1198, 0
  %v1201 = vpack.i.b16 %v1191, %v1191
  %v1203 = vperm.slane %v1201, 0
  %v1204 = vunpack.c.l.bf16 %v1194
  %v1205 = vunpack.c.l.bf16 %v1197
  %v1206 = vunpack.c.l.bf16 %v1200
  %v1207 = vunpack.c.l.bf16 %v1203
  %1212 = vrot.lane.b32.xlu0 %v1204, 113
  %v1213 = vpop.permute.xlu0 %1212
  %1214 = vrot.lane.b32.xlu0 %v1205, 113
  %v1215 = vpop.permute.xlu0 %1214
  %1216 = vrot.lane.b32.xlu0 %v1206, 113
  %v1217 = vpop.permute.xlu0 %1216
  %1218 = vrot.lane.b32.xlu0 %v1207, 113
  %v1219 = vpop.permute.xlu0 %1218
  %v1220 = vsel %vm195, %v1213, %v1215
  %v1221 = vsel %vm195, %v1215, %v1217
  %v1222 = vsel %vm195, %v1217, %v1219
  %v1228 = vmul.f32 %v72, %v1213
  %v1229 = vmul.f32 %v1045, %v1220
  %v1230 = vmul.f32 %v1046, %v1221
  %v1231 = vmul.f32 %v1047, %v1222
  %v1232 = vmul.f32 %v1048, %v1219
  %v1233 = vmul.f32 %v1049, %v1213
  %v1234 = vmul.f32 %v1050, %v1220
  %v1235 = vmul.f32 %v1051, %v1221
  %v1236 = vmul.f32 %v1052, %v1222
  %v1237 = vmul.f32 %v1053, %v1219
  %v1238 = vmul.f32 %v1054, %v1220
  %v1239 = vmul.f32 %v1055, %v1221
  %v1240 = vmul.f32 %v1056, %v1222
  %v1241 = vmul.f32 %v1057, %v1219
  %v1242 = vmul.f32 %v1058, %v1220
  %v1243 = vmul.f32 %v1059, %v1221
  %v1244 = vmul.f32 %v1060, %v1222
  %v1245 = vmul.f32 %v1061, %v1219
  %v1246 = vpack.c.bf16 %v1229, %v1228
  %v1247 = vpack.c.bf16 %v1231, %v1230
  %v1248 = vpack.c.bf16 %v1232, %v1232
  %v1249 = vpack.c.bf16 %v1234, %v1233
  %v1250 = vpack.c.bf16 %v1236, %v1235
  %v1251 = vpack.c.bf16 %v1237, %v1237
  %v1252 = vpack.c.bf16 %v1238, %v1228
  %v1253 = vpack.c.bf16 %v1240, %v1239
  %v1254 = vpack.c.bf16 %v1241, %v1241
  %v1255 = vpack.c.bf16 %v1242, %v1233
  %v1256 = vpack.c.bf16 %v1244, %v1243
  %v1257 = vpack.c.bf16 %v1245, %v1245
  %1258 = vst [vmem:[#allocation1] ss:$9 sm:$0xff] %v30
  %v1259 = vld [vmem:[#allocation1] sm:$0xff]
  %v1260 = vld [vmem:[#allocation1 + $0x9] sm:$0xff]
  %v1261 = vld [vmem:[#allocation1 + $0x12] sm:$0xff]
  %v1262 = vld [vmem:[#allocation1 + $0x1b] sm:$0xff]
  %v1263 = vpack.i.b16 %v1259, %v1259
  %v1265 = vperm.slane %v1263, 0
  %v1266 = vpack.i.b16 %v1260, %v1260
  %v1268 = vperm.slane %v1266, 0
  %v1269 = vpack.i.b16 %v1261, %v1261
  %v1271 = vperm.slane %v1269, 0
  %v1272 = vpack.i.b16 %v1262, %v1262
  %v1274 = vperm.slane %v1272, 0
  %v1275 = vunpack.c.l.bf16 %v1265
  %v1276 = vunpack.c.l.bf16 %v1268
  %v1277 = vunpack.c.l.bf16 %v1271
  %v1278 = vunpack.c.l.bf16 %v1274
  %1283 = vrot.lane.b32.xlu0 %v1275, 127
  %v1284 = vpop.permute.xlu0 %1283
  %1285 = vrot.lane.b32.xlu0 %v1276, 127
  %v1286 = vpop.permute.xlu0 %1285
  %1287 = vrot.lane.b32.xlu0 %v1277, 127
  %v1288 = vpop.permute.xlu0 %1287
  %1289 = vrot.lane.b32.xlu0 %v1278, 127
  %v1290 = vpop.permute.xlu0 %1289
  %v1291 = vsel %vm246, %v1284, %v1286
  %v1292 = vsel %vm246, %v1286, %v1288
  %v1293 = vsel %vm246, %v1288, %v1290
  %v1299 = vmul.f32 %v72, %v1284
  %v1300 = vmul.f32 %v1045, %v1291
  %v1301 = vmul.f32 %v1046, %v1292
  %v1302 = vmul.f32 %v1047, %v1293
  %v1303 = vmul.f32 %v1048, %v1290
  %v1304 = vmul.f32 %v1049, %v1284
  %v1305 = vmul.f32 %v1050, %v1291
  %v1306 = vmul.f32 %v1051, %v1292
  %v1307 = vmul.f32 %v1052, %v1293
  %v1308 = vmul.f32 %v1053, %v1290
  %v1309 = vmul.f32 %v1054, %v1291
  %v1310 = vmul.f32 %v1055, %v1292
  %v1311 = vmul.f32 %v1056, %v1293
  %v1312 = vmul.f32 %v1057, %v1290
  %v1313 = vmul.f32 %v1058, %v1291
  %v1314 = vmul.f32 %v1059, %v1292
  %v1315 = vmul.f32 %v1060, %v1293
  %v1316 = vmul.f32 %v1061, %v1290
  %v1317 = vpack.c.bf16 %v1300, %v1299
  %v1318 = vpack.c.bf16 %v1302, %v1301
  %v1319 = vpack.c.bf16 %v1303, %v1303
  %v1320 = vpack.c.bf16 %v1305, %v1304
  %v1321 = vpack.c.bf16 %v1307, %v1306
  %v1322 = vpack.c.bf16 %v1308, %v1308
  %v1323 = vpack.c.bf16 %v1309, %v1299
  %v1324 = vpack.c.bf16 %v1311, %v1310
  %v1325 = vpack.c.bf16 %v1312, %v1312
  %v1326 = vpack.c.bf16 %v1313, %v1304
  %v1327 = vpack.c.bf16 %v1315, %v1314
  %v1328 = vpack.c.bf16 %v1316, %v1316
  %1329 = vst [vmem:[#allocation1] ss:$9 sm:$0xff] %v32
  %v1330 = vld [vmem:[#allocation1] sm:$0xff]
  %v1331 = vld [vmem:[#allocation1 + $0x9] sm:$0xff]
  %v1332 = vld [vmem:[#allocation1 + $0x12] sm:$0xff]
  %v1333 = vld [vmem:[#allocation1 + $0x1b] sm:$0xff]
  %v1334 = vpack.i.b16 %v1330, %v1330
  %v1336 = vperm.slane %v1334, 0
  %v1337 = vpack.i.b16 %v1331, %v1331
  %v1339 = vperm.slane %v1337, 0
  %v1340 = vpack.i.b16 %v1332, %v1332
  %v1342 = vperm.slane %v1340, 0
  %v1343 = vpack.i.b16 %v1333, %v1333
  %v1345 = vperm.slane %v1343, 0
  %v1346 = vunpack.c.l.bf16 %v1336
  %v1347 = vunpack.c.l.bf16 %v1339
  %v1348 = vunpack.c.l.bf16 %v1342
  %v1349 = vunpack.c.l.bf16 %v1345
  %1354 = vrot.lane.b32.xlu0 %v1346, 1
  %v1355 = vpop.permute.xlu0 %1354
  %1356 = vrot.lane.b32.xlu0 %v1347, 1
  %v1357 = vpop.permute.xlu0 %1356
  %1358 = vrot.lane.b32.xlu0 %v1348, 1
  %v1359 = vpop.permute.xlu0 %1358
  %1360 = vrot.lane.b32.xlu0 %v1349, 1
  %v1361 = vpop.permute.xlu0 %1360
  %v1362 = vsel %vm297, %v1355, %v1357
  %v1363 = vsel %vm297, %v1357, %v1359
  %v1364 = vsel %vm297, %v1359, %v1361
  %v1370 = vmul.f32 %v1045, %v1355
  %v1371 = vmul.f32 %v1046, %v1362
  %v1372 = vmul.f32 %v1047, %v1363
  %v1373 = vmul.f32 %v1048, %v1364
  %v1374 = vmul.f32 %v72, %v1361
  %v1375 = vmul.f32 %v1050, %v1355
  %v1376 = vmul.f32 %v1051, %v1362
  %v1377 = vmul.f32 %v1052, %v1363
  %v1378 = vmul.f32 %v1053, %v1364
  %v1379 = vmul.f32 %v1049, %v1361
  %v1380 = vmul.f32 %v1054, %v1355
  %v1381 = vmul.f32 %v1055, %v1362
  %v1382 = vmul.f32 %v1056, %v1363
  %v1383 = vmul.f32 %v1057, %v1364
  %v1384 = vmul.f32 %v1058, %v1355
  %v1385 = vmul.f32 %v1059, %v1362
  %v1386 = vmul.f32 %v1060, %v1363
  %v1387 = vmul.f32 %v1061, %v1364
  %v1388 = vpack.c.bf16 %v1371, %v1370
  %v1389 = vpack.c.bf16 %v1373, %v1372
  %v1390 = vpack.c.bf16 %v1374, %v1374
  %v1391 = vpack.c.bf16 %v1376, %v1375
  %v1392 = vpack.c.bf16 %v1378, %v1377
  %v1393 = vpack.c.bf16 %v1379, %v1379
  %v1394 = vpack.c.bf16 %v1381, %v1380
  %v1395 = vpack.c.bf16 %v1383, %v1382
  %v1396 = vpack.c.bf16 %v1385, %v1384
  %v1397 = vpack.c.bf16 %v1387, %v1386
  %1398 = vst [vmem:[#allocation1] ss:$9 sm:$0xff] %v34
  %v1399 = vld [vmem:[#allocation1] sm:$0xff]
  %v1400 = vld [vmem:[#allocation1 + $0x9] sm:$0xff]
  %v1401 = vld [vmem:[#allocation1 + $0x12] sm:$0xff]
  %v1402 = vld [vmem:[#allocation1 + $0x1b] sm:$0xff]
  %v1403 = vpack.i.b16 %v1399, %v1399
  %v1405 = vperm.slane %v1403, 0
  %v1406 = vpack.i.b16 %v1400, %v1400
  %v1408 = vperm.slane %v1406, 0
  %v1409 = vpack.i.b16 %v1401, %v1401
  %v1411 = vperm.slane %v1409, 0
  %v1412 = vpack.i.b16 %v1402, %v1402
  %v1414 = vperm.slane %v1412, 0
  %v1415 = vunpack.c.l.bf16 %v1405
  %v1416 = vunpack.c.l.bf16 %v1408
  %v1417 = vunpack.c.l.bf16 %v1411
  %v1418 = vunpack.c.l.bf16 %v1414
  %1423 = vrot.lane.b32.xlu0 %v1415, 15
  %v1424 = vpop.permute.xlu0 %1423
  %1425 = vrot.lane.b32.xlu0 %v1416, 15
  %v1426 = vpop.permute.xlu0 %1425
  %1427 = vrot.lane.b32.xlu0 %v1417, 15
  %v1428 = vpop.permute.xlu0 %1427
  %1429 = vrot.lane.b32.xlu0 %v1418, 15
  %v1430 = vpop.permute.xlu0 %1429
  %v1431 = vsel %vm348, %v1424, %v1426
  %v1432 = vsel %vm348, %v1426, %v1428
  %v1433 = vsel %vm348, %v1428, %v1430
  %v1439 = vmul.f32 %v1045, %v1424
  %v1440 = vmul.f32 %v1046, %v1431
  %v1441 = vmul.f32 %v1047, %v1432
  %v1442 = vmul.f32 %v1048, %v1433
  %v1443 = vmul.f32 %v72, %v1430
  %v1444 = vmul.f32 %v1050, %v1424
  %v1445 = vmul.f32 %v1051, %v1431
  %v1446 = vmul.f32 %v1052, %v1432
  %v1447 = vmul.f32 %v1053, %v1433
  %v1448 = vmul.f32 %v1049, %v1430
  %v1449 = vmul.f32 %v1054, %v1424
  %v1450 = vmul.f32 %v1055, %v1431
  %v1451 = vmul.f32 %v1056, %v1432
  %v1452 = vmul.f32 %v1057, %v1433
  %v1453 = vmul.f32 %v1058, %v1424
  %v1454 = vmul.f32 %v1059, %v1431
  %v1455 = vmul.f32 %v1060, %v1432
  %v1456 = vmul.f32 %v1061, %v1433
  %v1457 = vpack.c.bf16 %v1440, %v1439
  %v1458 = vpack.c.bf16 %v1442, %v1441
  %v1459 = vpack.c.bf16 %v1443, %v1443
  %v1460 = vpack.c.bf16 %v1445, %v1444
  %v1461 = vpack.c.bf16 %v1447, %v1446
  %v1462 = vpack.c.bf16 %v1448, %v1448
  %v1463 = vpack.c.bf16 %v1450, %v1449
  %v1464 = vpack.c.bf16 %v1452, %v1451
  %v1465 = vpack.c.bf16 %v1454, %v1453
  %v1466 = vpack.c.bf16 %v1456, %v1455
  %1467 = vst [vmem:[#allocation1] ss:$9 sm:$0xff] %v36
  %v1468 = vld [vmem:[#allocation1] sm:$0xff]
  %v1469 = vld [vmem:[#allocation1 + $0x9] sm:$0xff]
  %v1470 = vld [vmem:[#allocation1 + $0x12] sm:$0xff]
  %v1471 = vld [vmem:[#allocation1 + $0x1b] sm:$0xff]
  %v1472 = vpack.i.b16 %v1468, %v1468
  %v1474 = vperm.slane %v1472, 0
  %v1475 = vpack.i.b16 %v1469, %v1469
  %v1477 = vperm.slane %v1475, 0
  %v1478 = vpack.i.b16 %v1470, %v1470
  %v1480 = vperm.slane %v1478, 0
  %v1481 = vpack.i.b16 %v1471, %v1471
  %v1483 = vperm.slane %v1481, 0
  %v1484 = vunpack.c.l.bf16 %v1474
  %v1485 = vunpack.c.l.bf16 %v1477
  %v1486 = vunpack.c.l.bf16 %v1480
  %v1487 = vunpack.c.l.bf16 %v1483
  %1492 = vrot.lane.b32.xlu0 %v1484, 16
  %v1493 = vpop.permute.xlu0 %1492
  %1494 = vrot.lane.b32.xlu0 %v1485, 16
  %v1495 = vpop.permute.xlu0 %1494
  %1496 = vrot.lane.b32.xlu0 %v1486, 16
  %v1497 = vpop.permute.xlu0 %1496
  %1498 = vrot.lane.b32.xlu0 %v1487, 16
  %v1499 = vpop.permute.xlu0 %1498
  %v1500 = vsel %vm399, %v1493, %v1495
  %v1501 = vsel %vm399, %v1495, %v1497
  %v1502 = vsel %vm399, %v1497, %v1499
  %v1508 = vmul.f32 %v1045, %v1493
  %v1509 = vmul.f32 %v1046, %v1500
  %v1510 = vmul.f32 %v1047, %v1501
  %v1511 = vmul.f32 %v1048, %v1502
  %v1512 = vmul.f32 %v72, %v1499
  %v1513 = vmul.f32 %v1050, %v1493
  %v1514 = vmul.f32 %v1051, %v1500
  %v1515 = vmul.f32 %v1052, %v1501
  %v1516 = vmul.f32 %v1053, %v1502
  %v1517 = vmul.f32 %v1049, %v1499
  %v1518 = vmul.f32 %v1054, %v1493
  %v1519 = vmul.f32 %v1055, %v1500
  %v1520 = vmul.f32 %v1056, %v1501
  %v1521 = vmul.f32 %v1057, %v1502
  %v1522 = vmul.f32 %v1058, %v1493
  %v1523 = vmul.f32 %v1059, %v1500
  %v1524 = vmul.f32 %v1060, %v1501
  %v1525 = vmul.f32 %v1061, %v1502
  %v1526 = vpack.c.bf16 %v1509, %v1508
  %v1527 = vpack.c.bf16 %v1511, %v1510
  %v1528 = vpack.c.bf16 %v1512, %v1512
  %v1529 = vpack.c.bf16 %v1514, %v1513
  %v1530 = vpack.c.bf16 %v1516, %v1515
  %v1531 = vpack.c.bf16 %v1517, %v1517
  %v1532 = vpack.c.bf16 %v1519, %v1518
  %v1533 = vpack.c.bf16 %v1521, %v1520
  %v1534 = vpack.c.bf16 %v1523, %v1522
  %v1535 = vpack.c.bf16 %v1525, %v1524
  %1536 = vst [vmem:[#allocation1] ss:$9 sm:$0xff] %v38
  %v1537 = vld [vmem:[#allocation1] sm:$0xff]
  %v1538 = vld [vmem:[#allocation1 + $0x9] sm:$0xff]
  %v1539 = vld [vmem:[#allocation1 + $0x12] sm:$0xff]
  %v1540 = vld [vmem:[#allocation1 + $0x1b] sm:$0xff]
  %v1541 = vpack.i.b16 %v1537, %v1537
  %v1543 = vperm.slane %v1541, 0
  %v1544 = vpack.i.b16 %v1538, %v1538
  %v1546 = vperm.slane %v1544, 0
  %v1547 = vpack.i.b16 %v1539, %v1539
  %v1549 = vperm.slane %v1547, 0
  %v1550 = vpack.i.b16 %v1540, %v1540
  %v1552 = vperm.slane %v1550, 0
  %v1553 = vunpack.c.l.bf16 %v1543
  %v1554 = vunpack.c.l.bf16 %v1546
  %v1555 = vunpack.c.l.bf16 %v1549
  %v1556 = vunpack.c.l.bf16 %v1552
  %1561 = vrot.lane.b32.xlu0 %v1553, 17
  %v1562 = vpop.permute.xlu0 %1561
  %1563 = vrot.lane.b32.xlu0 %v1554, 17
  %v1564 = vpop.permute.xlu0 %1563
  %1565 = vrot.lane.b32.xlu0 %v1555, 17
  %v1566 = vpop.permute.xlu0 %1565
  %1567 = vrot.lane.b32.xlu0 %v1556, 17
  %v1568 = vpop.permute.xlu0 %1567
  %v1569 = vsel %vm450, %v1562, %v1564
  %v1570 = vsel %vm450, %v1564, %v1566
  %v1571 = vsel %vm450, %v1566, %v1568
  %v1577 = vmul.f32 %v1045, %v1562
  %v1578 = vmul.f32 %v1046, %v1569
  %v1579 = vmul.f32 %v1047, %v1570
  %v1580 = vmul.f32 %v1048, %v1571
  %v1581 = vmul.f32 %v72, %v1568
  %v1582 = vmul.f32 %v1050, %v1562
  %v1583 = vmul.f32 %v1051, %v1569
  %v1584 = vmul.f32 %v1052, %v1570
  %v1585 = vmul.f32 %v1053, %v1571
  %v1586 = vmul.f32 %v1049, %v1568
  %v1587 = vmul.f32 %v1054, %v1562
  %v1588 = vmul.f32 %v1055, %v1569
  %v1589 = vmul.f32 %v1056, %v1570
  %v1590 = vmul.f32 %v1057, %v1571
  %v1591 = vmul.f32 %v1058, %v1562
  %v1592 = vmul.f32 %v1059, %v1569
  %v1593 = vmul.f32 %v1060, %v1570
  %v1594 = vmul.f32 %v1061, %v1571
  %v1595 = vpack.c.bf16 %v1578, %v1577
  %v1596 = vpack.c.bf16 %v1580, %v1579
  %v1597 = vpack.c.bf16 %v1581, %v1581
  %v1598 = vpack.c.bf16 %v1583, %v1582
  %v1599 = vpack.c.bf16 %v1585, %v1584
  %v1600 = vpack.c.bf16 %v1586, %v1586
  %v1601 = vpack.c.bf16 %v1588, %v1587
  %v1602 = vpack.c.bf16 %v1590, %v1589
  %v1603 = vpack.c.bf16 %v1592, %v1591
  %v1604 = vpack.c.bf16 %v1594, %v1593
  %v1617 = vunpack.c.l.b16 %v1104
  %v1618 = vunpack.c.h.b16 %v1104
  %v1619 = vunpack.c.l.b16 %v1105
  %v1620 = vunpack.c.h.b16 %v1105
  %v1621 = vunpack.c.l.b16 %v1106
  %v1622 = vunpack.c.l.b16 %v1107
  %v1623 = vunpack.c.h.b16 %v1107
  %v1624 = vunpack.c.l.b16 %v1108
  %v1625 = vunpack.c.h.b16 %v1108
  %v1626 = vunpack.c.l.b16 %v1109
  %v1627 = vunpack.c.l.b16 %v1110
  %v1628 = vunpack.c.h.b16 %v1110
  %v1629 = vunpack.c.l.b16 %v1111
  %v1630 = vunpack.c.h.b16 %v1111
  %v1631 = vunpack.c.l.b16 %v1112
  %v1632 = vunpack.c.l.b16 %v1113
  %v1633 = vunpack.c.h.b16 %v1113
  %v1634 = vunpack.c.l.b16 %v1114
  %v1635 = vunpack.c.h.b16 %v1114
  %v1636 = vunpack.c.l.b16 %v1115
  %v1637 = vpack.c.b16 %v1622, %v1617
  %v1638 = vpack.c.b16 %v1623, %v1618
  %v1639 = vpack.c.b16 %v1624, %v1619
  %v1640 = vpack.c.b16 %v1625, %v1620
  %v1641 = vpack.c.b16 %v1626, %v1621
  %v1642 = vpack.c.b16 %v1632, %v1627
  %v1643 = vpack.c.b16 %v1633, %v1628
  %v1644 = vpack.c.b16 %v1634, %v1629
  %v1645 = vpack.c.b16 %v1635, %v1630
  %v1646 = vpack.c.b16 %v1636, %v1631
  %v1659 = vunpack.c.l.b16 %v1175
  %v1660 = vunpack.c.h.b16 %v1175
  %v1661 = vunpack.c.l.b16 %v1176
  %v1662 = vunpack.c.h.b16 %v1176
  %v1663 = vunpack.c.l.b16 %v1177
  %v1664 = vunpack.c.l.b16 %v1178
  %v1665 = vunpack.c.h.b16 %v1178
  %v1666 = vunpack.c.l.b16 %v1179
  %v1667 = vunpack.c.h.b16 %v1179
  %v1668 = vunpack.c.l.b16 %v1180
  %v1669 = vunpack.c.l.b16 %v1181
  %v1670 = vunpack.c.h.b16 %v1181
  %v1671 = vunpack.c.l.b16 %v1182
  %v1672 = vunpack.c.h.b16 %v1182
  %v1673 = vunpack.c.l.b16 %v1183
  %v1674 = vunpack.c.l.b16 %v1184
  %v1675 = vunpack.c.h.b16 %v1184
  %v1676 = vunpack.c.l.b16 %v1185
  %v1677 = vunpack.c.h.b16 %v1185
  %v1678 = vunpack.c.l.b16 %v1186
  %v1679 = vpack.c.b16 %v1664, %v1659
  %v1680 = vpack.c.b16 %v1665, %v1660
  %v1681 = vpack.c.b16 %v1666, %v1661
  %v1682 = vpack.c.b16 %v1667, %v1662
  %v1683 = vpack.c.b16 %v1668, %v1663
  %v1684 = vpack.c.b16 %v1674, %v1669
  %v1685 = vpack.c.b16 %v1675, %v1670
  %v1686 = vpack.c.b16 %v1676, %v1671
  %v1687 = vpack.c.b16 %v1677, %v1672
  %v1688 = vpack.c.b16 %v1678, %v1673
  %1689 = vrot.lane.b32.xlu0 %v1679, 127
  %v1690 = vpop.permute.xlu0 %1689
  %1691 = vrot.lane.b32.xlu0 %v1680, 127
  %v1692 = vpop.permute.xlu0 %1691
  %1693 = vrot.lane.b32.xlu0 %v1681, 127
  %v1694 = vpop.permute.xlu0 %1693
  %1695 = vrot.lane.b32.xlu0 %v1682, 127
  %v1696 = vpop.permute.xlu0 %1695
  %1697 = vrot.lane.b32.xlu0 %v1683, 127
  %v1698 = vpop.permute.xlu0 %1697
  %1699 = vrot.lane.b32.xlu0 %v1684, 127
  %v1700 = vpop.permute.xlu0 %1699
  %1701 = vrot.lane.b32.xlu0 %v1685, 127
  %v1702 = vpop.permute.xlu0 %1701
  %1703 = vrot.lane.b32.xlu0 %v1686, 127
  %v1704 = vpop.permute.xlu0 %1703
  %1705 = vrot.lane.b32.xlu0 %v1687, 127
  %v1706 = vpop.permute.xlu0 %1705
  %1707 = vrot.lane.b32.xlu0 %v1688, 127
  %v1708 = vpop.permute.xlu0 %1707
  %v1709 = vsel %vm508, %v1690, %v1692
  %v1710 = vsel %vm508, %v1692, %v1694
  %v1711 = vsel %vm508, %v1694, %v1696
  %v1712 = vsel %vm508, %v1696, %v1698
  %v1713 = vsel %vm508, %v1700, %v1702
  %v1714 = vsel %vm508, %v1702, %v1704
  %v1715 = vsel %vm508, %v1704, %v1706
  %v1716 = vsel %vm508, %v1706, %v1708
  %v1729 = vunpack.c.l.b16 %v1246
  %v1730 = vunpack.c.h.b16 %v1246
  %v1731 = vunpack.c.l.b16 %v1247
  %v1732 = vunpack.c.h.b16 %v1247
  %v1733 = vunpack.c.l.b16 %v1248
  %v1734 = vunpack.c.l.b16 %v1249
  %v1735 = vunpack.c.h.b16 %v1249
  %v1736 = vunpack.c.l.b16 %v1250
  %v1737 = vunpack.c.h.b16 %v1250
  %v1738 = vunpack.c.l.b16 %v1251
  %v1739 = vunpack.c.l.b16 %v1252
  %v1740 = vunpack.c.h.b16 %v1252
  %v1741 = vunpack.c.l.b16 %v1253
  %v1742 = vunpack.c.h.b16 %v1253
  %v1743 = vunpack.c.l.b16 %v1254
  %v1744 = vunpack.c.l.b16 %v1255
  %v1745 = vunpack.c.h.b16 %v1255
  %v1746 = vunpack.c.l.b16 %v1256
  %v1747 = vunpack.c.h.b16 %v1256
  %v1748 = vunpack.c.l.b16 %v1257
  %v1749 = vpack.c.b16 %v1734, %v1729
  %v1750 = vpack.c.b16 %v1735, %v1730
  %v1751 = vpack.c.b16 %v1736, %v1731
  %v1752 = vpack.c.b16 %v1737, %v1732
  %v1753 = vpack.c.b16 %v1738, %v1733
  %v1754 = vpack.c.b16 %v1744, %v1739
  %v1755 = vpack.c.b16 %v1745, %v1740
  %v1756 = vpack.c.b16 %v1746, %v1741
  %v1757 = vpack.c.b16 %v1747, %v1742
  %v1758 = vpack.c.b16 %v1748, %v1743
  %1759 = vrot.lane.b32.xlu0 %v1749, 126
  %v1760 = vpop.permute.xlu0 %1759
  %1761 = vrot.lane.b32.xlu0 %v1750, 126
  %v1762 = vpop.permute.xlu0 %1761
  %1763 = vrot.lane.b32.xlu0 %v1751, 126
  %v1764 = vpop.permute.xlu0 %1763
  %1765 = vrot.lane.b32.xlu0 %v1752, 126
  %v1766 = vpop.permute.xlu0 %1765
  %1767 = vrot.lane.b32.xlu0 %v1753, 126
  %v1768 = vpop.permute.xlu0 %1767
  %1769 = vrot.lane.b32.xlu0 %v1754, 126
  %v1770 = vpop.permute.xlu0 %1769
  %1771 = vrot.lane.b32.xlu0 %v1755, 126
  %v1772 = vpop.permute.xlu0 %1771
  %1773 = vrot.lane.b32.xlu0 %v1756, 126
  %v1774 = vpop.permute.xlu0 %1773
  %1775 = vrot.lane.b32.xlu0 %v1757, 126
  %v1776 = vpop.permute.xlu0 %1775
  %1777 = vrot.lane.b32.xlu0 %v1758, 126
  %v1778 = vpop.permute.xlu0 %1777
  %v1779 = vsel %vm536, %v1760, %v1762
  %v1780 = vsel %vm536, %v1762, %v1764
  %v1781 = vsel %vm536, %v1764, %v1766
  %v1782 = vsel %vm536, %v1766, %v1768
  %v1783 = vsel %vm536, %v1770, %v1772
  %v1784 = vsel %vm536, %v1772, %v1774
  %v1785 = vsel %vm536, %v1774, %v1776
  %v1786 = vsel %vm536, %v1776, %v1778
  %v1799 = vunpack.c.l.b16 %v1317
  %v1800 = vunpack.c.h.b16 %v1317
  %v1801 = vunpack.c.l.b16 %v1318
  %v1802 = vunpack.c.h.b16 %v1318
  %v1803 = vunpack.c.l.b16 %v1319
  %v1804 = vunpack.c.l.b16 %v1320
  %v1805 = vunpack.c.h.b16 %v1320
  %v1806 = vunpack.c.l.b16 %v1321
  %v1807 = vunpack.c.h.b16 %v1321
  %v1808 = vunpack.c.l.b16 %v1322
  %v1809 = vunpack.c.l.b16 %v1323
  %v1810 = vunpack.c.h.b16 %v1323
  %v1811 = vunpack.c.l.b16 %v1324
  %v1812 = vunpack.c.h.b16 %v1324
  %v1813 = vunpack.c.l.b16 %v1325
  %v1814 = vunpack.c.l.b16 %v1326
  %v1815 = vunpack.c.h.b16 %v1326
  %v1816 = vunpack.c.l.b16 %v1327
  %v1817 = vunpack.c.h.b16 %v1327
  %v1818 = vunpack.c.l.b16 %v1328
  %v1819 = vpack.c.b16 %v1804, %v1799
  %v1820 = vpack.c.b16 %v1805, %v1800
  %v1821 = vpack.c.b16 %v1806, %v1801
  %v1822 = vpack.c.b16 %v1807, %v1802
  %v1823 = vpack.c.b16 %v1808, %v1803
  %v1824 = vpack.c.b16 %v1814, %v1809
  %v1825 = vpack.c.b16 %v1815, %v1810
  %v1826 = vpack.c.b16 %v1816, %v1811
  %v1827 = vpack.c.b16 %v1817, %v1812
  %v1828 = vpack.c.b16 %v1818, %v1813
  %1829 = vrot.lane.b32.xlu0 %v1819, 112
  %v1830 = vpop.permute.xlu0 %1829
  %1831 = vrot.lane.b32.xlu0 %v1820, 112
  %v1832 = vpop.permute.xlu0 %1831
  %1833 = vrot.lane.b32.xlu0 %v1821, 112
  %v1834 = vpop.permute.xlu0 %1833
  %1835 = vrot.lane.b32.xlu0 %v1822, 112
  %v1836 = vpop.permute.xlu0 %1835
  %1837 = vrot.lane.b32.xlu0 %v1823, 112
  %v1838 = vpop.permute.xlu0 %1837
  %1839 = vrot.lane.b32.xlu0 %v1824, 112
  %v1840 = vpop.permute.xlu0 %1839
  %1841 = vrot.lane.b32.xlu0 %v1825, 112
  %v1842 = vpop.permute.xlu0 %1841
  %1843 = vrot.lane.b32.xlu0 %v1826, 112
  %v1844 = vpop.permute.xlu0 %1843
  %1845 = vrot.lane.b32.xlu0 %v1827, 112
  %v1846 = vpop.permute.xlu0 %1845
  %1847 = vrot.lane.b32.xlu0 %v1828, 112
  %v1848 = vpop.permute.xlu0 %1847
  %v1849 = vsel %vm569, %v1830, %v1832
  %v1850 = vsel %vm569, %v1832, %v1834
  %v1851 = vsel %vm569, %v1834, %v1836
  %v1852 = vsel %vm569, %v1836, %v1838
  %v1853 = vsel %vm569, %v1840, %v1842
  %v1854 = vsel %vm569, %v1842, %v1844
  %v1855 = vsel %vm569, %v1844, %v1846
  %v1856 = vsel %vm569, %v1846, %v1848
  %1857 = vrot.lane.b32.xlu0 %v1012, 111
  %v1858 = vpop.permute.xlu0 %1857
  %1859 = vrot.lane.b32.xlu0 %v1013, 111
  %v1860 = vpop.permute.xlu0 %1859
  %1861 = vrot.lane.b32.xlu0 %v1014, 111
  %v1862 = vpop.permute.xlu0 %1861
  %1863 = vrot.lane.b32.xlu0 %v1015, 111
  %v1864 = vpop.permute.xlu0 %1863
  %1865 = vrot.lane.b32.xlu0 %v1016, 111
  %v1866 = vpop.permute.xlu0 %1865
  %1867 = vrot.lane.b32.xlu0 %v1017, 111
  %v1868 = vpop.permute.xlu0 %1867
  %1869 = vrot.lane.b32.xlu0 %v1018, 111
  %v1870 = vpop.permute.xlu0 %1869
  %1871 = vrot.lane.b32.xlu0 %v1019, 111
  %v1872 = vpop.permute.xlu0 %1871
  %v1873 = vsel %vm591, %v1858, %v1860
  %v1874 = vsel %vm591, %v1860, %v1862
  %v1875 = vsel %vm591, %v1862, %v1864
  %v1876 = vsel %vm591, %v1866, %v1868
  %v1877 = vsel %vm591, %v1868, %v1870
  %v1878 = vsel %vm591, %v1870, %v1872
  %v1889 = vunpack.c.l.b16 %v1388
  %v1890 = vunpack.c.h.b16 %v1388
  %v1891 = vunpack.c.l.b16 %v1389
  %v1892 = vunpack.c.h.b16 %v1389
  %v1893 = vunpack.c.l.b16 %v1390
  %v1894 = vunpack.c.l.b16 %v1391
  %v1895 = vunpack.c.h.b16 %v1391
  %v1896 = vunpack.c.l.b16 %v1392
  %v1897 = vunpack.c.h.b16 %v1392
  %v1898 = vunpack.c.l.b16 %v1393
  %v1899 = vunpack.c.l.b16 %v1394
  %v1900 = vunpack.c.h.b16 %v1394
  %v1901 = vunpack.c.l.b16 %v1395
  %v1902 = vunpack.c.h.b16 %v1395
  %v1903 = vunpack.c.l.b16 %v1396
  %v1904 = vunpack.c.h.b16 %v1396
  %v1905 = vunpack.c.l.b16 %v1397
  %v1906 = vunpack.c.h.b16 %v1397
  %v1907 = vpack.c.b16 %v1894, %v1889
  %v1908 = vpack.c.b16 %v1895, %v1890
  %v1909 = vpack.c.b16 %v1896, %v1891
  %v1910 = vpack.c.b16 %v1897, %v1892
  %v1911 = vpack.c.b16 %v1898, %v1893
  %v1912 = vpack.c.b16 %v1903, %v1899
  %v1913 = vpack.c.b16 %v1904, %v1900
  %v1914 = vpack.c.b16 %v1905, %v1901
  %v1915 = vpack.c.b16 %v1906, %v1902
  %1916 = vrot.lane.b32.xlu0 %v1907, 110
  %v1917 = vpop.permute.xlu0 %1916
  %1918 = vrot.lane.b32.xlu0 %v1908, 110
  %v1919 = vpop.permute.xlu0 %1918
  %1920 = vrot.lane.b32.xlu0 %v1909, 110
  %v1921 = vpop.permute.xlu0 %1920
  %1922 = vrot.lane.b32.xlu0 %v1910, 110
  %v1923 = vpop.permute.xlu0 %1922
  %1924 = vrot.lane.b32.xlu0 %v1911, 110
  %v1925 = vpop.permute.xlu0 %1924
  %1926 = vrot.lane.b32.xlu0 %v1912, 110
  %v1927 = vpop.permute.xlu0 %1926
  %1928 = vrot.lane.b32.xlu0 %v1913, 110
  %v1929 = vpop.permute.xlu0 %1928
  %1930 = vrot.lane.b32.xlu0 %v1914, 110
  %v1931 = vpop.permute.xlu0 %1930
  %1932 = vrot.lane.b32.xlu0 %v1915, 110
  %v1933 = vpop.permute.xlu0 %1932
  %v1934 = vsel %vm623, %v1917, %v1919
  %v1935 = vsel %vm623, %v1919, %v1921
  %v1936 = vsel %vm623, %v1921, %v1923
  %v1937 = vsel %vm623, %v1923, %v1925
  %v1938 = vsel %vm623, %v1927, %v1929
  %v1939 = vsel %vm623, %v1929, %v1931
  %v1940 = vsel %vm623, %v1931, %v1933
  %v1941 = vsel %vm623, %v1933, %v1925
  %v1952 = vunpack.c.l.b16 %v1457
  %v1953 = vunpack.c.h.b16 %v1457
  %v1954 = vunpack.c.l.b16 %v1458
  %v1955 = vunpack.c.h.b16 %v1458
  %v1956 = vunpack.c.l.b16 %v1459
  %v1957 = vunpack.c.l.b16 %v1460
  %v1958 = vunpack.c.h.b16 %v1460
  %v1959 = vunpack.c.l.b16 %v1461
  %v1960 = vunpack.c.h.b16 %v1461
  %v1961 = vunpack.c.l.b16 %v1462
  %v1962 = vunpack.c.l.b16 %v1463
  %v1963 = vunpack.c.h.b16 %v1463
  %v1964 = vunpack.c.l.b16 %v1464
  %v1965 = vunpack.c.h.b16 %v1464
  %v1966 = vunpack.c.l.b16 %v1465
  %v1967 = vunpack.c.h.b16 %v1465
  %v1968 = vunpack.c.l.b16 %v1466
  %v1969 = vunpack.c.h.b16 %v1466
  %v1970 = vpack.c.b16 %v1957, %v1952
  %v1971 = vpack.c.b16 %v1958, %v1953
  %v1972 = vpack.c.b16 %v1959, %v1954
  %v1973 = vpack.c.b16 %v1960, %v1955
  %v1974 = vpack.c.b16 %v1961, %v1956
  %v1975 = vpack.c.b16 %v1966, %v1962
  %v1976 = vpack.c.b16 %v1967, %v1963
  %v1977 = vpack.c.b16 %v1968, %v1964
  %v1978 = vpack.c.b16 %v1969, %v1965
  %1979 = vrot.lane.b32.xlu0 %v1970, 96
  %v1980 = vpop.permute.xlu0 %1979
  %1981 = vrot.lane.b32.xlu0 %v1971, 96
  %v1982 = vpop.permute.xlu0 %1981
  %1983 = vrot.lane.b32.xlu0 %v1972, 96
  %v1984 = vpop.permute.xlu0 %1983
  %1985 = vrot.lane.b32.xlu0 %v1973, 96
  %v1986 = vpop.permute.xlu0 %1985
  %1987 = vrot.lane.b32.xlu0 %v1974, 96
  %v1988 = vpop.permute.xlu0 %1987
  %1989 = vrot.lane.b32.xlu0 %v1975, 96
  %v1990 = vpop.permute.xlu0 %1989
  %1991 = vrot.lane.b32.xlu0 %v1976, 96
  %v1992 = vpop.permute.xlu0 %1991
  %1993 = vrot.lane.b32.xlu0 %v1977, 96
  %v1994 = vpop.permute.xlu0 %1993
  %1995 = vrot.lane.b32.xlu0 %v1978, 96
  %v1996 = vpop.permute.xlu0 %1995
  %v1997 = vsel %vm651, %v1980, %v1982
  %v1998 = vsel %vm651, %v1982, %v1984
  %v1999 = vsel %vm651, %v1984, %v1986
  %v2000 = vsel %vm651, %v1986, %v1988
  %v2001 = vsel %vm651, %v1990, %v1992
  %v2002 = vsel %vm651, %v1992, %v1994
  %v2003 = vsel %vm651, %v1994, %v1996
  %v2004 = vsel %vm651, %v1996, %v1988
  %v2015 = vunpack.c.l.b16 %v1526
  %v2016 = vunpack.c.h.b16 %v1526
  %v2017 = vunpack.c.l.b16 %v1527
  %v2018 = vunpack.c.h.b16 %v1527
  %v2019 = vunpack.c.l.b16 %v1528
  %v2020 = vunpack.c.l.b16 %v1529
  %v2021 = vunpack.c.h.b16 %v1529
  %v2022 = vunpack.c.l.b16 %v1530
  %v2023 = vunpack.c.h.b16 %v1530
  %v2024 = vunpack.c.l.b16 %v1531
  %v2025 = vunpack.c.l.b16 %v1532
  %v2026 = vunpack.c.h.b16 %v1532
  %v2027 = vunpack.c.l.b16 %v1533
  %v2028 = vunpack.c.h.b16 %v1533
  %v2029 = vunpack.c.l.b16 %v1534
  %v2030 = vunpack.c.h.b16 %v1534
  %v2031 = vunpack.c.l.b16 %v1535
  %v2032 = vunpack.c.h.b16 %v1535
  %v2033 = vpack.c.b16 %v2020, %v2015
  %v2034 = vpack.c.b16 %v2021, %v2016
  %v2035 = vpack.c.b16 %v2022, %v2017
  %v2036 = vpack.c.b16 %v2023, %v2018
  %v2037 = vpack.c.b16 %v2024, %v2019
  %v2038 = vpack.c.b16 %v2029, %v2025
  %v2039 = vpack.c.b16 %v2030, %v2026
  %v2040 = vpack.c.b16 %v2031, %v2027
  %v2041 = vpack.c.b16 %v2032, %v2028
  %2042 = vrot.lane.b32.xlu0 %v2033, 95
  %v2043 = vpop.permute.xlu0 %2042
  %2044 = vrot.lane.b32.xlu0 %v2034, 95
  %v2045 = vpop.permute.xlu0 %2044
  %2046 = vrot.lane.b32.xlu0 %v2035, 95
  %v2047 = vpop.permute.xlu0 %2046
  %2048 = vrot.lane.b32.xlu0 %v2036, 95
  %v2049 = vpop.permute.xlu0 %2048
  %2050 = vrot.lane.b32.xlu0 %v2037, 95
  %v2051 = vpop.permute.xlu0 %2050
  %2052 = vrot.lane.b32.xlu0 %v2038, 95
  %v2053 = vpop.permute.xlu0 %2052
  %2054 = vrot.lane.b32.xlu0 %v2039, 95
  %v2055 = vpop.permute.xlu0 %2054
  %2056 = vrot.lane.b32.xlu0 %v2040, 95
  %v2057 = vpop.permute.xlu0 %2056
  %2058 = vrot.lane.b32.xlu0 %v2041, 95
  %v2059 = vpop.permute.xlu0 %2058
  %v2060 = vsel %vm684, %v2043, %v2045
  %v2061 = vsel %vm684, %v2045, %v2047
  %v2062 = vsel %vm684, %v2047, %v2049
  %v2063 = vsel %vm684, %v2049, %v2051
  %v2064 = vsel %vm684, %v2053, %v2055
  %v2065 = vsel %vm684, %v2055, %v2057
  %v2066 = vsel %vm684, %v2057, %v2059
  %v2067 = vsel %vm684, %v2059, %v2051
  %v2078 = vunpack.c.l.b16 %v1595
  %v2079 = vunpack.c.h.b16 %v1595
  %v2080 = vunpack.c.l.b16 %v1596
  %v2081 = vunpack.c.h.b16 %v1596
  %v2082 = vunpack.c.l.b16 %v1597
  %v2083 = vunpack.c.l.b16 %v1598
  %v2084 = vunpack.c.h.b16 %v1598
  %v2085 = vunpack.c.l.b16 %v1599
  %v2086 = vunpack.c.h.b16 %v1599
  %v2087 = vunpack.c.l.b16 %v1600
  %v2088 = vunpack.c.l.b16 %v1601
  %v2089 = vunpack.c.h.b16 %v1601
  %v2090 = vunpack.c.l.b16 %v1602
  %v2091 = vunpack.c.h.b16 %v1602
  %v2092 = vunpack.c.l.b16 %v1603
  %v2093 = vunpack.c.h.b16 %v1603
  %v2094 = vunpack.c.l.b16 %v1604
  %v2095 = vunpack.c.h.b16 %v1604
  %v2096 = vpack.c.b16 %v2083, %v2078
  %v2097 = vpack.c.b16 %v2084, %v2079
  %v2098 = vpack.c.b16 %v2085, %v2080
  %v2099 = vpack.c.b16 %v2086, %v2081
  %v2100 = vpack.c.b16 %v2087, %v2082
  %v2101 = vpack.c.b16 %v2092, %v2088
  %v2102 = vpack.c.b16 %v2093, %v2089
  %v2103 = vpack.c.b16 %v2094, %v2090
  %v2104 = vpack.c.b16 %v2095, %v2091
  %2105 = vrot.lane.b32.xlu0 %v2096, 94
  %v2106 = vpop.permute.xlu0 %2105
  %2107 = vrot.lane.b32.xlu0 %v2097, 94
  %v2108 = vpop.permute.xlu0 %2107
  %2109 = vrot.lane.b32.xlu0 %v2098, 94
  %v2110 = vpop.permute.xlu0 %2109
  %2111 = vrot.lane.b32.xlu0 %v2099, 94
  %v2112 = vpop.permute.xlu0 %2111
  %2113 = vrot.lane.b32.xlu0 %v2100, 94
  %v2114 = vpop.permute.xlu0 %2113
  %2115 = vrot.lane.b32.xlu0 %v2101, 94
  %v2116 = vpop.permute.xlu0 %2115
  %2117 = vrot.lane.b32.xlu0 %v2102, 94
  %v2118 = vpop.permute.xlu0 %2117
  %2119 = vrot.lane.b32.xlu0 %v2103, 94
  %v2120 = vpop.permute.xlu0 %2119
  %2121 = vrot.lane.b32.xlu0 %v2104, 94
  %v2122 = vpop.permute.xlu0 %2121
  %v2123 = vsel %vm712, %v2106, %v2108
  %v2124 = vsel %vm712, %v2108, %v2110
  %v2125 = vsel %vm712, %v2110, %v2112
  %v2126 = vsel %vm712, %v2112, %v2114
  %v2127 = vsel %vm712, %v2116, %v2118
  %v2128 = vsel %vm712, %v2118, %v2120
  %v2129 = vsel %vm712, %v2120, %v2122
  %v2130 = vsel %vm712, %v2122, %v2114
  %v2139 = vunpack.c.l.b16 %v980
  %v2140 = vunpack.c.h.b16 %v980
  %v2141 = vunpack.c.l.b16 %v981
  %v2142 = vunpack.c.l.b16 %v982
  %v2143 = vunpack.c.h.b16 %v982
  %v2144 = vunpack.c.l.b16 %v983
  %v2145 = vunpack.c.l.b16 %v984
  %v2146 = vunpack.c.h.b16 %v984
  %v2147 = vunpack.c.l.b16 %v985
  %v2148 = vunpack.c.l.b16 %v986
  %v2149 = vunpack.c.h.b16 %v986
  %v2150 = vunpack.c.l.b16 %v987
  %v2151 = vpack.c.b16 %v2142, %v2139
  %v2152 = vpack.c.b16 %v2143, %v2140
  %v2153 = vpack.c.b16 %v2144, %v2141
  %v2154 = vpack.c.b16 %v2148, %v2145
  %v2155 = vpack.c.b16 %v2149, %v2146
  %v2156 = vpack.c.b16 %v2150, %v2147
  %2161 = vrot.lane.b32.xlu0 %v1637, 17
  %v2162 = vpop.permute.xlu0 %2161
  %2163 = vrot.lane.b32.xlu0 %v1638, 17
  %v2164 = vpop.permute.xlu0 %2163
  %2165 = vrot.lane.b32.xlu0 %v1639, 17
  %v2166 = vpop.permute.xlu0 %2165
  %2167 = vrot.lane.b32.xlu0 %v1640, 17
  %v2168 = vpop.permute.xlu0 %2167
  %2169 = vrot.lane.b32.xlu0 %v1641, 17
  %v2170 = vpop.permute.xlu0 %2169
  %2171 = vrot.lane.b32.xlu0 %v1642, 17
  %v2172 = vpop.permute.xlu0 %2171
  %2173 = vrot.lane.b32.xlu0 %v1643, 17
  %v2174 = vpop.permute.xlu0 %2173
  %2175 = vrot.lane.b32.xlu0 %v1644, 17
  %v2176 = vpop.permute.xlu0 %2175
  %2177 = vrot.lane.b32.xlu0 %v1645, 17
  %v2178 = vpop.permute.xlu0 %2177
  %2179 = vrot.lane.b32.xlu0 %v1646, 17
  %v2180 = vpop.permute.xlu0 %2179
  %2181 = vrot.lane.b32.xlu0 %v1709, 17
  %v2182 = vpop.permute.xlu0 %2181
  %2183 = vrot.lane.b32.xlu0 %v1710, 17
  %v2184 = vpop.permute.xlu0 %2183
  %2185 = vrot.lane.b32.xlu0 %v1711, 17
  %v2186 = vpop.permute.xlu0 %2185
  %2187 = vrot.lane.b32.xlu0 %v1712, 17
  %v2188 = vpop.permute.xlu0 %2187
  %2189 = vrot.lane.b32.xlu0 %v1698, 17
  %v2190 = vpop.permute.xlu0 %2189
  %2191 = vrot.lane.b32.xlu0 %v1713, 17
  %v2192 = vpop.permute.xlu0 %2191
  %2193 = vrot.lane.b32.xlu0 %v1714, 17
  %v2194 = vpop.permute.xlu0 %2193
  %2195 = vrot.lane.b32.xlu0 %v1715, 17
  %v2196 = vpop.permute.xlu0 %2195
  %2197 = vrot.lane.b32.xlu0 %v1716, 17
  %v2198 = vpop.permute.xlu0 %2197
  %2199 = vrot.lane.b32.xlu0 %v1708, 17
  %v2200 = vpop.permute.xlu0 %2199
  %2201 = vrot.lane.b32.xlu0 %v1779, 17
  %v2202 = vpop.permute.xlu0 %2201
  %2203 = vrot.lane.b32.xlu0 %v1780, 17
  %v2204 = vpop.permute.xlu0 %2203
  %2205 = vrot.lane.b32.xlu0 %v1781, 17
  %v2206 = vpop.permute.xlu0 %2205
  %2207 = vrot.lane.b32.xlu0 %v1782, 17
  %v2208 = vpop.permute.xlu0 %2207
  %2209 = vrot.lane.b32.xlu0 %v1768, 17
  %v2210 = vpop.permute.xlu0 %2209
  %2211 = vrot.lane.b32.xlu0 %v1783, 17
  %v2212 = vpop.permute.xlu0 %2211
  %2213 = vrot.lane.b32.xlu0 %v1784, 17
  %v2214 = vpop.permute.xlu0 %2213
  %2215 = vrot.lane.b32.xlu0 %v1785, 17
  %v2216 = vpop.permute.xlu0 %2215
  %2217 = vrot.lane.b32.xlu0 %v1786, 17
  %v2218 = vpop.permute.xlu0 %2217
  %2219 = vrot.lane.b32.xlu0 %v1778, 17
  %v2220 = vpop.permute.xlu0 %2219
  %2221 = vrot.lane.b32.xlu0 %v1849, 17
  %v2222 = vpop.permute.xlu0 %2221
  %2223 = vrot.lane.b32.xlu0 %v1850, 17
  %v2224 = vpop.permute.xlu0 %2223
  %2225 = vrot.lane.b32.xlu0 %v1851, 17
  %v2226 = vpop.permute.xlu0 %2225
  %2227 = vrot.lane.b32.xlu0 %v1852, 17
  %v2228 = vpop.permute.xlu0 %2227
  %2229 = vrot.lane.b32.xlu0 %v1838, 17
  %v2230 = vpop.permute.xlu0 %2229
  %2231 = vrot.lane.b32.xlu0 %v1853, 17
  %v2232 = vpop.permute.xlu0 %2231
  %2233 = vrot.lane.b32.xlu0 %v1854, 17
  %v2234 = vpop.permute.xlu0 %2233
  %2235 = vrot.lane.b32.xlu0 %v1855, 17
  %v2236 = vpop.permute.xlu0 %2235
  %2237 = vrot.lane.b32.xlu0 %v1856, 17
  %v2238 = vpop.permute.xlu0 %2237
  %2239 = vrot.lane.b32.xlu0 %v1848, 17
  %v2240 = vpop.permute.xlu0 %2239
  %2241 = vrot.lane.b32.xlu0 %v1858, 17
  %v2242 = vpop.permute.xlu0 %2241
  %2243 = vrot.lane.b32.xlu0 %v1873, 17
  %v2244 = vpop.permute.xlu0 %2243
  %2245 = vrot.lane.b32.xlu0 %v1874, 17
  %v2246 = vpop.permute.xlu0 %2245
  %2247 = vrot.lane.b32.xlu0 %v1875, 17
  %v2248 = vpop.permute.xlu0 %2247
  %2249 = vrot.lane.b32.xlu0 %v1864, 17
  %v2250 = vpop.permute.xlu0 %2249
  %2251 = vrot.lane.b32.xlu0 %v1866, 17
  %v2252 = vpop.permute.xlu0 %2251
  %2253 = vrot.lane.b32.xlu0 %v1876, 17
  %v2254 = vpop.permute.xlu0 %2253
  %2255 = vrot.lane.b32.xlu0 %v1877, 17
  %v2256 = vpop.permute.xlu0 %2255
  %2257 = vrot.lane.b32.xlu0 %v1878, 17
  %v2258 = vpop.permute.xlu0 %2257
  %2259 = vrot.lane.b32.xlu0 %v1872, 17
  %v2260 = vpop.permute.xlu0 %2259
  %2261 = vrot.lane.b32.xlu0 %v1917, 17
  %v2262 = vpop.permute.xlu0 %2261
  %2263 = vrot.lane.b32.xlu0 %v1934, 17
  %v2264 = vpop.permute.xlu0 %2263
  %2265 = vrot.lane.b32.xlu0 %v1935, 17
  %v2266 = vpop.permute.xlu0 %2265
  %2267 = vrot.lane.b32.xlu0 %v1936, 17
  %v2268 = vpop.permute.xlu0 %2267
  %2269 = vrot.lane.b32.xlu0 %v1937, 17
  %v2270 = vpop.permute.xlu0 %2269
  %2271 = vrot.lane.b32.xlu0 %v1927, 17
  %v2272 = vpop.permute.xlu0 %2271
  %2273 = vrot.lane.b32.xlu0 %v1938, 17
  %v2274 = vpop.permute.xlu0 %2273
  %2275 = vrot.lane.b32.xlu0 %v1939, 17
  %v2276 = vpop.permute.xlu0 %2275
  %2277 = vrot.lane.b32.xlu0 %v1940, 17
  %v2278 = vpop.permute.xlu0 %2277
  %2279 = vrot.lane.b32.xlu0 %v1941, 17
  %v2280 = vpop.permute.xlu0 %2279
  %2281 = vrot.lane.b32.xlu0 %v1980, 17
  %v2282 = vpop.permute.xlu0 %2281
  %2283 = vrot.lane.b32.xlu0 %v1997, 17
  %v2284 = vpop.permute.xlu0 %2283
  %2285 = vrot.lane.b32.xlu0 %v1998, 17
  %v2286 = vpop.permute.xlu0 %2285
  %2287 = vrot.lane.b32.xlu0 %v1999, 17
  %v2288 = vpop.permute.xlu0 %2287
  %2289 = vrot.lane.b32.xlu0 %v2000, 17
  %v2290 = vpop.permute.xlu0 %2289
  %2291 = vrot.lane.b32.xlu0 %v1990, 17
  %v2292 = vpop.permute.xlu0 %2291
  %2293 = vrot.lane.b32.xlu0 %v2001, 17
  %v2294 = vpop.permute.xlu0 %2293
  %2295 = vrot.lane.b32.xlu0 %v2002, 17
  %v2296 = vpop.permute.xlu0 %2295
  %2297 = vrot.lane.b32.xlu0 %v2003, 17
  %v2298 = vpop.permute.xlu0 %2297
  %2299 = vrot.lane.b32.xlu0 %v2004, 17
  %v2300 = vpop.permute.xlu0 %2299
  %2301 = vrot.lane.b32.xlu0 %v2043, 17
  %v2302 = vpop.permute.xlu0 %2301
  %2303 = vrot.lane.b32.xlu0 %v2060, 17
  %v2304 = vpop.permute.xlu0 %2303
  %2305 = vrot.lane.b32.xlu0 %v2061, 17
  %v2306 = vpop.permute.xlu0 %2305
  %2307 = vrot.lane.b32.xlu0 %v2062, 17
  %v2308 = vpop.permute.xlu0 %2307
  %2309 = vrot.lane.b32.xlu0 %v2063, 17
  %v2310 = vpop.permute.xlu0 %2309
  %2311 = vrot.lane.b32.xlu0 %v2053, 17
  %v2312 = vpop.permute.xlu0 %2311
  %2313 = vrot.lane.b32.xlu0 %v2064, 17
  %v2314 = vpop.permute.xlu0 %2313
  %2315 = vrot.lane.b32.xlu0 %v2065, 17
  %v2316 = vpop.permute.xlu0 %2315
  %2317 = vrot.lane.b32.xlu0 %v2066, 17
  %v2318 = vpop.permute.xlu0 %2317
  %2319 = vrot.lane.b32.xlu0 %v2067, 17
  %v2320 = vpop.permute.xlu0 %2319
  %2321 = vrot.lane.b32.xlu0 %v2106, 17
  %v2322 = vpop.permute.xlu0 %2321
  %2323 = vrot.lane.b32.xlu0 %v2123, 17
  %v2324 = vpop.permute.xlu0 %2323
  %2325 = vrot.lane.b32.xlu0 %v2124, 17
  %v2326 = vpop.permute.xlu0 %2325
  %2327 = vrot.lane.b32.xlu0 %v2125, 17
  %v2328 = vpop.permute.xlu0 %2327
  %2329 = vrot.lane.b32.xlu0 %v2126, 17
  %v2330 = vpop.permute.xlu0 %2329
  %2331 = vrot.lane.b32.xlu0 %v2116, 17
  %v2332 = vpop.permute.xlu0 %2331
  %2333 = vrot.lane.b32.xlu0 %v2127, 17
  %v2334 = vpop.permute.xlu0 %2333
  %2335 = vrot.lane.b32.xlu0 %v2128, 17
  %v2336 = vpop.permute.xlu0 %2335
  %2337 = vrot.lane.b32.xlu0 %v2129, 17
  %v2338 = vpop.permute.xlu0 %2337
  %2339 = vrot.lane.b32.xlu0 %v2130, 17
  %v2340 = vpop.permute.xlu0 %2339
  %v2341 = vsel %vm840, %v2162, %v2164
  %v2342 = vsel %vm840, %v2164, %v2166
  %v2343 = vsel %vm840, %v2166, %v2168
  %v2344 = vsel %vm840, %v2168, %v2170
  %v2345 = vsel %vm840, %v2172, %v2174
  %v2346 = vsel %vm840, %v2174, %v2176
  %v2347 = vsel %vm840, %v2176, %v2178
  %v2348 = vsel %vm840, %v2178, %v2180
  %v2349 = vsel %vm840, %v2182, %v2184
  %v2350 = vsel %vm840, %v2184, %v2186
  %v2351 = vsel %vm840, %v2186, %v2188
  %v2352 = vsel %vm840, %v2188, %v2190
  %v2353 = vsel %vm840, %v2192, %v2194
  %v2354 = vsel %vm840, %v2194, %v2196
  %v2355 = vsel %vm840, %v2196, %v2198
  %v2356 = vsel %vm840, %v2198, %v2200
  %v2357 = vsel %vm840, %v2202, %v2204
  %v2358 = vsel %vm840, %v2204, %v2206
  %v2359 = vsel %vm840, %v2206, %v2208
  %v2360 = vsel %vm840, %v2208, %v2210
  %v2361 = vsel %vm840, %v2212, %v2214
  %v2362 = vsel %vm840, %v2214, %v2216
  %v2363 = vsel %vm840, %v2216, %v2218
  %v2364 = vsel %vm840, %v2218, %v2220
  %v2365 = vsel %vm840, %v2222, %v2224
  %v2366 = vsel %vm840, %v2224, %v2226
  %v2367 = vsel %vm840, %v2226, %v2228
  %v2368 = vsel %vm840, %v2228, %v2230
  %v2369 = vsel %vm840, %v2232, %v2234
  %v2370 = vsel %vm840, %v2234, %v2236
  %v2371 = vsel %vm840, %v2236, %v2238
  %v2372 = vsel %vm840, %v2238, %v2240
  %v2373 = vsel %vm840, %v2242, %v2244
  %v2374 = vsel %vm840, %v2244, %v2246
  %v2375 = vsel %vm840, %v2246, %v2248
  %v2376 = vsel %vm840, %v2248, %v2250
  %v2377 = vsel %vm840, %v2252, %v2254
  %v2378 = vsel %vm840, %v2254, %v2256
  %v2379 = vsel %vm840, %v2256, %v2258
  %v2380 = vsel %vm840, %v2258, %v2260
  %v2381 = vsel %vm840, %v2262, %v2264
  %v2382 = vsel %vm840, %v2264, %v2266
  %v2383 = vsel %vm840, %v2266, %v2268
  %v2384 = vsel %vm840, %v2268, %v2270
  %v2385 = vsel %vm840, %v2272, %v2274
  %v2386 = vsel %vm840, %v2274, %v2276
  %v2387 = vsel %vm840, %v2276, %v2278
  %v2388 = vsel %vm840, %v2278, %v2280
  %v2389 = vsel %vm840, %v2282, %v2284
  %v2390 = vsel %vm840, %v2284, %v2286
  %v2391 = vsel %vm840, %v2286, %v2288
  %v2392 = vsel %vm840, %v2288, %v2290
  %v2393 = vsel %vm840, %v2292, %v2294
  %v2394 = vsel %vm840, %v2294, %v2296
  %v2395 = vsel %vm840, %v2296, %v2298
  %v2396 = vsel %vm840, %v2298, %v2300
  %v2397 = vsel %vm840, %v2302, %v2304
  %v2398 = vsel %vm840, %v2304, %v2306
  %v2399 = vsel %vm840, %v2306, %v2308
  %v2400 = vsel %vm840, %v2308, %v2310
  %v2401 = vsel %vm840, %v2312, %v2314
  %v2402 = vsel %vm840, %v2314, %v2316
  %v2403 = vsel %vm840, %v2316, %v2318
  %v2404 = vsel %vm840, %v2318, %v2320
  %v2405 = vsel %vm840, %v2322, %v2324
  %v2406 = vsel %vm840, %v2324, %v2326
  %v2407 = vsel %vm840, %v2326, %v2328
  %v2408 = vsel %vm840, %v2328, %v2330
  %v2409 = vsel %vm840, %v2332, %v2334
  %v2410 = vsel %vm840, %v2334, %v2336
  %v2411 = vsel %vm840, %v2336, %v2338
  %v2412 = vsel %vm840, %v2338, %v2340
  %vm2485 = vcmask 261120
  %v2487 = vsel %vm2485, %v2153, 0
  %v2490 = vsel %vm2485, %v2156, 0
  %2492 = vmatpush.bf16.msra.mxu0 %v2369
  %2493 = vmatpush.bf16.msra.mxu0 %v2365
  %2494 = vmatpush.bf16.msra.mxu0 %v2361
  %2495 = vmatpush.bf16.msra.mxu0 %v2357
  %2496 = vmatpush.bf16.msra.mxu0 %v2353
  %2497 = vmatpush.bf16.msra.mxu0 %v2349
  %2498 = vmatpush.bf16.msra.mxu0 %v2345
  %2499 = vmatpush.bf16.msra.mxu0 %v2341
  %2500 = vmatmul.bf16.gmra.mxu0 %v2151
  %v2501 = vpop.f32.mrf.mxu0
  %v2502 = vadd.f32 0.0, %v2501
  %v2503 = vpop.f32.mrf.mxu0
  %v2504 = vadd.f32 0.0, %v2503
  %2505 = vmatmul.bf16.gmra.mxu0 %v2154
  %v2506 = vpop.f32.mrf.mxu0
  %v2507 = vadd.f32 0.0, %v2506
  %v2508 = vpop.f32.mrf.mxu0
  %v2509 = vadd.f32 0.0, %v2508
  %2510 = vdwg.mxu0
  %2511 = vmatpush.bf16.msra.mxu0 %v2401
  %2512 = vmatpush.bf16.msra.mxu0 %v2397
  %2513 = vmatpush.bf16.msra.mxu0 %v2393
  %2514 = vmatpush.bf16.msra.mxu0 %v2389
  %2515 = vmatpush.bf16.msra.mxu0 %v2385
  %2516 = vmatpush.bf16.msra.mxu0 %v2381
  %2517 = vmatpush.bf16.msra.mxu0 %v2377
  %2518 = vmatpush.bf16.msra.mxu0 %v2373
  %2519 = vmatmul.bf16.gmra.mxu0 %v2152
  %v2520 = vpop.f32.mrf.mxu0
  %v2521 = vadd.f32 %v2502, %v2520
  %v2522 = vpop.f32.mrf.mxu0
  %v2523 = vadd.f32 %v2504, %v2522
  %2524 = vmatmul.bf16.gmra.mxu0 %v2155
  %v2525 = vpop.f32.mrf.mxu0
  %v2526 = vadd.f32 %v2507, %v2525
  %v2527 = vpop.f32.mrf.mxu0
  %v2528 = vadd.f32 %v2509, %v2527
  %2529 = vdwg.mxu0
  %2530 = vmatpush.bf16.msra.mxu0 0
  %2531 = vmatpush.bf16.msra.mxu0 0
  %2532 = vmatpush.bf16.msra.mxu0 0
  %2533 = vmatpush.bf16.msra.mxu0 0
  %2534 = vmatpush.bf16.msra.mxu0 0
  %2535 = vmatpush.bf16.msra.mxu0 0
  %2536 = vmatpush.bf16.msra.mxu0 %v2409
  %2537 = vmatpush.bf16.msra.mxu0 %v2405
  %2538 = vmatmul.bf16.gmra.mxu0 %v2487
  %v2539 = vpop.f32.mrf.mxu0
  %v2540 = vadd.f32 %v2521, %v2539
  %v2541 = vpop.f32.mrf.mxu0
  %v2542 = vadd.f32 %v2523, %v2541
  %2543 = vmatmul.bf16.gmra.mxu0 %v2490
  %v2544 = vpop.f32.mrf.mxu0
  %v2545 = vadd.f32 %v2526, %v2544
  %v2546 = vpop.f32.mrf.mxu0
  %v2547 = vadd.f32 %v2528, %v2546
  %2548 = vdwg.mxu0
  %2549 = vmatpush.bf16.msra.mxu0 %v2370
  %2550 = vmatpush.bf16.msra.mxu0 %v2366
  %2551 = vmatpush.bf16.msra.mxu0 %v2362
  %2552 = vmatpush.bf16.msra.mxu0 %v2358
  %2553 = vmatpush.bf16.msra.mxu0 %v2354
  %2554 = vmatpush.bf16.msra.mxu0 %v2350
  %2555 = vmatpush.bf16.msra.mxu0 %v2346
  %2556 = vmatpush.bf16.msra.mxu0 %v2342
  %2557 = vmatmul.bf16.gmra.mxu0 %v2151
  %v2558 = vpop.f32.mrf.mxu0
  %v2559 = vadd.f32 0.0, %v2558
  %v2560 = vpop.f32.mrf.mxu0
  %v2561 = vadd.f32 0.0, %v2560
  %2562 = vmatmul.bf16.gmra.mxu0 %v2154
  %v2563 = vpop.f32.mrf.mxu0
  %v2564 = vadd.f32 0.0, %v2563
  %v2565 = vpop.f32.mrf.mxu0
  %v2566 = vadd.f32 0.0, %v2565
  %2567 = vdwg.mxu0
  %2568 = vmatpush.bf16.msra.mxu0 %v2402
  %2569 = vmatpush.bf16.msra.mxu0 %v2398
  %2570 = vmatpush.bf16.msra.mxu0 %v2394
  %2571 = vmatpush.bf16.msra.mxu0 %v2390
  %2572 = vmatpush.bf16.msra.mxu0 %v2386
  %2573 = vmatpush.bf16.msra.mxu0 %v2382
  %2574 = vmatpush.bf16.msra.mxu0 %v2378
  %2575 = vmatpush.bf16.msra.mxu0 %v2374
  %2576 = vmatmul.bf16.gmra.mxu0 %v2152
  %v2577 = vpop.f32.mrf.mxu0
  %v2578 = vadd.f32 %v2559, %v2577
  %v2579 = vpop.f32.mrf.mxu0
  %v2580 = vadd.f32 %v2561, %v2579
  %2581 = vmatmul.bf16.gmra.mxu0 %v2155
  %v2582 = vpop.f32.mrf.mxu0
  %v2583 = vadd.f32 %v2564, %v2582
  %v2584 = vpop.f32.mrf.mxu0
  %v2585 = vadd.f32 %v2566, %v2584
  %2586 = vdwg.mxu0
  %2587 = vmatpush.bf16.msra.mxu0 0
  %2588 = vmatpush.bf16.msra.mxu0 0
  %2589 = vmatpush.bf16.msra.mxu0 0
  %2590 = vmatpush.bf16.msra.mxu0 0
  %2591 = vmatpush.bf16.msra.mxu0 0
  %2592 = vmatpush.bf16.msra.mxu0 0
  %2593 = vmatpush.bf16.msra.mxu0 %v2410
  %2594 = vmatpush.bf16.msra.mxu0 %v2406
  %2595 = vmatmul.bf16.gmra.mxu0 %v2487
  %v2596 = vpop.f32.mrf.mxu0
  %v2597 = vadd.f32 %v2578, %v2596
  %v2598 = vpop.f32.mrf.mxu0
  %v2599 = vadd.f32 %v2580, %v2598
  %2600 = vmatmul.bf16.gmra.mxu0 %v2490
  %v2601 = vpop.f32.mrf.mxu0
  %v2602 = vadd.f32 %v2583, %v2601
  %v2603 = vpop.f32.mrf.mxu0
  %v2604 = vadd.f32 %v2585, %v2603
  %2605 = vdwg.mxu0
  %2606 = vmatpush.bf16.msra.mxu0 %v2371
  %2607 = vmatpush.bf16.msra.mxu0 %v2367
  %2608 = vmatpush.bf16.msra.mxu0 %v2363
  %2609 = vmatpush.bf16.msra.mxu0 %v2359
  %2610 = vmatpush.bf16.msra.mxu0 %v2355
  %2611 = vmatpush.bf16.msra.mxu0 %v2351
  %2612 = vmatpush.bf16.msra.mxu0 %v2347
  %2613 = vmatpush.bf16.msra.mxu0 %v2343
  %2614 = vmatmul.bf16.gmra.mxu0 %v2151
  %v2615 = vpop.f32.mrf.mxu0
  %v2616 = vadd.f32 0.0, %v2615
  %v2617 = vpop.f32.mrf.mxu0
  %v2618 = vadd.f32 0.0, %v2617
  %2619 = vmatmul.bf16.gmra.mxu0 %v2154
  %v2620 = vpop.f32.mrf.mxu0
  %v2621 = vadd.f32 0.0, %v2620
  %v2622 = vpop.f32.mrf.mxu0
  %v2623 = vadd.f32 0.0, %v2622
  %2624 = vdwg.mxu0
  %2625 = vmatpush.bf16.msra.mxu0 %v2403
  %2626 = vmatpush.bf16.msra.mxu0 %v2399
  %2627 = vmatpush.bf16.msra.mxu0 %v2395
  %2628 = vmatpush.bf16.msra.mxu0 %v2391
  %2629 = vmatpush.bf16.msra.mxu0 %v2387
  %2630 = vmatpush.bf16.msra.mxu0 %v2383
  %2631 = vmatpush.bf16.msra.mxu0 %v2379
  %2632 = vmatpush.bf16.msra.mxu0 %v2375
  %2633 = vmatmul.bf16.gmra.mxu0 %v2152
  %v2634 = vpop.f32.mrf.mxu0
  %v2635 = vadd.f32 %v2616, %v2634
  %v2636 = vpop.f32.mrf.mxu0
  %v2637 = vadd.f32 %v2618, %v2636
  %2638 = vmatmul.bf16.gmra.mxu0 %v2155
  %v2639 = vpop.f32.mrf.mxu0
  %v2640 = vadd.f32 %v2621, %v2639
  %v2641 = vpop.f32.mrf.mxu0
  %v2642 = vadd.f32 %v2623, %v2641
  %2643 = vdwg.mxu0
  %2644 = vmatpush.bf16.msra.mxu0 0
  %2645 = vmatpush.bf16.msra.mxu0 0
  %2646 = vmatpush.bf16.msra.mxu0 0
  %2647 = vmatpush.bf16.msra.mxu0 0
  %2648 = vmatpush.bf16.msra.mxu0 0
  %2649 = vmatpush.bf16.msra.mxu0 0
  %2650 = vmatpush.bf16.msra.mxu0 %v2411
  %2651 = vmatpush.bf16.msra.mxu0 %v2407
  %2652 = vmatmul.bf16.gmra.mxu0 %v2487
  %v2653 = vpop.f32.mrf.mxu0
  %v2654 = vadd.f32 %v2635, %v2653
  %v2655 = vpop.f32.mrf.mxu0
  %v2656 = vadd.f32 %v2637, %v2655
  %2657 = vmatmul.bf16.gmra.mxu0 %v2490
  %v2658 = vpop.f32.mrf.mxu0
  %v2659 = vadd.f32 %v2640, %v2658
  %v2660 = vpop.f32.mrf.mxu0
  %v2661 = vadd.f32 %v2642, %v2660
  %2662 = vdwg.mxu0
  %2663 = vmatpush.bf16.msra.mxu0 %v2372
  %2664 = vmatpush.bf16.msra.mxu0 %v2368
  %2665 = vmatpush.bf16.msra.mxu0 %v2364
  %2666 = vmatpush.bf16.msra.mxu0 %v2360
  %2667 = vmatpush.bf16.msra.mxu0 %v2356
  %2668 = vmatpush.bf16.msra.mxu0 %v2352
  %2669 = vmatpush.bf16.msra.mxu0 %v2348
  %2670 = vmatpush.bf16.msra.mxu0 %v2344
  %2671 = vmatmul.bf16.gmra.mxu0 %v2151
  %v2672 = vpop.f32.mrf.mxu0
  %v2673 = vadd.f32 0.0, %v2672
  %v2674 = vpop.f32.mrf.mxu0
  %v2675 = vadd.f32 0.0, %v2674
  %2676 = vmatmul.bf16.gmra.mxu0 %v2154
  %v2677 = vpop.f32.mrf.mxu0
  %v2678 = vadd.f32 0.0, %v2677
  %v2679 = vpop.f32.mrf.mxu0
  %v2680 = vadd.f32 0.0, %v2679
  %2681 = vdwg.mxu0
  %2682 = vmatpush.bf16.msra.mxu0 %v2404
  %2683 = vmatpush.bf16.msra.mxu0 %v2400
  %2684 = vmatpush.bf16.msra.mxu0 %v2396
  %2685 = vmatpush.bf16.msra.mxu0 %v2392
  %2686 = vmatpush.bf16.msra.mxu0 %v2388
  %2687 = vmatpush.bf16.msra.mxu0 %v2384
  %2688 = vmatpush.bf16.msra.mxu0 %v2380
  %2689 = vmatpush.bf16.msra.mxu0 %v2376
  %2690 = vmatmul.bf16.gmra.mxu0 %v2152
  %v2691 = vpop.f32.mrf.mxu0
  %v2692 = vadd.f32 %v2673, %v2691
  %v2693 = vpop.f32.mrf.mxu0
  %v2694 = vadd.f32 %v2675, %v2693
  %2695 = vmatmul.bf16.gmra.mxu0 %v2155
  %v2696 = vpop.f32.mrf.mxu0
  %v2697 = vadd.f32 %v2678, %v2696
  %v2698 = vpop.f32.mrf.mxu0
  %v2699 = vadd.f32 %v2680, %v2698
  %2700 = vdwg.mxu0
  %2701 = vmatpush.bf16.msra.mxu0 0
  %2702 = vmatpush.bf16.msra.mxu0 0
  %2703 = vmatpush.bf16.msra.mxu0 0
  %2704 = vmatpush.bf16.msra.mxu0 0
  %2705 = vmatpush.bf16.msra.mxu0 0
  %2706 = vmatpush.bf16.msra.mxu0 0
  %2707 = vmatpush.bf16.msra.mxu0 %v2412
  %2708 = vmatpush.bf16.msra.mxu0 %v2408
  %2709 = vmatmul.bf16.gmra.mxu0 %v2487
  %v2710 = vpop.f32.mrf.mxu0
  %v2711 = vadd.f32 %v2692, %v2710
  %v2712 = vpop.f32.mrf.mxu0
  %v2713 = vadd.f32 %v2694, %v2712
  %2714 = vmatmul.bf16.gmra.mxu0 %v2490
  %v2715 = vpop.f32.mrf.mxu0
  %v2716 = vadd.f32 %v2697, %v2715
  %v2717 = vpop.f32.mrf.mxu0
  %v2718 = vadd.f32 %v2699, %v2717
  %2719 = vdwg.mxu0
  %v2720 = vadd.f32 %v2540, %v2597
  %v2721 = vadd.f32 %v2720, %v2654
  %v2722 = vadd.f32 %v2721, %v2711
  %2723 = vadd.xlane.f32.xlu0 %v2722
  %v2724 = vpop.xlane.xlu0 %2723
  %v2725 = vadd.f32 %v2542, %v2599
  %v2726 = vadd.f32 %v2725, %v2656
  %v2727 = vadd.f32 %v2726, %v2713
  %2728 = vadd.xlane.f32.xlu0 %v2727
  %v2729 = vpop.xlane.xlu0 %2728
  %v2730 = vadd.f32 %v2545, %v2602
  %v2731 = vadd.f32 %v2730, %v2659
  %v2732 = vadd.f32 %v2731, %v2716
  %2733 = vadd.xlane.f32.xlu0 %v2732
  %v2734 = vpop.xlane.xlu0 %2733
  %v2735 = vadd.f32 %v2547, %v2604
  %v2736 = vadd.f32 %v2735, %v2661
  %v2737 = vadd.f32 %v2736, %v2718
  %2738 = vadd.xlane.f32.xlu0 %v2737
  %v2739 = vpop.xlane.xlu0 %2738
  %v2740 = vmul.f32 %v2724, 0.001953125
  %v2741 = vmul.f32 %v2729, 0.001953125
  %v2742 = vmul.f32 %v2734, 0.001953125
  %v2743 = vmul.f32 %v2739, 0.001953125
  %v2744 = vmul.f32 %v2540, %v2540
  %v2745 = vmul.f32 %v2597, %v2597
  %v2746 = vmul.f32 %v2654, %v2654
  %v2747 = vmul.f32 %v2711, %v2711
  %v2748 = vmul.f32 %v2542, %v2542
  %v2749 = vmul.f32 %v2599, %v2599
  %v2750 = vmul.f32 %v2656, %v2656
  %v2751 = vmul.f32 %v2713, %v2713
  %v2752 = vmul.f32 %v2545, %v2545
  %v2753 = vmul.f32 %v2602, %v2602
  %v2754 = vmul.f32 %v2659, %v2659
  %v2755 = vmul.f32 %v2716, %v2716
  %v2756 = vmul.f32 %v2547, %v2547
  %v2757 = vmul.f32 %v2604, %v2604
  %v2758 = vmul.f32 %v2661, %v2661
  %v2759 = vmul.f32 %v2718, %v2718
  %v2760 = vadd.f32 %v2744, %v2745
  %v2761 = vadd.f32 %v2760, %v2746
  %v2762 = vadd.f32 %v2761, %v2747
  %2763 = vadd.xlane.f32.xlu0 %v2762
  %v2764 = vpop.xlane.xlu0 %2763
  %v2765 = vadd.f32 %v2748, %v2749
  %v2766 = vadd.f32 %v2765, %v2750
  %v2767 = vadd.f32 %v2766, %v2751
  %2768 = vadd.xlane.f32.xlu0 %v2767
  %v2769 = vpop.xlane.xlu0 %2768
  %v2770 = vadd.f32 %v2752, %v2753
  %v2771 = vadd.f32 %v2770, %v2754
  %v2772 = vadd.f32 %v2771, %v2755
  %2773 = vadd.xlane.f32.xlu0 %v2772
  %v2774 = vpop.xlane.xlu0 %2773
  %v2775 = vadd.f32 %v2756, %v2757
  %v2776 = vadd.f32 %v2775, %v2758
  %v2777 = vadd.f32 %v2776, %v2759
  %2778 = vadd.xlane.f32.xlu0 %v2777
  %v2779 = vpop.xlane.xlu0 %2778
  %v2780 = vmul.f32 %v2764, 0.001953125
  %v2781 = vmul.f32 %v2769, 0.001953125
  %v2782 = vmul.f32 %v2774, 0.001953125
  %v2783 = vmul.f32 %v2779, 0.001953125
  %v2784 = vmul.f32 %v2740, %v2740
  %v2785 = vmul.f32 %v2741, %v2741
  %v2786 = vmul.f32 %v2742, %v2742
  %v2787 = vmul.f32 %v2743, %v2743
  %v2788 = vsub.f32 %v2780, %v2784
  %v2789 = vsub.f32 %v2781, %v2785
  %v2790 = vsub.f32 %v2782, %v2786
  %v2791 = vsub.f32 %v2783, %v2787
  %v2792 = vld [vmem:[%s4] sm:$0xff]
  %v2793 = vld [vmem:[%s4 + $0x8] sm:$0xff]
  %v2794 = vld [vmem:[%s4 + $0x10] sm:$0xff]
  %v2795 = vld [vmem:[%s4 + $0x18] sm:$0xff]
  %v2796 = vadd.f32 %v2788, 1e-05
  %v2797 = vadd.f32 %v2789, 1e-05
  %v2798 = vadd.f32 %v2790, 1e-05
  %v2799 = vadd.f32 %v2791, 1e-05
  %v2800 = vrsqrt.pop %v2796
  %v2801 = vmul.f32 %v2800, %v2796
  %v2802 = vmul.f32 %v2801, %v2800
  %v2803 = vmul.f32 0.5, %v2802
  %v2804 = vsub.f32 1.5, %v2803
  %v2805 = vmul.f32 %v2800, %v2804
  %vm2806 = vweird.f32 %v2796
  %vm2807 = vweird.f32 %v2800
  %vm2808 = vmor %vm2806, %vm2807
  %v2809 = vsel %vm2808, %v2800, %v2805
  %v2810 = vrsqrt.pop %v2797
  %v2811 = vmul.f32 %v2810, %v2797
  %v2812 = vmul.f32 %v2811, %v2810
  %v2813 = vmul.f32 0.5, %v2812
  %v2814 = vsub.f32 1.5, %v2813
  %v2815 = vmul.f32 %v2810, %v2814
  %vm2816 = vweird.f32 %v2797
  %vm2817 = vweird.f32 %v2810
  %vm2818 = vmor %vm2816, %vm2817
  %v2819 = vsel %vm2818, %v2810, %v2815
  %v2820 = vrsqrt.pop %v2798
  %v2821 = vmul.f32 %v2820, %v2798
  %v2822 = vmul.f32 %v2821, %v2820
  %v2823 = vmul.f32 0.5, %v2822
  %v2824 = vsub.f32 1.5, %v2823
  %v2825 = vmul.f32 %v2820, %v2824
  %vm2826 = vweird.f32 %v2798
  %vm2827 = vweird.f32 %v2820
  %vm2828 = vmor %vm2826, %vm2827
  %v2829 = vsel %vm2828, %v2820, %v2825
  %v2830 = vrsqrt.pop %v2799
  %v2831 = vmul.f32 %v2830, %v2799
  %v2832 = vmul.f32 %v2831, %v2830
  %v2833 = vmul.f32 0.5, %v2832
  %v2834 = vsub.f32 1.5, %v2833
  %v2835 = vmul.f32 %v2830, %v2834
  %vm2836 = vweird.f32 %v2799
  %vm2837 = vweird.f32 %v2830
  %vm2838 = vmor %vm2836, %vm2837
  %v2839 = vsel %vm2838, %v2830, %v2835
  %v2840 = vmul.f32 %v2792, %v2809
  %v2841 = vmul.f32 %v2793, %v2819
  %v2842 = vmul.f32 %v2794, %v2829
  %v2843 = vmul.f32 %v2795, %v2839
  %2845 = vset.pattern.permute.xlu0 0
  %2846 = vperm.xlu0 %2845, %v2840
  %v2847 = vpop.permute.xlu0 %2846
  %2850 = vset.pattern.permute.xlu0 0
  %2851 = vperm.xlu0 %2850, %v2841
  %v2852 = vpop.permute.xlu0 %2851
  %2855 = vset.pattern.permute.xlu0 0
  %2856 = vperm.xlu0 %2855, %v2842
  %v2857 = vpop.permute.xlu0 %2856
  %2860 = vset.pattern.permute.xlu0 0
  %2861 = vperm.xlu0 %2860, %v2843
  %v2862 = vpop.permute.xlu0 %2861
  %v2864 = vmul.f32 %v2540, %v2847
  %v2865 = vmul.f32 %v2597, %v2847
  %v2866 = vmul.f32 %v2654, %v2847
  %v2867 = vmul.f32 %v2711, %v2847
  %v2868 = vmul.f32 %v2542, %v2852
  %v2869 = vmul.f32 %v2599, %v2852
  %v2870 = vmul.f32 %v2656, %v2852
  %v2871 = vmul.f32 %v2713, %v2852
  %v2872 = vmul.f32 %v2545, %v2857
  %v2873 = vmul.f32 %v2602, %v2857
  %v2874 = vmul.f32 %v2659, %v2857
  %v2875 = vmul.f32 %v2716, %v2857
  %v2876 = vmul.f32 %v2547, %v2862
  %v2877 = vmul.f32 %v2604, %v2862
  %v2878 = vmul.f32 %v2661, %v2862
  %v2879 = vmul.f32 %v2718, %v2862
  %v2880 = vmax.f32 %v2864, 0.0
  %v2881 = vmax.f32 %v2865, 0.0
  %v2882 = vmax.f32 %v2866, 0.0
  %v2883 = vmax.f32 %v2867, 0.0
  %v2884 = vmax.f32 %v2868, 0.0
  %v2885 = vmax.f32 %v2869, 0.0
  %v2886 = vmax.f32 %v2870, 0.0
  %v2887 = vmax.f32 %v2871, 0.0
  %v2888 = vmax.f32 %v2872, 0.0
  %v2889 = vmax.f32 %v2873, 0.0
  %v2890 = vmax.f32 %v2874, 0.0
  %v2891 = vmax.f32 %v2875, 0.0
  %v2892 = vmax.f32 %v2876, 0.0
  %v2893 = vmax.f32 %v2877, 0.0
  %v2894 = vmax.f32 %v2878, 0.0
  %v2895 = vmax.f32 %v2879, 0.0
  %v2896 = vpack.c.bf16 %v2881, %v2880
  %v2897 = vpack.c.bf16 %v2883, %v2882
  %v2898 = vpack.c.bf16 %v2885, %v2884
  %v2899 = vpack.c.bf16 %v2887, %v2886
  %v2900 = vpack.c.bf16 %v2889, %v2888
  %v2901 = vpack.c.bf16 %v2891, %v2890
  %v2902 = vpack.c.bf16 %v2893, %v2892
  %v2903 = vpack.c.bf16 %v2895, %v2894
  %s2904 = scalar_lea.vmem %s3, 48
  %v2905 = vld [vmem:[%s2904] sm:$0xff]
  %v2906 = vld [vmem:[%s2904 + $0x8] sm:$0xf]
  %v2907 = vld [vmem:[%s2904 + $0xc] sm:$0xff]
  %v2908 = vld [vmem:[%s2904 + $0x14] sm:$0xf]
  %v2909 = vld [vmem:[%s2904 + $0x18] sm:$0xff]
  %v2910 = vld [vmem:[%s2904 + $0x20] sm:$0xf]
  %v2911 = vld [vmem:[%s2904 + $0x24] sm:$0xff]
  %v2912 = vld [vmem:[%s2904 + $0x2c] sm:$0xf]
  %v2921 = vunpack.c.l.b16 %v2896
  %v2922 = vunpack.c.h.b16 %v2896
  %v2923 = vunpack.c.l.b16 %v2897
  %v2924 = vunpack.c.h.b16 %v2897
  %v2925 = vunpack.c.l.b16 %v2898
  %v2926 = vunpack.c.h.b16 %v2898
  %v2927 = vunpack.c.l.b16 %v2899
  %v2928 = vunpack.c.h.b16 %v2899
  %v2929 = vunpack.c.l.b16 %v2900
  %v2930 = vunpack.c.h.b16 %v2900
  %v2931 = vunpack.c.l.b16 %v2901
  %v2932 = vunpack.c.h.b16 %v2901
  %v2933 = vunpack.c.l.b16 %v2902
  %v2934 = vunpack.c.h.b16 %v2902
  %v2935 = vunpack.c.l.b16 %v2903
  %v2936 = vunpack.c.h.b16 %v2903
  %v2937 = vpack.c.b16 %v2925, %v2921
  %v2938 = vpack.c.b16 %v2926, %v2922
  %v2939 = vpack.c.b16 %v2927, %v2923
  %v2940 = vpack.c.b16 %v2928, %v2924
  %v2941 = vpack.c.b16 %v2933, %v2929
  %v2942 = vpack.c.b16 %v2934, %v2930
  %v2943 = vpack.c.b16 %v2935, %v2931
  %v2944 = vpack.c.b16 %v2936, %v2932
  %v2953 = vunpack.c.l.bf16 %v2937
  %v2954 = vunpack.c.l.bf16 %v2938
  %v2955 = vunpack.c.l.bf16 %v2939
  %v2956 = vunpack.c.l.bf16 %v2940
  %v2957 = vunpack.c.h.bf16 %v2937
  %v2958 = vunpack.c.h.bf16 %v2938
  %v2959 = vunpack.c.h.bf16 %v2939
  %v2960 = vunpack.c.h.bf16 %v2940
  %v2961 = vunpack.c.l.bf16 %v2941
  %v2962 = vunpack.c.l.bf16 %v2942
  %v2963 = vunpack.c.l.bf16 %v2943
  %v2964 = vunpack.c.l.bf16 %v2944
  %v2965 = vunpack.c.h.bf16 %v2941
  %v2966 = vunpack.c.h.bf16 %v2942
  %v2967 = vunpack.c.h.bf16 %v2943
  %v2968 = vunpack.c.h.bf16 %v2944
  %v2969 = vmul.f32 %v2953, %v1078
  %v2970 = vmul.f32 %v2954, %v1079
  %v2971 = vmul.f32 %v2955, %v1080
  %v2972 = vmul.f32 %v2956, %v1077
  %v2973 = vmul.f32 %v2957, %v1078
  %v2974 = vmul.f32 %v2958, %v1079
  %v2975 = vmul.f32 %v2959, %v1080
  %v2976 = vmul.f32 %v2960, %v1077
  %v2977 = vmul.f32 %v2961, %v1078
  %v2978 = vmul.f32 %v2962, %v1079
  %v2979 = vmul.f32 %v2963, %v1080
  %v2980 = vmul.f32 %v2964, %v1077
  %v2981 = vmul.f32 %v2965, %v1078
  %v2982 = vmul.f32 %v2966, %v1079
  %v2983 = vmul.f32 %v2967, %v1080
  %v2984 = vmul.f32 %v2968, %v1077
  %v2985 = vpack.c.bf16 %v2969, %v1086
  %v2986 = vpack.c.bf16 %v2971, %v2970
  %v2987 = vpack.c.bf16 %v2972, %v2972
  %v2988 = vpack.c.bf16 %v2973, %v1091
  %v2989 = vpack.c.bf16 %v2975, %v2974
  %v2990 = vpack.c.bf16 %v2976, %v2976
  %v2991 = vpack.c.bf16 %v2977, %v1086
  %v2992 = vpack.c.bf16 %v2979, %v2978
  %v2993 = vpack.c.bf16 %v2980, %v2980
  %v2994 = vpack.c.bf16 %v2981, %v1091
  %v2995 = vpack.c.bf16 %v2983, %v2982
  %v2996 = vpack.c.bf16 %v2984, %v2984
  %v2997 = vmul.f32 %v2953, %v1149
  %v2998 = vmul.f32 %v2954, %v1150
  %v2999 = vmul.f32 %v2955, %v1151
  %v3000 = vmul.f32 %v2956, %v1148
  %v3001 = vmul.f32 %v2957, %v1149
  %v3002 = vmul.f32 %v2958, %v1150
  %v3003 = vmul.f32 %v2959, %v1151
  %v3004 = vmul.f32 %v2960, %v1148
  %v3005 = vmul.f32 %v2961, %v1149
  %v3006 = vmul.f32 %v2962, %v1150
  %v3007 = vmul.f32 %v2963, %v1151
  %v3008 = vmul.f32 %v2964, %v1148
  %v3009 = vmul.f32 %v2965, %v1149
  %v3010 = vmul.f32 %v2966, %v1150
  %v3011 = vmul.f32 %v2967, %v1151
  %v3012 = vmul.f32 %v2968, %v1148
  %v3013 = vpack.c.bf16 %v2997, %v1157
  %v3014 = vpack.c.bf16 %v2999, %v2998
  %v3015 = vpack.c.bf16 %v3000, %v3000
  %v3016 = vpack.c.bf16 %v3001, %v1162
  %v3017 = vpack.c.bf16 %v3003, %v3002
  %v3018 = vpack.c.bf16 %v3004, %v3004
  %v3019 = vpack.c.bf16 %v3005, %v1157
  %v3020 = vpack.c.bf16 %v3007, %v3006
  %v3021 = vpack.c.bf16 %v3008, %v3008
  %v3022 = vpack.c.bf16 %v3009, %v1162
  %v3023 = vpack.c.bf16 %v3011, %v3010
  %v3024 = vpack.c.bf16 %v3012, %v3012
  %v3025 = vmul.f32 %v2953, %v1220
  %v3026 = vmul.f32 %v2954, %v1221
  %v3027 = vmul.f32 %v2955, %v1222
  %v3028 = vmul.f32 %v2956, %v1219
  %v3029 = vmul.f32 %v2957, %v1220
  %v3030 = vmul.f32 %v2958, %v1221
  %v3031 = vmul.f32 %v2959, %v1222
  %v3032 = vmul.f32 %v2960, %v1219
  %v3033 = vmul.f32 %v2961, %v1220
  %v3034 = vmul.f32 %v2962, %v1221
  %v3035 = vmul.f32 %v2963, %v1222
  %v3036 = vmul.f32 %v2964, %v1219
  %v3037 = vmul.f32 %v2965, %v1220
  %v3038 = vmul.f32 %v2966, %v1221
  %v3039 = vmul.f32 %v2967, %v1222
  %v3040 = vmul.f32 %v2968, %v1219
  %v3041 = vpack.c.bf16 %v3025, %v1228
  %v3042 = vpack.c.bf16 %v3027, %v3026
  %v3043 = vpack.c.bf16 %v3028, %v3028
  %v3044 = vpack.c.bf16 %v3029, %v1233
  %v3045 = vpack.c.bf16 %v3031, %v3030
  %v3046 = vpack.c.bf16 %v3032, %v3032
  %v3047 = vpack.c.bf16 %v3033, %v1228
  %v3048 = vpack.c.bf16 %v3035, %v3034
  %v3049 = vpack.c.bf16 %v3036, %v3036
  %v3050 = vpack.c.bf16 %v3037, %v1233
  %v3051 = vpack.c.bf16 %v3039, %v3038
  %v3052 = vpack.c.bf16 %v3040, %v3040
  %v3053 = vmul.f32 %v2953, %v1291
  %v3054 = vmul.f32 %v2954, %v1292
  %v3055 = vmul.f32 %v2955, %v1293
  %v3056 = vmul.f32 %v2956, %v1290
  %v3057 = vmul.f32 %v2957, %v1291
  %v3058 = vmul.f32 %v2958, %v1292
  %v3059 = vmul.f32 %v2959, %v1293
  %v3060 = vmul.f32 %v2960, %v1290
  %v3061 = vmul.f32 %v2961, %v1291
  %v3062 = vmul.f32 %v2962, %v1292
  %v3063 = vmul.f32 %v2963, %v1293
  %v3064 = vmul.f32 %v2964, %v1290
  %v3065 = vmul.f32 %v2965, %v1291
  %v3066 = vmul.f32 %v2966, %v1292
  %v3067 = vmul.f32 %v2967, %v1293
  %v3068 = vmul.f32 %v2968, %v1290
  %v3069 = vpack.c.bf16 %v3053, %v1299
  %v3070 = vpack.c.bf16 %v3055, %v3054
  %v3071 = vpack.c.bf16 %v3056, %v3056
  %v3072 = vpack.c.bf16 %v3057, %v1304
  %v3073 = vpack.c.bf16 %v3059, %v3058
  %v3074 = vpack.c.bf16 %v3060, %v3060
  %v3075 = vpack.c.bf16 %v3061, %v1299
  %v3076 = vpack.c.bf16 %v3063, %v3062
  %v3077 = vpack.c.bf16 %v3064, %v3064
  %v3078 = vpack.c.bf16 %v3065, %v1304
  %v3079 = vpack.c.bf16 %v3067, %v3066
  %v3080 = vpack.c.bf16 %v3068, %v3068
  %v3081 = vmul.f32 %v2953, %v1355
  %v3082 = vmul.f32 %v2954, %v1362
  %v3083 = vmul.f32 %v2955, %v1363
  %v3084 = vmul.f32 %v2956, %v1364
  %v3085 = vmul.f32 %v2957, %v1355
  %v3086 = vmul.f32 %v2958, %v1362
  %v3087 = vmul.f32 %v2959, %v1363
  %v3088 = vmul.f32 %v2960, %v1364
  %v3089 = vmul.f32 %v2961, %v1355
  %v3090 = vmul.f32 %v2962, %v1362
  %v3091 = vmul.f32 %v2963, %v1363
  %v3092 = vmul.f32 %v2964, %v1364
  %v3093 = vmul.f32 %v2965, %v1355
  %v3094 = vmul.f32 %v2966, %v1362
  %v3095 = vmul.f32 %v2967, %v1363
  %v3096 = vmul.f32 %v2968, %v1364
  %v3097 = vpack.c.bf16 %v3082, %v3081
  %v3098 = vpack.c.bf16 %v3084, %v3083
  %v3099 = vpack.c.bf16 %v3086, %v3085
  %v3100 = vpack.c.bf16 %v3088, %v3087
  %v3101 = vpack.c.bf16 %v3090, %v3089
  %v3102 = vpack.c.bf16 %v3092, %v3091
  %v3103 = vpack.c.bf16 %v3094, %v3093
  %v3104 = vpack.c.bf16 %v3096, %v3095
  %v3105 = vmul.f32 %v2953, %v1424
  %v3106 = vmul.f32 %v2954, %v1431
  %v3107 = vmul.f32 %v2955, %v1432
  %v3108 = vmul.f32 %v2956, %v1433
  %v3109 = vmul.f32 %v2957, %v1424
  %v3110 = vmul.f32 %v2958, %v1431
  %v3111 = vmul.f32 %v2959, %v1432
  %v3112 = vmul.f32 %v2960, %v1433
  %v3113 = vmul.f32 %v2961, %v1424
  %v3114 = vmul.f32 %v2962, %v1431
  %v3115 = vmul.f32 %v2963, %v1432
  %v3116 = vmul.f32 %v2964, %v1433
  %v3117 = vmul.f32 %v2965, %v1424
  %v3118 = vmul.f32 %v2966, %v1431
  %v3119 = vmul.f32 %v2967, %v1432
  %v3120 = vmul.f32 %v2968, %v1433
  %v3121 = vpack.c.bf16 %v3106, %v3105
  %v3122 = vpack.c.bf16 %v3108, %v3107
  %v3123 = vpack.c.bf16 %v3110, %v3109
  %v3124 = vpack.c.bf16 %v3112, %v3111
  %v3125 = vpack.c.bf16 %v3114, %v3113
  %v3126 = vpack.c.bf16 %v3116, %v3115
  %v3127 = vpack.c.bf16 %v3118, %v3117
  %v3128 = vpack.c.bf16 %v3120, %v3119
  %v3129 = vmul.f32 %v2953, %v1493
  %v3130 = vmul.f32 %v2954, %v1500
  %v3131 = vmul.f32 %v2955, %v1501
  %v3132 = vmul.f32 %v2956, %v1502
  %v3133 = vmul.f32 %v2957, %v1493
  %v3134 = vmul.f32 %v2958, %v1500
  %v3135 = vmul.f32 %v2959, %v1501
  %v3136 = vmul.f32 %v2960, %v1502
  %v3137 = vmul.f32 %v2961, %v1493
  %v3138 = vmul.f32 %v2962, %v1500
  %v3139 = vmul.f32 %v2963, %v1501
  %v3140 = vmul.f32 %v2964, %v1502
  %v3141 = vmul.f32 %v2965, %v1493
  %v3142 = vmul.f32 %v2966, %v1500
  %v3143 = vmul.f32 %v2967, %v1501
  %v3144 = vmul.f32 %v2968, %v1502
  %v3145 = vpack.c.bf16 %v3130, %v3129
  %v3146 = vpack.c.bf16 %v3132, %v3131
  %v3147 = vpack.c.bf16 %v3134, %v3133
  %v3148 = vpack.c.bf16 %v3136, %v3135
  %v3149 = vpack.c.bf16 %v3138, %v3137
  %v3150 = vpack.c.bf16 %v3140, %v3139
  %v3151 = vpack.c.bf16 %v3142, %v3141
  %v3152 = vpack.c.bf16 %v3144, %v3143
  %v3153 = vmul.f32 %v2953, %v1562
  %v3154 = vmul.f32 %v2954, %v1569
  %v3155 = vmul.f32 %v2955, %v1570
  %v3156 = vmul.f32 %v2956, %v1571
  %v3157 = vmul.f32 %v2957, %v1562
  %v3158 = vmul.f32 %v2958, %v1569
  %v3159 = vmul.f32 %v2959, %v1570
  %v3160 = vmul.f32 %v2960, %v1571
  %v3161 = vmul.f32 %v2961, %v1562
  %v3162 = vmul.f32 %v2962, %v1569
  %v3163 = vmul.f32 %v2963, %v1570
  %v3164 = vmul.f32 %v2964, %v1571
  %v3165 = vmul.f32 %v2965, %v1562
  %v3166 = vmul.f32 %v2966, %v1569
  %v3167 = vmul.f32 %v2967, %v1570
  %v3168 = vmul.f32 %v2968, %v1571
  %v3169 = vpack.c.bf16 %v3154, %v3153
  %v3170 = vpack.c.bf16 %v3156, %v3155
  %v3171 = vpack.c.bf16 %v3158, %v3157
  %v3172 = vpack.c.bf16 %v3160, %v3159
  %v3173 = vpack.c.bf16 %v3162, %v3161
  %v3174 = vpack.c.bf16 %v3164, %v3163
  %v3175 = vpack.c.bf16 %v3166, %v3165
  %v3176 = vpack.c.bf16 %v3168, %v3167
  %v3189 = vunpack.c.l.b16 %v2985
  %v3190 = vunpack.c.h.b16 %v2985
  %v3191 = vunpack.c.l.b16 %v2986
  %v3192 = vunpack.c.h.b16 %v2986
  %v3193 = vunpack.c.l.b16 %v2987
  %v3194 = vunpack.c.l.b16 %v2988
  %v3195 = vunpack.c.h.b16 %v2988
  %v3196 = vunpack.c.l.b16 %v2989
  %v3197 = vunpack.c.h.b16 %v2989
  %v3198 = vunpack.c.l.b16 %v2990
  %v3199 = vunpack.c.l.b16 %v2991
  %v3200 = vunpack.c.h.b16 %v2991
  %v3201 = vunpack.c.l.b16 %v2992
  %v3202 = vunpack.c.h.b16 %v2992
  %v3203 = vunpack.c.l.b16 %v2993
  %v3204 = vunpack.c.l.b16 %v2994
  %v3205 = vunpack.c.h.b16 %v2994
  %v3206 = vunpack.c.l.b16 %v2995
  %v3207 = vunpack.c.h.b16 %v2995
  %v3208 = vunpack.c.l.b16 %v2996
  %v3209 = vpack.c.b16 %v3194, %v3189
  %v3210 = vpack.c.b16 %v3195, %v3190
  %v3211 = vpack.c.b16 %v3196, %v3191
  %v3212 = vpack.c.b16 %v3197, %v3192
  %v3213 = vpack.c.b16 %v3198, %v3193
  %v3214 = vpack.c.b16 %v3204, %v3199
  %v3215 = vpack.c.b16 %v3205, %v3200
  %v3216 = vpack.c.b16 %v3206, %v3201
  %v3217 = vpack.c.b16 %v3207, %v3202
  %v3218 = vpack.c.b16 %v3208, %v3203
  %v3231 = vunpack.c.l.b16 %v3013
  %v3232 = vunpack.c.h.b16 %v3013
  %v3233 = vunpack.c.l.b16 %v3014
  %v3234 = vunpack.c.h.b16 %v3014
  %v3235 = vunpack.c.l.b16 %v3015
  %v3236 = vunpack.c.l.b16 %v3016
  %v3237 = vunpack.c.h.b16 %v3016
  %v3238 = vunpack.c.l.b16 %v3017
  %v3239 = vunpack.c.h.b16 %v3017
  %v3240 = vunpack.c.l.b16 %v3018
  %v3241 = vunpack.c.l.b16 %v3019
  %v3242 = vunpack.c.h.b16 %v3019
  %v3243 = vunpack.c.l.b16 %v3020
  %v3244 = vunpack.c.h.b16 %v3020
  %v3245 = vunpack.c.l.b16 %v3021
  %v3246 = vunpack.c.l.b16 %v3022
  %v3247 = vunpack.c.h.b16 %v3022
  %v3248 = vunpack.c.l.b16 %v3023
  %v3249 = vunpack.c.h.b16 %v3023
  %v3250 = vunpack.c.l.b16 %v3024
  %v3251 = vpack.c.b16 %v3236, %v3231
  %v3252 = vpack.c.b16 %v3237, %v3232
  %v3253 = vpack.c.b16 %v3238, %v3233
  %v3254 = vpack.c.b16 %v3239, %v3234
  %v3255 = vpack.c.b16 %v3240, %v3235
  %v3256 = vpack.c.b16 %v3246, %v3241
  %v3257 = vpack.c.b16 %v3247, %v3242
  %v3258 = vpack.c.b16 %v3248, %v3243
  %v3259 = vpack.c.b16 %v3249, %v3244
  %v3260 = vpack.c.b16 %v3250, %v3245
  %3261 = vrot.lane.b32.xlu0 %v3251, 127
  %v3262 = vpop.permute.xlu0 %3261
  %3263 = vrot.lane.b32.xlu0 %v3252, 127
  %v3264 = vpop.permute.xlu0 %3263
  %3265 = vrot.lane.b32.xlu0 %v3253, 127
  %v3266 = vpop.permute.xlu0 %3265
  %3267 = vrot.lane.b32.xlu0 %v3254, 127
  %v3268 = vpop.permute.xlu0 %3267
  %3269 = vrot.lane.b32.xlu0 %v3255, 127
  %v3270 = vpop.permute.xlu0 %3269
  %3271 = vrot.lane.b32.xlu0 %v3256, 127
  %v3272 = vpop.permute.xlu0 %3271
  %3273 = vrot.lane.b32.xlu0 %v3257, 127
  %v3274 = vpop.permute.xlu0 %3273
  %3275 = vrot.lane.b32.xlu0 %v3258, 127
  %v3276 = vpop.permute.xlu0 %3275
  %3277 = vrot.lane.b32.xlu0 %v3259, 127
  %v3278 = vpop.permute.xlu0 %3277
  %3279 = vrot.lane.b32.xlu0 %v3260, 127
  %v3280 = vpop.permute.xlu0 %3279
  %v3281 = vsel %vm508, %v3262, %v3264
  %v3282 = vsel %vm508, %v3264, %v3266
  %v3283 = vsel %vm508, %v3266, %v3268
  %v3284 = vsel %vm508, %v3268, %v3270
  %v3285 = vsel %vm508, %v3272, %v3274
  %v3286 = vsel %vm508, %v3274, %v3276
  %v3287 = vsel %vm508, %v3276, %v3278
  %v3288 = vsel %vm508, %v3278, %v3280
  %v3301 = vunpack.c.l.b16 %v3041
  %v3302 = vunpack.c.h.b16 %v3041
  %v3303 = vunpack.c.l.b16 %v3042
  %v3304 = vunpack.c.h.b16 %v3042
  %v3305 = vunpack.c.l.b16 %v3043
  %v3306 = vunpack.c.l.b16 %v3044
  %v3307 = vunpack.c.h.b16 %v3044
  %v3308 = vunpack.c.l.b16 %v3045
  %v3309 = vunpack.c.h.b16 %v3045
  %v3310 = vunpack.c.l.b16 %v3046
  %v3311 = vunpack.c.l.b16 %v3047
  %v3312 = vunpack.c.h.b16 %v3047
  %v3313 = vunpack.c.l.b16 %v3048
  %v3314 = vunpack.c.h.b16 %v3048
  %v3315 = vunpack.c.l.b16 %v3049
  %v3316 = vunpack.c.l.b16 %v3050
  %v3317 = vunpack.c.h.b16 %v3050
  %v3318 = vunpack.c.l.b16 %v3051
  %v3319 = vunpack.c.h.b16 %v3051
  %v3320 = vunpack.c.l.b16 %v3052
  %v3321 = vpack.c.b16 %v3306, %v3301
  %v3322 = vpack.c.b16 %v3307, %v3302
  %v3323 = vpack.c.b16 %v3308, %v3303
  %v3324 = vpack.c.b16 %v3309, %v3304
  %v3325 = vpack.c.b16 %v3310, %v3305
  %v3326 = vpack.c.b16 %v3316, %v3311
  %v3327 = vpack.c.b16 %v3317, %v3312
  %v3328 = vpack.c.b16 %v3318, %v3313
  %v3329 = vpack.c.b16 %v3319, %v3314
  %v3330 = vpack.c.b16 %v3320, %v3315
  %3331 = vrot.lane.b32.xlu0 %v3321, 126
  %v3332 = vpop.permute.xlu0 %3331
  %3333 = vrot.lane.b32.xlu0 %v3322, 126
  %v3334 = vpop.permute.xlu0 %3333
  %3335 = vrot.lane.b32.xlu0 %v3323, 126
  %v3336 = vpop.permute.xlu0 %3335
  %3337 = vrot.lane.b32.xlu0 %v3324, 126
  %v3338 = vpop.permute.xlu0 %3337
  %3339 = vrot.lane.b32.xlu0 %v3325, 126
  %v3340 = vpop.permute.xlu0 %3339
  %3341 = vrot.lane.b32.xlu0 %v3326, 126
  %v3342 = vpop.permute.xlu0 %3341
  %3343 = vrot.lane.b32.xlu0 %v3327, 126
  %v3344 = vpop.permute.xlu0 %3343
  %3345 = vrot.lane.b32.xlu0 %v3328, 126
  %v3346 = vpop.permute.xlu0 %3345
  %3347 = vrot.lane.b32.xlu0 %v3329, 126
  %v3348 = vpop.permute.xlu0 %3347
  %3349 = vrot.lane.b32.xlu0 %v3330, 126
  %v3350 = vpop.permute.xlu0 %3349
  %v3351 = vsel %vm536, %v3332, %v3334
  %v3352 = vsel %vm536, %v3334, %v3336
  %v3353 = vsel %vm536, %v3336, %v3338
  %v3354 = vsel %vm536, %v3338, %v3340
  %v3355 = vsel %vm536, %v3342, %v3344
  %v3356 = vsel %vm536, %v3344, %v3346
  %v3357 = vsel %vm536, %v3346, %v3348
  %v3358 = vsel %vm536, %v3348, %v3350
  %v3371 = vunpack.c.l.b16 %v3069
  %v3372 = vunpack.c.h.b16 %v3069
  %v3373 = vunpack.c.l.b16 %v3070
  %v3374 = vunpack.c.h.b16 %v3070
  %v3375 = vunpack.c.l.b16 %v3071
  %v3376 = vunpack.c.l.b16 %v3072
  %v3377 = vunpack.c.h.b16 %v3072
  %v3378 = vunpack.c.l.b16 %v3073
  %v3379 = vunpack.c.h.b16 %v3073
  %v3380 = vunpack.c.l.b16 %v3074
  %v3381 = vunpack.c.l.b16 %v3075
  %v3382 = vunpack.c.h.b16 %v3075
  %v3383 = vunpack.c.l.b16 %v3076
  %v3384 = vunpack.c.h.b16 %v3076
  %v3385 = vunpack.c.l.b16 %v3077
  %v3386 = vunpack.c.l.b16 %v3078
  %v3387 = vunpack.c.h.b16 %v3078
  %v3388 = vunpack.c.l.b16 %v3079
  %v3389 = vunpack.c.h.b16 %v3079
  %v3390 = vunpack.c.l.b16 %v3080
  %v3391 = vpack.c.b16 %v3376, %v3371
  %v3392 = vpack.c.b16 %v3377, %v3372
  %v3393 = vpack.c.b16 %v3378, %v3373
  %v3394 = vpack.c.b16 %v3379, %v3374
  %v3395 = vpack.c.b16 %v3380, %v3375
  %v3396 = vpack.c.b16 %v3386, %v3381
  %v3397 = vpack.c.b16 %v3387, %v3382
  %v3398 = vpack.c.b16 %v3388, %v3383
  %v3399 = vpack.c.b16 %v3389, %v3384
  %v3400 = vpack.c.b16 %v3390, %v3385
  %3401 = vrot.lane.b32.xlu0 %v3391, 112
  %v3402 = vpop.permute.xlu0 %3401
  %3403 = vrot.lane.b32.xlu0 %v3392, 112
  %v3404 = vpop.permute.xlu0 %3403
  %3405 = vrot.lane.b32.xlu0 %v3393, 112
  %v3406 = vpop.permute.xlu0 %3405
  %3407 = vrot.lane.b32.xlu0 %v3394, 112
  %v3408 = vpop.permute.xlu0 %3407
  %3409 = vrot.lane.b32.xlu0 %v3395, 112
  %v3410 = vpop.permute.xlu0 %3409
  %3411 = vrot.lane.b32.xlu0 %v3396, 112
  %v3412 = vpop.permute.xlu0 %3411
  %3413 = vrot.lane.b32.xlu0 %v3397, 112
  %v3414 = vpop.permute.xlu0 %3413
  %3415 = vrot.lane.b32.xlu0 %v3398, 112
  %v3416 = vpop.permute.xlu0 %3415
  %3417 = vrot.lane.b32.xlu0 %v3399, 112
  %v3418 = vpop.permute.xlu0 %3417
  %3419 = vrot.lane.b32.xlu0 %v3400, 112
  %v3420 = vpop.permute.xlu0 %3419
  %v3421 = vsel %vm569, %v3402, %v3404
  %v3422 = vsel %vm569, %v3404, %v3406
  %v3423 = vsel %vm569, %v3406, %v3408
  %v3424 = vsel %vm569, %v3408, %v3410
  %v3425 = vsel %vm569, %v3412, %v3414
  %v3426 = vsel %vm569, %v3414, %v3416
  %v3427 = vsel %vm569, %v3416, %v3418
  %v3428 = vsel %vm569, %v3418, %v3420
  %3429 = vrot.lane.b32.xlu0 %v2937, 111
  %v3430 = vpop.permute.xlu0 %3429
  %3431 = vrot.lane.b32.xlu0 %v2938, 111
  %v3432 = vpop.permute.xlu0 %3431
  %3433 = vrot.lane.b32.xlu0 %v2939, 111
  %v3434 = vpop.permute.xlu0 %3433
  %3435 = vrot.lane.b32.xlu0 %v2940, 111
  %v3436 = vpop.permute.xlu0 %3435
  %3437 = vrot.lane.b32.xlu0 %v2941, 111
  %v3438 = vpop.permute.xlu0 %3437
  %3439 = vrot.lane.b32.xlu0 %v2942, 111
  %v3440 = vpop.permute.xlu0 %3439
  %3441 = vrot.lane.b32.xlu0 %v2943, 111
  %v3442 = vpop.permute.xlu0 %3441
  %3443 = vrot.lane.b32.xlu0 %v2944, 111
  %v3444 = vpop.permute.xlu0 %3443
  %v3445 = vsel %vm591, %v3430, %v3432
  %v3446 = vsel %vm591, %v3432, %v3434
  %v3447 = vsel %vm591, %v3434, %v3436
  %v3448 = vsel %vm591, %v3438, %v3440
  %v3449 = vsel %vm591, %v3440, %v3442
  %v3450 = vsel %vm591, %v3442, %v3444
  %v3459 = vunpack.c.l.b16 %v3097
  %v3460 = vunpack.c.h.b16 %v3097
  %v3461 = vunpack.c.l.b16 %v3098
  %v3462 = vunpack.c.h.b16 %v3098
  %v3463 = vunpack.c.l.b16 %v3099
  %v3464 = vunpack.c.h.b16 %v3099
  %v3465 = vunpack.c.l.b16 %v3100
  %v3466 = vunpack.c.h.b16 %v3100
  %v3467 = vunpack.c.l.b16 %v3101
  %v3468 = vunpack.c.h.b16 %v3101
  %v3469 = vunpack.c.l.b16 %v3102
  %v3470 = vunpack.c.h.b16 %v3102
  %v3471 = vunpack.c.l.b16 %v3103
  %v3472 = vunpack.c.h.b16 %v3103
  %v3473 = vunpack.c.l.b16 %v3104
  %v3474 = vunpack.c.h.b16 %v3104
  %v3475 = vpack.c.b16 %v3463, %v3459
  %v3476 = vpack.c.b16 %v3464, %v3460
  %v3477 = vpack.c.b16 %v3465, %v3461
  %v3478 = vpack.c.b16 %v3466, %v3462
  %v3479 = vpack.c.b16 %v3471, %v3467
  %v3480 = vpack.c.b16 %v3472, %v3468
  %v3481 = vpack.c.b16 %v3473, %v3469
  %v3482 = vpack.c.b16 %v3474, %v3470
  %3483 = vrot.lane.b32.xlu0 %v3475, 110
  %v3484 = vpop.permute.xlu0 %3483
  %3485 = vrot.lane.b32.xlu0 %v3476, 110
  %v3486 = vpop.permute.xlu0 %3485
  %3487 = vrot.lane.b32.xlu0 %v3477, 110
  %v3488 = vpop.permute.xlu0 %3487
  %3489 = vrot.lane.b32.xlu0 %v3478, 110
  %v3490 = vpop.permute.xlu0 %3489
  %3491 = vrot.lane.b32.xlu0 %v3479, 110
  %v3492 = vpop.permute.xlu0 %3491
  %3493 = vrot.lane.b32.xlu0 %v3480, 110
  %v3494 = vpop.permute.xlu0 %3493
  %3495 = vrot.lane.b32.xlu0 %v3481, 110
  %v3496 = vpop.permute.xlu0 %3495
  %3497 = vrot.lane.b32.xlu0 %v3482, 110
  %v3498 = vpop.permute.xlu0 %3497
  %v3499 = vsel %vm623, %v3484, %v3486
  %v3500 = vsel %vm623, %v3486, %v3488
  %v3501 = vsel %vm623, %v3488, %v3490
  %v3502 = vsel %vm623, %v3490, %v1925
  %v3503 = vsel %vm623, %v3492, %v3494
  %v3504 = vsel %vm623, %v3494, %v3496
  %v3505 = vsel %vm623, %v3496, %v3498
  %v3506 = vsel %vm623, %v3498, %v1925
  %v3515 = vunpack.c.l.b16 %v3121
  %v3516 = vunpack.c.h.b16 %v3121
  %v3517 = vunpack.c.l.b16 %v3122
  %v3518 = vunpack.c.h.b16 %v3122
  %v3519 = vunpack.c.l.b16 %v3123
  %v3520 = vunpack.c.h.b16 %v3123
  %v3521 = vunpack.c.l.b16 %v3124
  %v3522 = vunpack.c.h.b16 %v3124
  %v3523 = vunpack.c.l.b16 %v3125
  %v3524 = vunpack.c.h.b16 %v3125
  %v3525 = vunpack.c.l.b16 %v3126
  %v3526 = vunpack.c.h.b16 %v3126
  %v3527 = vunpack.c.l.b16 %v3127
  %v3528 = vunpack.c.h.b16 %v3127
  %v3529 = vunpack.c.l.b16 %v3128
  %v3530 = vunpack.c.h.b16 %v3128
  %v3531 = vpack.c.b16 %v3519, %v3515
  %v3532 = vpack.c.b16 %v3520, %v3516
  %v3533 = vpack.c.b16 %v3521, %v3517
  %v3534 = vpack.c.b16 %v3522, %v3518
  %v3535 = vpack.c.b16 %v3527, %v3523
  %v3536 = vpack.c.b16 %v3528, %v3524
  %v3537 = vpack.c.b16 %v3529, %v3525
  %v3538 = vpack.c.b16 %v3530, %v3526
  %3539 = vrot.lane.b32.xlu0 %v3531, 96
  %v3540 = vpop.permute.xlu0 %3539
  %3541 = vrot.lane.b32.xlu0 %v3532, 96
  %v3542 = vpop.permute.xlu0 %3541
  %3543 = vrot.lane.b32.xlu0 %v3533, 96
  %v3544 = vpop.permute.xlu0 %3543
  %3545 = vrot.lane.b32.xlu0 %v3534, 96
  %v3546 = vpop.permute.xlu0 %3545
  %3547 = vrot.lane.b32.xlu0 %v3535, 96
  %v3548 = vpop.permute.xlu0 %3547
  %3549 = vrot.lane.b32.xlu0 %v3536, 96
  %v3550 = vpop.permute.xlu0 %3549
  %3551 = vrot.lane.b32.xlu0 %v3537, 96
  %v3552 = vpop.permute.xlu0 %3551
  %3553 = vrot.lane.b32.xlu0 %v3538, 96
  %v3554 = vpop.permute.xlu0 %3553
  %v3555 = vsel %vm651, %v3540, %v3542
  %v3556 = vsel %vm651, %v3542, %v3544
  %v3557 = vsel %vm651, %v3544, %v3546
  %v3558 = vsel %vm651, %v3546, %v1988
  %v3559 = vsel %vm651, %v3548, %v3550
  %v3560 = vsel %vm651, %v3550, %v3552
  %v3561 = vsel %vm651, %v3552, %v3554
  %v3562 = vsel %vm651, %v3554, %v1988
  %v3571 = vunpack.c.l.b16 %v3145
  %v3572 = vunpack.c.h.b16 %v3145
  %v3573 = vunpack.c.l.b16 %v3146
  %v3574 = vunpack.c.h.b16 %v3146
  %v3575 = vunpack.c.l.b16 %v3147
  %v3576 = vunpack.c.h.b16 %v3147
  %v3577 = vunpack.c.l.b16 %v3148
  %v3578 = vunpack.c.h.b16 %v3148
  %v3579 = vunpack.c.l.b16 %v3149
  %v3580 = vunpack.c.h.b16 %v3149
  %v3581 = vunpack.c.l.b16 %v3150
  %v3582 = vunpack.c.h.b16 %v3150
  %v3583 = vunpack.c.l.b16 %v3151
  %v3584 = vunpack.c.h.b16 %v3151
  %v3585 = vunpack.c.l.b16 %v3152
  %v3586 = vunpack.c.h.b16 %v3152
  %v3587 = vpack.c.b16 %v3575, %v3571
  %v3588 = vpack.c.b16 %v3576, %v3572
  %v3589 = vpack.c.b16 %v3577, %v3573
  %v3590 = vpack.c.b16 %v3578, %v3574
  %v3591 = vpack.c.b16 %v3583, %v3579
  %v3592 = vpack.c.b16 %v3584, %v3580
  %v3593 = vpack.c.b16 %v3585, %v3581
  %v3594 = vpack.c.b16 %v3586, %v3582
  %3595 = vrot.lane.b32.xlu0 %v3587, 95
  %v3596 = vpop.permute.xlu0 %3595
  %3597 = vrot.lane.b32.xlu0 %v3588, 95
  %v3598 = vpop.permute.xlu0 %3597
  %3599 = vrot.lane.b32.xlu0 %v3589, 95
  %v3600 = vpop.permute.xlu0 %3599
  %3601 = vrot.lane.b32.xlu0 %v3590, 95
  %v3602 = vpop.permute.xlu0 %3601
  %3603 = vrot.lane.b32.xlu0 %v3591, 95
  %v3604 = vpop.permute.xlu0 %3603
  %3605 = vrot.lane.b32.xlu0 %v3592, 95
  %v3606 = vpop.permute.xlu0 %3605
  %3607 = vrot.lane.b32.xlu0 %v3593, 95
  %v3608 = vpop.permute.xlu0 %3607
  %3609 = vrot.lane.b32.xlu0 %v3594, 95
  %v3610 = vpop.permute.xlu0 %3609
  %v3611 = vsel %vm684, %v3596, %v3598
  %v3612 = vsel %vm684, %v3598, %v3600
  %v3613 = vsel %vm684, %v3600, %v3602
  %v3614 = vsel %vm684, %v3602, %v2051
  %v3615 = vsel %vm684, %v3604, %v3606
  %v3616 = vsel %vm684, %v3606, %v3608
  %v3617 = vsel %vm684, %v3608, %v3610
  %v3618 = vsel %vm684, %v3610, %v2051
  %v3627 = vunpack.c.l.b16 %v3169
  %v3628 = vunpack.c.h.b16 %v3169
  %v3629 = vunpack.c.l.b16 %v3170
  %v3630 = vunpack.c.h.b16 %v3170
  %v3631 = vunpack.c.l.b16 %v3171
  %v3632 = vunpack.c.h.b16 %v3171
  %v3633 = vunpack.c.l.b16 %v3172
  %v3634 = vunpack.c.h.b16 %v3172
  %v3635 = vunpack.c.l.b16 %v3173
  %v3636 = vunpack.c.h.b16 %v3173
  %v3637 = vunpack.c.l.b16 %v3174
  %v3638 = vunpack.c.h.b16 %v3174
  %v3639 = vunpack.c.l.b16 %v3175
  %v3640 = vunpack.c.h.b16 %v3175
  %v3641 = vunpack.c.l.b16 %v3176
  %v3642 = vunpack.c.h.b16 %v3176
  %v3643 = vpack.c.b16 %v3631, %v3627
  %v3644 = vpack.c.b16 %v3632, %v3628
  %v3645 = vpack.c.b16 %v3633, %v3629
  %v3646 = vpack.c.b16 %v3634, %v3630
  %v3647 = vpack.c.b16 %v3639, %v3635
  %v3648 = vpack.c.b16 %v3640, %v3636
  %v3649 = vpack.c.b16 %v3641, %v3637
  %v3650 = vpack.c.b16 %v3642, %v3638
  %3651 = vrot.lane.b32.xlu0 %v3643, 94
  %v3652 = vpop.permute.xlu0 %3651
  %3653 = vrot.lane.b32.xlu0 %v3644, 94
  %v3654 = vpop.permute.xlu0 %3653
  %3655 = vrot.lane.b32.xlu0 %v3645, 94
  %v3656 = vpop.permute.xlu0 %3655
  %3657 = vrot.lane.b32.xlu0 %v3646, 94
  %v3658 = vpop.permute.xlu0 %3657
  %3659 = vrot.lane.b32.xlu0 %v3647, 94
  %v3660 = vpop.permute.xlu0 %3659
  %3661 = vrot.lane.b32.xlu0 %v3648, 94
  %v3662 = vpop.permute.xlu0 %3661
  %3663 = vrot.lane.b32.xlu0 %v3649, 94
  %v3664 = vpop.permute.xlu0 %3663
  %3665 = vrot.lane.b32.xlu0 %v3650, 94
  %v3666 = vpop.permute.xlu0 %3665
  %v3667 = vsel %vm712, %v3652, %v3654
  %v3668 = vsel %vm712, %v3654, %v3656
  %v3669 = vsel %vm712, %v3656, %v3658
  %v3670 = vsel %vm712, %v3658, %v2114
  %v3671 = vsel %vm712, %v3660, %v3662
  %v3672 = vsel %vm712, %v3662, %v3664
  %v3673 = vsel %vm712, %v3664, %v3666
  %v3674 = vsel %vm712, %v3666, %v2114
  %v3683 = vunpack.c.l.b16 %v2905
  %v3684 = vunpack.c.h.b16 %v2905
  %v3685 = vunpack.c.l.b16 %v2906
  %v3686 = vunpack.c.l.b16 %v2907
  %v3687 = vunpack.c.h.b16 %v2907
  %v3688 = vunpack.c.l.b16 %v2908
  %v3689 = vunpack.c.l.b16 %v2909
  %v3690 = vunpack.c.h.b16 %v2909
  %v3691 = vunpack.c.l.b16 %v2910
  %v3692 = vunpack.c.l.b16 %v2911
  %v3693 = vunpack.c.h.b16 %v2911
  %v3694 = vunpack.c.l.b16 %v2912
  %v3695 = vpack.c.b16 %v3686, %v3683
  %v3696 = vpack.c.b16 %v3687, %v3684
  %v3697 = vpack.c.b16 %v3688, %v3685
  %v3698 = vpack.c.b16 %v3692, %v3689
  %v3699 = vpack.c.b16 %v3693, %v3690
  %v3700 = vpack.c.b16 %v3694, %v3691
  %3705 = vrot.lane.b32.xlu0 %v3209, 17
  %v3706 = vpop.permute.xlu0 %3705
  %3707 = vrot.lane.b32.xlu0 %v3210, 17
  %v3708 = vpop.permute.xlu0 %3707
  %3709 = vrot.lane.b32.xlu0 %v3211, 17
  %v3710 = vpop.permute.xlu0 %3709
  %3711 = vrot.lane.b32.xlu0 %v3212, 17
  %v3712 = vpop.permute.xlu0 %3711
  %3713 = vrot.lane.b32.xlu0 %v3213, 17
  %v3714 = vpop.permute.xlu0 %3713
  %3715 = vrot.lane.b32.xlu0 %v3214, 17
  %v3716 = vpop.permute.xlu0 %3715
  %3717 = vrot.lane.b32.xlu0 %v3215, 17
  %v3718 = vpop.permute.xlu0 %3717
  %3719 = vrot.lane.b32.xlu0 %v3216, 17
  %v3720 = vpop.permute.xlu0 %3719
  %3721 = vrot.lane.b32.xlu0 %v3217, 17
  %v3722 = vpop.permute.xlu0 %3721
  %3723 = vrot.lane.b32.xlu0 %v3218, 17
  %v3724 = vpop.permute.xlu0 %3723
  %3725 = vrot.lane.b32.xlu0 %v3281, 17
  %v3726 = vpop.permute.xlu0 %3725
  %3727 = vrot.lane.b32.xlu0 %v3282, 17
  %v3728 = vpop.permute.xlu0 %3727
  %3729 = vrot.lane.b32.xlu0 %v3283, 17
  %v3730 = vpop.permute.xlu0 %3729
  %3731 = vrot.lane.b32.xlu0 %v3284, 17
  %v3732 = vpop.permute.xlu0 %3731
  %3733 = vrot.lane.b32.xlu0 %v3270, 17
  %v3734 = vpop.permute.xlu0 %3733
  %3735 = vrot.lane.b32.xlu0 %v3285, 17
  %v3736 = vpop.permute.xlu0 %3735
  %3737 = vrot.lane.b32.xlu0 %v3286, 17
  %v3738 = vpop.permute.xlu0 %3737
  %3739 = vrot.lane.b32.xlu0 %v3287, 17
  %v3740 = vpop.permute.xlu0 %3739
  %3741 = vrot.lane.b32.xlu0 %v3288, 17
  %v3742 = vpop.permute.xlu0 %3741
  %3743 = vrot.lane.b32.xlu0 %v3280, 17
  %v3744 = vpop.permute.xlu0 %3743
  %3745 = vrot.lane.b32.xlu0 %v3351, 17
  %v3746 = vpop.permute.xlu0 %3745
  %3747 = vrot.lane.b32.xlu0 %v3352, 17
  %v3748 = vpop.permute.xlu0 %3747
  %3749 = vrot.lane.b32.xlu0 %v3353, 17
  %v3750 = vpop.permute.xlu0 %3749
  %3751 = vrot.lane.b32.xlu0 %v3354, 17
  %v3752 = vpop.permute.xlu0 %3751
  %3753 = vrot.lane.b32.xlu0 %v3340, 17
  %v3754 = vpop.permute.xlu0 %3753
  %3755 = vrot.lane.b32.xlu0 %v3355, 17
  %v3756 = vpop.permute.xlu0 %3755
  %3757 = vrot.lane.b32.xlu0 %v3356, 17
  %v3758 = vpop.permute.xlu0 %3757
  %3759 = vrot.lane.b32.xlu0 %v3357, 17
  %v3760 = vpop.permute.xlu0 %3759
  %3761 = vrot.lane.b32.xlu0 %v3358, 17
  %v3762 = vpop.permute.xlu0 %3761
  %3763 = vrot.lane.b32.xlu0 %v3350, 17
  %v3764 = vpop.permute.xlu0 %3763
  %3765 = vrot.lane.b32.xlu0 %v3421, 17
  %v3766 = vpop.permute.xlu0 %3765
  %3767 = vrot.lane.b32.xlu0 %v3422, 17
  %v3768 = vpop.permute.xlu0 %3767
  %3769 = vrot.lane.b32.xlu0 %v3423, 17
  %v3770 = vpop.permute.xlu0 %3769
  %3771 = vrot.lane.b32.xlu0 %v3424, 17
  %v3772 = vpop.permute.xlu0 %3771
  %3773 = vrot.lane.b32.xlu0 %v3410, 17
  %v3774 = vpop.permute.xlu0 %3773
  %3775 = vrot.lane.b32.xlu0 %v3425, 17
  %v3776 = vpop.permute.xlu0 %3775
  %3777 = vrot.lane.b32.xlu0 %v3426, 17
  %v3778 = vpop.permute.xlu0 %3777
  %3779 = vrot.lane.b32.xlu0 %v3427, 17
  %v3780 = vpop.permute.xlu0 %3779
  %3781 = vrot.lane.b32.xlu0 %v3428, 17
  %v3782 = vpop.permute.xlu0 %3781
  %3783 = vrot.lane.b32.xlu0 %v3420, 17
  %v3784 = vpop.permute.xlu0 %3783
  %3785 = vrot.lane.b32.xlu0 %v3430, 17
  %v3786 = vpop.permute.xlu0 %3785
  %3787 = vrot.lane.b32.xlu0 %v3445, 17
  %v3788 = vpop.permute.xlu0 %3787
  %3789 = vrot.lane.b32.xlu0 %v3446, 17
  %v3790 = vpop.permute.xlu0 %3789
  %3791 = vrot.lane.b32.xlu0 %v3447, 17
  %v3792 = vpop.permute.xlu0 %3791
  %3793 = vrot.lane.b32.xlu0 %v3436, 17
  %v3794 = vpop.permute.xlu0 %3793
  %3795 = vrot.lane.b32.xlu0 %v3438, 17
  %v3796 = vpop.permute.xlu0 %3795
  %3797 = vrot.lane.b32.xlu0 %v3448, 17
  %v3798 = vpop.permute.xlu0 %3797
  %3799 = vrot.lane.b32.xlu0 %v3449, 17
  %v3800 = vpop.permute.xlu0 %3799
  %3801 = vrot.lane.b32.xlu0 %v3450, 17
  %v3802 = vpop.permute.xlu0 %3801
  %3803 = vrot.lane.b32.xlu0 %v3444, 17
  %v3804 = vpop.permute.xlu0 %3803
  %3805 = vrot.lane.b32.xlu0 %v3484, 17
  %v3806 = vpop.permute.xlu0 %3805
  %3807 = vrot.lane.b32.xlu0 %v3499, 17
  %v3808 = vpop.permute.xlu0 %3807
  %3809 = vrot.lane.b32.xlu0 %v3500, 17
  %v3810 = vpop.permute.xlu0 %3809
  %3811 = vrot.lane.b32.xlu0 %v3501, 17
  %v3812 = vpop.permute.xlu0 %3811
  %3813 = vrot.lane.b32.xlu0 %v3502, 17
  %v3814 = vpop.permute.xlu0 %3813
  %3815 = vrot.lane.b32.xlu0 %v3492, 17
  %v3816 = vpop.permute.xlu0 %3815
  %3817 = vrot.lane.b32.xlu0 %v3503, 17
  %v3818 = vpop.permute.xlu0 %3817
  %3819 = vrot.lane.b32.xlu0 %v3504, 17
  %v3820 = vpop.permute.xlu0 %3819
  %3821 = vrot.lane.b32.xlu0 %v3505, 17
  %v3822 = vpop.permute.xlu0 %3821
  %3823 = vrot.lane.b32.xlu0 %v3506, 17
  %v3824 = vpop.permute.xlu0 %3823
  %3825 = vrot.lane.b32.xlu0 %v3540, 17
  %v3826 = vpop.permute.xlu0 %3825
  %3827 = vrot.lane.b32.xlu0 %v3555, 17
  %v3828 = vpop.permute.xlu0 %3827
  %3829 = vrot.lane.b32.xlu0 %v3556, 17
  %v3830 = vpop.permute.xlu0 %3829
  %3831 = vrot.lane.b32.xlu0 %v3557, 17
  %v3832 = vpop.permute.xlu0 %3831
  %3833 = vrot.lane.b32.xlu0 %v3558, 17
  %v3834 = vpop.permute.xlu0 %3833
  %3835 = vrot.lane.b32.xlu0 %v3548, 17
  %v3836 = vpop.permute.xlu0 %3835
  %3837 = vrot.lane.b32.xlu0 %v3559, 17
  %v3838 = vpop.permute.xlu0 %3837
  %3839 = vrot.lane.b32.xlu0 %v3560, 17
  %v3840 = vpop.permute.xlu0 %3839
  %3841 = vrot.lane.b32.xlu0 %v3561, 17
  %v3842 = vpop.permute.xlu0 %3841
  %3843 = vrot.lane.b32.xlu0 %v3562, 17
  %v3844 = vpop.permute.xlu0 %3843
  %3845 = vrot.lane.b32.xlu0 %v3596, 17
  %v3846 = vpop.permute.xlu0 %3845
  %3847 = vrot.lane.b32.xlu0 %v3611, 17
  %v3848 = vpop.permute.xlu0 %3847
  %3849 = vrot.lane.b32.xlu0 %v3612, 17
  %v3850 = vpop.permute.xlu0 %3849
  %3851 = vrot.lane.b32.xlu0 %v3613, 17
  %v3852 = vpop.permute.xlu0 %3851
  %3853 = vrot.lane.b32.xlu0 %v3614, 17
  %v3854 = vpop.permute.xlu0 %3853
  %3855 = vrot.lane.b32.xlu0 %v3604, 17
  %v3856 = vpop.permute.xlu0 %3855
  %3857 = vrot.lane.b32.xlu0 %v3615, 17
  %v3858 = vpop.permute.xlu0 %3857
  %3859 = vrot.lane.b32.xlu0 %v3616, 17
  %v3860 = vpop.permute.xlu0 %3859
  %3861 = vrot.lane.b32.xlu0 %v3617, 17
  %v3862 = vpop.permute.xlu0 %3861
  %3863 = vrot.lane.b32.xlu0 %v3618, 17
  %v3864 = vpop.permute.xlu0 %3863
  %3865 = vrot.lane.b32.xlu0 %v3652, 17
  %v3866 = vpop.permute.xlu0 %3865
  %3867 = vrot.lane.b32.xlu0 %v3667, 17
  %v3868 = vpop.permute.xlu0 %3867
  %3869 = vrot.lane.b32.xlu0 %v3668, 17
  %v3870 = vpop.permute.xlu0 %3869
  %3871 = vrot.lane.b32.xlu0 %v3669, 17
  %v3872 = vpop.permute.xlu0 %3871
  %3873 = vrot.lane.b32.xlu0 %v3670, 17
  %v3874 = vpop.permute.xlu0 %3873
  %3875 = vrot.lane.b32.xlu0 %v3660, 17
  %v3876 = vpop.permute.xlu0 %3875
  %3877 = vrot.lane.b32.xlu0 %v3671, 17
  %v3878 = vpop.permute.xlu0 %3877
  %3879 = vrot.lane.b32.xlu0 %v3672, 17
  %v3880 = vpop.permute.xlu0 %3879
  %3881 = vrot.lane.b32.xlu0 %v3673, 17
  %v3882 = vpop.permute.xlu0 %3881
  %3883 = vrot.lane.b32.xlu0 %v3674, 17
  %v3884 = vpop.permute.xlu0 %3883
  %v3885 = vsel %vm840, %v3706, %v3708
  %v3886 = vsel %vm840, %v3708, %v3710
  %v3887 = vsel %vm840, %v3710, %v3712
  %v3888 = vsel %vm840, %v3712, %v3714
  %v3889 = vsel %vm840, %v3716, %v3718
  %v3890 = vsel %vm840, %v3718, %v3720
  %v3891 = vsel %vm840, %v3720, %v3722
  %v3892 = vsel %vm840, %v3722, %v3724
  %v3893 = vsel %vm840, %v3726, %v3728
  %v3894 = vsel %vm840, %v3728, %v3730
  %v3895 = vsel %vm840, %v3730, %v3732
  %v3896 = vsel %vm840, %v3732, %v3734
  %v3897 = vsel %vm840, %v3736, %v3738
  %v3898 = vsel %vm840, %v3738, %v3740
  %v3899 = vsel %vm840, %v3740, %v3742
  %v3900 = vsel %vm840, %v3742, %v3744
  %v3901 = vsel %vm840, %v3746, %v3748
  %v3902 = vsel %vm840, %v3748, %v3750
  %v3903 = vsel %vm840, %v3750, %v3752
  %v3904 = vsel %vm840, %v3752, %v3754
  %v3905 = vsel %vm840, %v3756, %v3758
  %v3906 = vsel %vm840, %v3758, %v3760
  %v3907 = vsel %vm840, %v3760, %v3762
  %v3908 = vsel %vm840, %v3762, %v3764
  %v3909 = vsel %vm840, %v3766, %v3768
  %v3910 = vsel %vm840, %v3768, %v3770
  %v3911 = vsel %vm840, %v3770, %v3772
  %v3912 = vsel %vm840, %v3772, %v3774
  %v3913 = vsel %vm840, %v3776, %v3778
  %v3914 = vsel %vm840, %v3778, %v3780
  %v3915 = vsel %vm840, %v3780, %v3782
  %v3916 = vsel %vm840, %v3782, %v3784
  %v3917 = vsel %vm840, %v3786, %v3788
  %v3918 = vsel %vm840, %v3788, %v3790
  %v3919 = vsel %vm840, %v3790, %v3792
  %v3920 = vsel %vm840, %v3792, %v3794
  %v3921 = vsel %vm840, %v3796, %v3798
  %v3922 = vsel %vm840, %v3798, %v3800
  %v3923 = vsel %vm840, %v3800, %v3802
  %v3924 = vsel %vm840, %v3802, %v3804
  %v3925 = vsel %vm840, %v3806, %v3808
  %v3926 = vsel %vm840, %v3808, %v3810
  %v3927 = vsel %vm840, %v3810, %v3812
  %v3928 = vsel %vm840, %v3812, %v3814
  %v3929 = vsel %vm840, %v3816, %v3818
  %v3930 = vsel %vm840, %v3818, %v3820
  %v3931 = vsel %vm840, %v3820, %v3822
  %v3932 = vsel %vm840, %v3822, %v3824
  %v3933 = vsel %vm840, %v3826, %v3828
  %v3934 = vsel %vm840, %v3828, %v3830
  %v3935 = vsel %vm840, %v3830, %v3832
  %v3936 = vsel %vm840, %v3832, %v3834
  %v3937 = vsel %vm840, %v3836, %v3838
  %v3938 = vsel %vm840, %v3838, %v3840
  %v3939 = vsel %vm840, %v3840, %v3842
  %v3940 = vsel %vm840, %v3842, %v3844
  %v3941 = vsel %vm840, %v3846, %v3848
  %v3942 = vsel %vm840, %v3848, %v3850
  %v3943 = vsel %vm840, %v3850, %v3852
  %v3944 = vsel %vm840, %v3852, %v3854
  %v3945 = vsel %vm840, %v3856, %v3858
  %v3946 = vsel %vm840, %v3858, %v3860
  %v3947 = vsel %vm840, %v3860, %v3862
  %v3948 = vsel %vm840, %v3862, %v3864
  %v3949 = vsel %vm840, %v3866, %v3868
  %v3950 = vsel %vm840, %v3868, %v3870
  %v3951 = vsel %vm840, %v3870, %v3872
  %v3952 = vsel %vm840, %v3872, %v3874
  %v3953 = vsel %vm840, %v3876, %v3878
  %v3954 = vsel %vm840, %v3878, %v3880
  %v3955 = vsel %vm840, %v3880, %v3882
  %v3956 = vsel %vm840, %v3882, %v3884
  %v4030 = vsel %vm2485, %v3697, 0
  %v4033 = vsel %vm2485, %v3700, 0
  %4035 = vmatpush.bf16.msra.mxu0 %v3913
  %4036 = vmatpush.bf16.msra.mxu0 %v3909
  %4037 = vmatpush.bf16.msra.mxu0 %v3905
  %4038 = vmatpush.bf16.msra.mxu0 %v3901
  %4039 = vmatpush.bf16.msra.mxu0 %v3897
  %4040 = vmatpush.bf16.msra.mxu0 %v3893
  %4041 = vmatpush.bf16.msra.mxu0 %v3889
  %4042 = vmatpush.bf16.msra.mxu0 %v3885
  %4043 = vmatmul.bf16.gmra.mxu0 %v3695
  %v4044 = vpop.f32.mrf.mxu0
  %v4045 = vadd.f32 0.0, %v4044
  %v4046 = vpop.f32.mrf.mxu0
  %v4047 = vadd.f32 0.0, %v4046
  %4048 = vmatmul.bf16.gmra.mxu0 %v3698
  %v4049 = vpop.f32.mrf.mxu0
  %v4050 = vadd.f32 0.0, %v4049
  %v4051 = vpop.f32.mrf.mxu0
  %v4052 = vadd.f32 0.0, %v4051
  %4053 = vdwg.mxu0
  %4054 = vmatpush.bf16.msra.mxu0 %v3945
  %4055 = vmatpush.bf16.msra.mxu0 %v3941
  %4056 = vmatpush.bf16.msra.mxu0 %v3937
  %4057 = vmatpush.bf16.msra.mxu0 %v3933
  %4058 = vmatpush.bf16.msra.mxu0 %v3929
  %4059 = vmatpush.bf16.msra.mxu0 %v3925
  %4060 = vmatpush.bf16.msra.mxu0 %v3921
  %4061 = vmatpush.bf16.msra.mxu0 %v3917
  %4062 = vmatmul.bf16.gmra.mxu0 %v3696
  %v4063 = vpop.f32.mrf.mxu0
  %v4064 = vadd.f32 %v4045, %v4063
  %v4065 = vpop.f32.mrf.mxu0
  %v4066 = vadd.f32 %v4047, %v4065
  %4067 = vmatmul.bf16.gmra.mxu0 %v3699
  %v4068 = vpop.f32.mrf.mxu0
  %v4069 = vadd.f32 %v4050, %v4068
  %v4070 = vpop.f32.mrf.mxu0
  %v4071 = vadd.f32 %v4052, %v4070
  %4072 = vdwg.mxu0
  %4073 = vmatpush.bf16.msra.mxu0 0
  %4074 = vmatpush.bf16.msra.mxu0 0
  %4075 = vmatpush.bf16.msra.mxu0 0
  %4076 = vmatpush.bf16.msra.mxu0 0
  %4077 = vmatpush.bf16.msra.mxu0 0
  %4078 = vmatpush.bf16.msra.mxu0 0
  %4079 = vmatpush.bf16.msra.mxu0 %v3953
  %4080 = vmatpush.bf16.msra.mxu0 %v3949
  %4081 = vmatmul.bf16.gmra.mxu0 %v4030
  %v4082 = vpop.f32.mrf.mxu0
  %v4083 = vadd.f32 %v4064, %v4082
  %v4084 = vpop.f32.mrf.mxu0
  %v4085 = vadd.f32 %v4066, %v4084
  %4086 = vmatmul.bf16.gmra.mxu0 %v4033
  %v4087 = vpop.f32.mrf.mxu0
  %v4088 = vadd.f32 %v4069, %v4087
  %v4089 = vpop.f32.mrf.mxu0
  %v4090 = vadd.f32 %v4071, %v4089
  %4091 = vdwg.mxu0
  %4092 = vmatpush.bf16.msra.mxu0 %v3914
  %4093 = vmatpush.bf16.msra.mxu0 %v3910
  %4094 = vmatpush.bf16.msra.mxu0 %v3906
  %4095 = vmatpush.bf16.msra.mxu0 %v3902
  %4096 = vmatpush.bf16.msra.mxu0 %v3898
  %4097 = vmatpush.bf16.msra.mxu0 %v3894
  %4098 = vmatpush.bf16.msra.mxu0 %v3890
  %4099 = vmatpush.bf16.msra.mxu0 %v3886
  %4100 = vmatmul.bf16.gmra.mxu0 %v3695
  %v4101 = vpop.f32.mrf.mxu0
  %v4102 = vadd.f32 0.0, %v4101
  %v4103 = vpop.f32.mrf.mxu0
  %v4104 = vadd.f32 0.0, %v4103
  %4105 = vmatmul.bf16.gmra.mxu0 %v3698
  %v4106 = vpop.f32.mrf.mxu0
  %v4107 = vadd.f32 0.0, %v4106
  %v4108 = vpop.f32.mrf.mxu0
  %v4109 = vadd.f32 0.0, %v4108
  %4110 = vdwg.mxu0
  %4111 = vmatpush.bf16.msra.mxu0 %v3946
  %4112 = vmatpush.bf16.msra.mxu0 %v3942
  %4113 = vmatpush.bf16.msra.mxu0 %v3938
  %4114 = vmatpush.bf16.msra.mxu0 %v3934
  %4115 = vmatpush.bf16.msra.mxu0 %v3930
  %4116 = vmatpush.bf16.msra.mxu0 %v3926
  %4117 = vmatpush.bf16.msra.mxu0 %v3922
  %4118 = vmatpush.bf16.msra.mxu0 %v3918
  %4119 = vmatmul.bf16.gmra.mxu0 %v3696
  %v4120 = vpop.f32.mrf.mxu0
  %v4121 = vadd.f32 %v4102, %v4120
  %v4122 = vpop.f32.mrf.mxu0
  %v4123 = vadd.f32 %v4104, %v4122
  %4124 = vmatmul.bf16.gmra.mxu0 %v3699
  %v4125 = vpop.f32.mrf.mxu0
  %v4126 = vadd.f32 %v4107, %v4125
  %v4127 = vpop.f32.mrf.mxu0
  %v4128 = vadd.f32 %v4109, %v4127
  %4129 = vdwg.mxu0
  %4130 = vmatpush.bf16.msra.mxu0 0
  %4131 = vmatpush.bf16.msra.mxu0 0
  %4132 = vmatpush.bf16.msra.mxu0 0
  %4133 = vmatpush.bf16.msra.mxu0 0
  %4134 = vmatpush.bf16.msra.mxu0 0
  %4135 = vmatpush.bf16.msra.mxu0 0
  %4136 = vmatpush.bf16.msra.mxu0 %v3954
  %4137 = vmatpush.bf16.msra.mxu0 %v3950
  %4138 = vmatmul.bf16.gmra.mxu0 %v4030
  %v4139 = vpop.f32.mrf.mxu0
  %v4140 = vadd.f32 %v4121, %v4139
  %v4141 = vpop.f32.mrf.mxu0
  %v4142 = vadd.f32 %v4123, %v4141
  %4143 = vmatmul.bf16.gmra.mxu0 %v4033
  %v4144 = vpop.f32.mrf.mxu0
  %v4145 = vadd.f32 %v4126, %v4144
  %v4146 = vpop.f32.mrf.mxu0
  %v4147 = vadd.f32 %v4128, %v4146
  %4148 = vdwg.mxu0
  %4149 = vmatpush.bf16.msra.mxu0 %v3915
  %4150 = vmatpush.bf16.msra.mxu0 %v3911
  %4151 = vmatpush.bf16.msra.mxu0 %v3907
  %4152 = vmatpush.bf16.msra.mxu0 %v3903
  %4153 = vmatpush.bf16.msra.mxu0 %v3899
  %4154 = vmatpush.bf16.msra.mxu0 %v3895
  %4155 = vmatpush.bf16.msra.mxu0 %v3891
  %4156 = vmatpush.bf16.msra.mxu0 %v3887
  %4157 = vmatmul.bf16.gmra.mxu0 %v3695
  %v4158 = vpop.f32.mrf.mxu0
  %v4159 = vadd.f32 0.0, %v4158
  %v4160 = vpop.f32.mrf.mxu0
  %v4161 = vadd.f32 0.0, %v4160
  %4162 = vmatmul.bf16.gmra.mxu0 %v3698
  %v4163 = vpop.f32.mrf.mxu0
  %v4164 = vadd.f32 0.0, %v4163
  %v4165 = vpop.f32.mrf.mxu0
  %v4166 = vadd.f32 0.0, %v4165
  %4167 = vdwg.mxu0
  %4168 = vmatpush.bf16.msra.mxu0 %v3947
  %4169 = vmatpush.bf16.msra.mxu0 %v3943
  %4170 = vmatpush.bf16.msra.mxu0 %v3939
  %4171 = vmatpush.bf16.msra.mxu0 %v3935
  %4172 = vmatpush.bf16.msra.mxu0 %v3931
  %4173 = vmatpush.bf16.msra.mxu0 %v3927
  %4174 = vmatpush.bf16.msra.mxu0 %v3923
  %4175 = vmatpush.bf16.msra.mxu0 %v3919
  %4176 = vmatmul.bf16.gmra.mxu0 %v3696
  %v4177 = vpop.f32.mrf.mxu0
  %v4178 = vadd.f32 %v4159, %v4177
  %v4179 = vpop.f32.mrf.mxu0
  %v4180 = vadd.f32 %v4161, %v4179
  %4181 = vmatmul.bf16.gmra.mxu0 %v3699
  %v4182 = vpop.f32.mrf.mxu0
  %v4183 = vadd.f32 %v4164, %v4182
  %v4184 = vpop.f32.mrf.mxu0
  %v4185 = vadd.f32 %v4166, %v4184
  %4186 = vdwg.mxu0
  %4187 = vmatpush.bf16.msra.mxu0 0
  %4188 = vmatpush.bf16.msra.mxu0 0
  %4189 = vmatpush.bf16.msra.mxu0 0
  %4190 = vmatpush.bf16.msra.mxu0 0
  %4191 = vmatpush.bf16.msra.mxu0 0
  %4192 = vmatpush.bf16.msra.mxu0 0
  %4193 = vmatpush.bf16.msra.mxu0 %v3955
  %4194 = vmatpush.bf16.msra.mxu0 %v3951
  %4195 = vmatmul.bf16.gmra.mxu0 %v4030
  %v4196 = vpop.f32.mrf.mxu0
  %v4197 = vadd.f32 %v4178, %v4196
  %v4198 = vpop.f32.mrf.mxu0
  %v4199 = vadd.f32 %v4180, %v4198
  %4200 = vmatmul.bf16.gmra.mxu0 %v4033
  %v4201 = vpop.f32.mrf.mxu0
  %v4202 = vadd.f32 %v4183, %v4201
  %v4203 = vpop.f32.mrf.mxu0
  %v4204 = vadd.f32 %v4185, %v4203
  %4205 = vdwg.mxu0
  %4206 = vmatpush.bf16.msra.mxu0 %v3916
  %4207 = vmatpush.bf16.msra.mxu0 %v3912
  %4208 = vmatpush.bf16.msra.mxu0 %v3908
  %4209 = vmatpush.bf16.msra.mxu0 %v3904
  %4210 = vmatpush.bf16.msra.mxu0 %v3900
  %4211 = vmatpush.bf16.msra.mxu0 %v3896
  %4212 = vmatpush.bf16.msra.mxu0 %v3892
  %4213 = vmatpush.bf16.msra.mxu0 %v3888
  %4214 = vmatmul.bf16.gmra.mxu0 %v3695
  %v4215 = vpop.f32.mrf.mxu0
  %v4216 = vadd.f32 0.0, %v4215
  %v4217 = vpop.f32.mrf.mxu0
  %v4218 = vadd.f32 0.0, %v4217
  %4219 = vmatmul.bf16.gmra.mxu0 %v3698
  %v4220 = vpop.f32.mrf.mxu0
  %v4221 = vadd.f32 0.0, %v4220
  %v4222 = vpop.f32.mrf.mxu0
  %v4223 = vadd.f32 0.0, %v4222
  %4224 = vdwg.mxu0
  %4225 = vmatpush.bf16.msra.mxu0 %v3948
  %4226 = vmatpush.bf16.msra.mxu0 %v3944
  %4227 = vmatpush.bf16.msra.mxu0 %v3940
  %4228 = vmatpush.bf16.msra.mxu0 %v3936
  %4229 = vmatpush.bf16.msra.mxu0 %v3932
  %4230 = vmatpush.bf16.msra.mxu0 %v3928
  %4231 = vmatpush.bf16.msra.mxu0 %v3924
  %4232 = vmatpush.bf16.msra.mxu0 %v3920
  %4233 = vmatmul.bf16.gmra.mxu0 %v3696
  %v4234 = vpop.f32.mrf.mxu0
  %v4235 = vadd.f32 %v4216, %v4234
  %v4236 = vpop.f32.mrf.mxu0
  %v4237 = vadd.f32 %v4218, %v4236
  %4238 = vmatmul.bf16.gmra.mxu0 %v3699
  %v4239 = vpop.f32.mrf.mxu0
  %v4240 = vadd.f32 %v4221, %v4239
  %v4241 = vpop.f32.mrf.mxu0
  %v4242 = vadd.f32 %v4223, %v4241
  %4243 = vdwg.mxu0
  %4244 = vmatpush.bf16.msra.mxu0 0
  %4245 = vmatpush.bf16.msra.mxu0 0
  %4246 = vmatpush.bf16.msra.mxu0 0
  %4247 = vmatpush.bf16.msra.mxu0 0
  %4248 = vmatpush.bf16.msra.mxu0 0
  %4249 = vmatpush.bf16.msra.mxu0 0
  %4250 = vmatpush.bf16.msra.mxu0 %v3956
  %4251 = vmatpush.bf16.msra.mxu0 %v3952
  %4252 = vmatmul.bf16.gmra.mxu0 %v4030
  %v4253 = vpop.f32.mrf.mxu0
  %v4254 = vadd.f32 %v4235, %v4253
  %v4255 = vpop.f32.mrf.mxu0
  %v4256 = vadd.f32 %v4237, %v4255
  %4257 = vmatmul.bf16.gmra.mxu0 %v4033
  %v4258 = vpop.f32.mrf.mxu0
  %v4259 = vadd.f32 %v4240, %v4258
  %v4260 = vpop.f32.mrf.mxu0
  %v4261 = vadd.f32 %v4242, %v4260
  %4262 = vdwg.mxu0
  %v4263 = vadd.f32 %v4083, %v4140
  %v4264 = vadd.f32 %v4263, %v4197
  %v4265 = vadd.f32 %v4264, %v4254
  %4266 = vadd.xlane.f32.xlu0 %v4265
  %v4267 = vpop.xlane.xlu0 %4266
  %v4268 = vadd.f32 %v4085, %v4142
  %v4269 = vadd.f32 %v4268, %v4199
  %v4270 = vadd.f32 %v4269, %v4256
  %4271 = vadd.xlane.f32.xlu0 %v4270
  %v4272 = vpop.xlane.xlu0 %4271
  %v4273 = vadd.f32 %v4088, %v4145
  %v4274 = vadd.f32 %v4273, %v4202
  %v4275 = vadd.f32 %v4274, %v4259
  %4276 = vadd.xlane.f32.xlu0 %v4275
  %v4277 = vpop.xlane.xlu0 %4276
  %v4278 = vadd.f32 %v4090, %v4147
  %v4279 = vadd.f32 %v4278, %v4204
  %v4280 = vadd.f32 %v4279, %v4261
  %4281 = vadd.xlane.f32.xlu0 %v4280
  %v4282 = vpop.xlane.xlu0 %4281
  %v4283 = vmul.f32 %v4267, 0.001953125
  %v4284 = vmul.f32 %v4272, 0.001953125
  %v4285 = vmul.f32 %v4277, 0.001953125
  %v4286 = vmul.f32 %v4282, 0.001953125
  %v4287 = vmul.f32 %v4083, %v4083
  %v4288 = vmul.f32 %v4140, %v4140
  %v4289 = vmul.f32 %v4197, %v4197
  %v4290 = vmul.f32 %v4254, %v4254
  %v4291 = vmul.f32 %v4085, %v4085
  %v4292 = vmul.f32 %v4142, %v4142
  %v4293 = vmul.f32 %v4199, %v4199
  %v4294 = vmul.f32 %v4256, %v4256
  %v4295 = vmul.f32 %v4088, %v4088
  %v4296 = vmul.f32 %v4145, %v4145
  %v4297 = vmul.f32 %v4202, %v4202
  %v4298 = vmul.f32 %v4259, %v4259
  %v4299 = vmul.f32 %v4090, %v4090
  %v4300 = vmul.f32 %v4147, %v4147
  %v4301 = vmul.f32 %v4204, %v4204
  %v4302 = vmul.f32 %v4261, %v4261
  %v4303 = vadd.f32 %v4287, %v4288
  %v4304 = vadd.f32 %v4303, %v4289
  %v4305 = vadd.f32 %v4304, %v4290
  %4306 = vadd.xlane.f32.xlu0 %v4305
  %v4307 = vpop.xlane.xlu0 %4306
  %v4308 = vadd.f32 %v4291, %v4292
  %v4309 = vadd.f32 %v4308, %v4293
  %v4310 = vadd.f32 %v4309, %v4294
  %4311 = vadd.xlane.f32.xlu0 %v4310
  %v4312 = vpop.xlane.xlu0 %4311
  %v4313 = vadd.f32 %v4295, %v4296
  %v4314 = vadd.f32 %v4313, %v4297
  %v4315 = vadd.f32 %v4314, %v4298
  %4316 = vadd.xlane.f32.xlu0 %v4315
  %v4317 = vpop.xlane.xlu0 %4316
  %v4318 = vadd.f32 %v4299, %v4300
  %v4319 = vadd.f32 %v4318, %v4301
  %v4320 = vadd.f32 %v4319, %v4302
  %4321 = vadd.xlane.f32.xlu0 %v4320
  %v4322 = vpop.xlane.xlu0 %4321
  %v4323 = vmul.f32 %v4307, 0.001953125
  %v4324 = vmul.f32 %v4312, 0.001953125
  %v4325 = vmul.f32 %v4317, 0.001953125
  %v4326 = vmul.f32 %v4322, 0.001953125
  %v4327 = vmul.f32 %v4283, %v4283
  %v4328 = vmul.f32 %v4284, %v4284
  %v4329 = vmul.f32 %v4285, %v4285
  %v4330 = vmul.f32 %v4286, %v4286
  %v4331 = vsub.f32 %v4323, %v4327
  %v4332 = vsub.f32 %v4324, %v4328
  %v4333 = vsub.f32 %v4325, %v4329
  %v4334 = vsub.f32 %v4326, %v4330
  %s4335 = scalar_lea.vmem %s4, 32
  %v4336 = vld [vmem:[%s4335] sm:$0xff]
  %v4337 = vld [vmem:[%s4335 + $0x8] sm:$0xff]
  %v4338 = vld [vmem:[%s4335 + $0x10] sm:$0xff]
  %v4339 = vld [vmem:[%s4335 + $0x18] sm:$0xff]
  %v4340 = vadd.f32 %v4331, 1e-05
  %v4341 = vadd.f32 %v4332, 1e-05
  %v4342 = vadd.f32 %v4333, 1e-05
  %v4343 = vadd.f32 %v4334, 1e-05
  %v4344 = vrsqrt.pop %v4340
  %v4345 = vmul.f32 %v4344, %v4340
  %v4346 = vmul.f32 %v4345, %v4344
  %v4347 = vmul.f32 0.5, %v4346
  %v4348 = vsub.f32 1.5, %v4347
  %v4349 = vmul.f32 %v4344, %v4348
  %vm4350 = vweird.f32 %v4340
  %vm4351 = vweird.f32 %v4344
  %vm4352 = vmor %vm4350, %vm4351
  %v4353 = vsel %vm4352, %v4344, %v4349
  %v4354 = vrsqrt.pop %v4341
  %v4355 = vmul.f32 %v4354, %v4341
  %v4356 = vmul.f32 %v4355, %v4354
  %v4357 = vmul.f32 0.5, %v4356
  %v4358 = vsub.f32 1.5, %v4357
  %v4359 = vmul.f32 %v4354, %v4358
  %vm4360 = vweird.f32 %v4341
  %vm4361 = vweird.f32 %v4354
  %vm4362 = vmor %vm4360, %vm4361
  %v4363 = vsel %vm4362, %v4354, %v4359
  %v4364 = vrsqrt.pop %v4342
  %v4365 = vmul.f32 %v4364, %v4342
  %v4366 = vmul.f32 %v4365, %v4364
  %v4367 = vmul.f32 0.5, %v4366
  %v4368 = vsub.f32 1.5, %v4367
  %v4369 = vmul.f32 %v4364, %v4368
  %vm4370 = vweird.f32 %v4342
  %vm4371 = vweird.f32 %v4364
  %vm4372 = vmor %vm4370, %vm4371
  %v4373 = vsel %vm4372, %v4364, %v4369
  %v4374 = vrsqrt.pop %v4343
  %v4375 = vmul.f32 %v4374, %v4343
  %v4376 = vmul.f32 %v4375, %v4374
  %v4377 = vmul.f32 0.5, %v4376
  %v4378 = vsub.f32 1.5, %v4377
  %v4379 = vmul.f32 %v4374, %v4378
  %vm4380 = vweird.f32 %v4343
  %vm4381 = vweird.f32 %v4374
  %vm4382 = vmor %vm4380, %vm4381
  %v4383 = vsel %vm4382, %v4374, %v4379
  %v4384 = vmul.f32 %v4336, %v4353
  %v4385 = vmul.f32 %v4337, %v4363
  %v4386 = vmul.f32 %v4338, %v4373
  %v4387 = vmul.f32 %v4339, %v4383
  %4389 = vset.pattern.permute.xlu0 0
  %4390 = vperm.xlu0 %4389, %v4384
  %v4391 = vpop.permute.xlu0 %4390
  %4394 = vset.pattern.permute.xlu0 0
  %4395 = vperm.xlu0 %4394, %v4385
  %v4396 = vpop.permute.xlu0 %4395
  %4399 = vset.pattern.permute.xlu0 0
  %4400 = vperm.xlu0 %4399, %v4386
  %v4401 = vpop.permute.xlu0 %4400
  %4404 = vset.pattern.permute.xlu0 0
  %4405 = vperm.xlu0 %4404, %v4387
  %v4406 = vpop.permute.xlu0 %4405
  %v4408 = vmul.f32 %v4083, %v4391
  %v4409 = vmul.f32 %v4140, %v4391
  %v4410 = vmul.f32 %v4197, %v4391
  %v4411 = vmul.f32 %v4254, %v4391
  %v4412 = vmul.f32 %v4085, %v4396
  %v4413 = vmul.f32 %v4142, %v4396
  %v4414 = vmul.f32 %v4199, %v4396
  %v4415 = vmul.f32 %v4256, %v4396
  %v4416 = vmul.f32 %v4088, %v4401
  %v4417 = vmul.f32 %v4145, %v4401
  %v4418 = vmul.f32 %v4202, %v4401
  %v4419 = vmul.f32 %v4259, %v4401
  %v4420 = vmul.f32 %v4090, %v4406
  %v4421 = vmul.f32 %v4147, %v4406
  %v4422 = vmul.f32 %v4204, %v4406
  %v4423 = vmul.f32 %v4261, %v4406
  %v4424 = vmax.f32 %v4408, 0.0
  %v4425 = vmax.f32 %v4409, 0.0
  %v4426 = vmax.f32 %v4410, 0.0
  %v4427 = vmax.f32 %v4411, 0.0
  %v4428 = vmax.f32 %v4412, 0.0
  %v4429 = vmax.f32 %v4413, 0.0
  %v4430 = vmax.f32 %v4414, 0.0
  %v4431 = vmax.f32 %v4415, 0.0
  %v4432 = vmax.f32 %v4416, 0.0
  %v4433 = vmax.f32 %v4417, 0.0
  %v4434 = vmax.f32 %v4418, 0.0
  %v4435 = vmax.f32 %v4419, 0.0
  %v4436 = vmax.f32 %v4420, 0.0
  %v4437 = vmax.f32 %v4421, 0.0
  %v4438 = vmax.f32 %v4422, 0.0
  %v4439 = vmax.f32 %v4423, 0.0
  %v4440 = vpack.c.bf16 %v4425, %v4424
  %v4441 = vpack.c.bf16 %v4427, %v4426
  %v4442 = vpack.c.bf16 %v4429, %v4428
  %v4443 = vpack.c.bf16 %v4431, %v4430
  %v4444 = vpack.c.bf16 %v4433, %v4432
  %v4445 = vpack.c.bf16 %v4435, %v4434
  %v4446 = vpack.c.bf16 %v4437, %v4436
  %v4447 = vpack.c.bf16 %v4439, %v4438
  %v4448 = vld [vmem:[%s5] sm:$0x3f]
  %v4457 = vunpack.c.l.b16 %v4440
  %v4458 = vunpack.c.h.b16 %v4440
  %v4459 = vunpack.c.l.b16 %v4441
  %v4460 = vunpack.c.h.b16 %v4441
  %v4461 = vunpack.c.l.b16 %v4442
  %v4462 = vunpack.c.h.b16 %v4442
  %v4463 = vunpack.c.l.b16 %v4443
  %v4464 = vunpack.c.h.b16 %v4443
  %v4465 = vunpack.c.l.b16 %v4444
  %v4466 = vunpack.c.h.b16 %v4444
  %v4467 = vunpack.c.l.b16 %v4445
  %v4468 = vunpack.c.h.b16 %v4445
  %v4469 = vunpack.c.l.b16 %v4446
  %v4470 = vunpack.c.h.b16 %v4446
  %v4471 = vunpack.c.l.b16 %v4447
  %v4472 = vunpack.c.h.b16 %v4447
  %v4473 = vpack.c.b16 %v4461, %v4457
  %v4474 = vpack.c.b16 %v4462, %v4458
  %v4475 = vpack.c.b16 %v4463, %v4459
  %v4476 = vpack.c.b16 %v4464, %v4460
  %v4477 = vpack.c.b16 %v4469, %v4465
  %v4478 = vpack.c.b16 %v4470, %v4466
  %v4479 = vpack.c.b16 %v4471, %v4467
  %v4480 = vpack.c.b16 %v4472, %v4468
  %v4489 = vunpack.c.l.bf16 %v4473
  %v4490 = vunpack.c.l.bf16 %v4474
  %v4491 = vunpack.c.l.bf16 %v4475
  %v4492 = vunpack.c.l.bf16 %v4476
  %v4493 = vunpack.c.h.bf16 %v4473
  %v4494 = vunpack.c.h.bf16 %v4474
  %v4495 = vunpack.c.h.bf16 %v4475
  %v4496 = vunpack.c.h.bf16 %v4476
  %v4497 = vunpack.c.l.bf16 %v4477
  %v4498 = vunpack.c.l.bf16 %v4478
  %v4499 = vunpack.c.l.bf16 %v4479
  %v4500 = vunpack.c.l.bf16 %v4480
  %v4501 = vunpack.c.h.bf16 %v4477
  %v4502 = vunpack.c.h.bf16 %v4478
  %v4503 = vunpack.c.h.bf16 %v4479
  %v4504 = vunpack.c.h.bf16 %v4480
  %v4505 = vmul.f32 %v4489, %v1078
  %v4506 = vmul.f32 %v4490, %v1079
  %v4507 = vmul.f32 %v4491, %v1080
  %v4508 = vmul.f32 %v4492, %v1077
  %v4509 = vmul.f32 %v4493, %v1078
  %v4510 = vmul.f32 %v4494, %v1079
  %v4511 = vmul.f32 %v4495, %v1080
  %v4512 = vmul.f32 %v4496, %v1077
  %v4513 = vmul.f32 %v4497, %v1078
  %v4514 = vmul.f32 %v4498, %v1079
  %v4515 = vmul.f32 %v4499, %v1080
  %v4516 = vmul.f32 %v4500, %v1077
  %v4517 = vmul.f32 %v4501, %v1078
  %v4518 = vmul.f32 %v4502, %v1079
  %v4519 = vmul.f32 %v4503, %v1080
  %v4520 = vmul.f32 %v4504, %v1077
  %v4521 = vpack.c.bf16 %v4505, %v1086
  %v4522 = vpack.c.bf16 %v4507, %v4506
  %v4523 = vpack.c.bf16 %v4508, %v4508
  %v4524 = vpack.c.bf16 %v4509, %v1091
  %v4525 = vpack.c.bf16 %v4511, %v4510
  %v4526 = vpack.c.bf16 %v4512, %v4512
  %v4527 = vpack.c.bf16 %v4513, %v1086
  %v4528 = vpack.c.bf16 %v4515, %v4514
  %v4529 = vpack.c.bf16 %v4516, %v4516
  %v4530 = vpack.c.bf16 %v4517, %v1091
  %v4531 = vpack.c.bf16 %v4519, %v4518
  %v4532 = vpack.c.bf16 %v4520, %v4520
  %v4533 = vmul.f32 %v4489, %v1149
  %v4534 = vmul.f32 %v4490, %v1150
  %v4535 = vmul.f32 %v4491, %v1151
  %v4536 = vmul.f32 %v4492, %v1148
  %v4537 = vmul.f32 %v4493, %v1149
  %v4538 = vmul.f32 %v4494, %v1150
  %v4539 = vmul.f32 %v4495, %v1151
  %v4540 = vmul.f32 %v4496, %v1148
  %v4541 = vmul.f32 %v4497, %v1149
  %v4542 = vmul.f32 %v4498, %v1150
  %v4543 = vmul.f32 %v4499, %v1151
  %v4544 = vmul.f32 %v4500, %v1148
  %v4545 = vmul.f32 %v4501, %v1149
  %v4546 = vmul.f32 %v4502, %v1150
  %v4547 = vmul.f32 %v4503, %v1151
  %v4548 = vmul.f32 %v4504, %v1148
  %v4549 = vpack.c.bf16 %v4533, %v1157
  %v4550 = vpack.c.bf16 %v4535, %v4534
  %v4551 = vpack.c.bf16 %v4536, %v4536
  %v4552 = vpack.c.bf16 %v4537, %v1162
  %v4553 = vpack.c.bf16 %v4539, %v4538
  %v4554 = vpack.c.bf16 %v4540, %v4540
  %v4555 = vpack.c.bf16 %v4541, %v1157
  %v4556 = vpack.c.bf16 %v4543, %v4542
  %v4557 = vpack.c.bf16 %v4544, %v4544
  %v4558 = vpack.c.bf16 %v4545, %v1162
  %v4559 = vpack.c.bf16 %v4547, %v4546
  %v4560 = vpack.c.bf16 %v4548, %v4548
  %v4561 = vmul.f32 %v4489, %v1220
  %v4562 = vmul.f32 %v4490, %v1221
  %v4563 = vmul.f32 %v4491, %v1222
  %v4564 = vmul.f32 %v4492, %v1219
  %v4565 = vmul.f32 %v4493, %v1220
  %v4566 = vmul.f32 %v4494, %v1221
  %v4567 = vmul.f32 %v4495, %v1222
  %v4568 = vmul.f32 %v4496, %v1219
  %v4569 = vmul.f32 %v4497, %v1220
  %v4570 = vmul.f32 %v4498, %v1221
  %v4571 = vmul.f32 %v4499, %v1222
  %v4572 = vmul.f32 %v4500, %v1219
  %v4573 = vmul.f32 %v4501, %v1220
  %v4574 = vmul.f32 %v4502, %v1221
  %v4575 = vmul.f32 %v4503, %v1222
  %v4576 = vmul.f32 %v4504, %v1219
  %v4577 = vpack.c.bf16 %v4561, %v1228
  %v4578 = vpack.c.bf16 %v4563, %v4562
  %v4579 = vpack.c.bf16 %v4564, %v4564
  %v4580 = vpack.c.bf16 %v4565, %v1233
  %v4581 = vpack.c.bf16 %v4567, %v4566
  %v4582 = vpack.c.bf16 %v4568, %v4568
  %v4583 = vpack.c.bf16 %v4569, %v1228
  %v4584 = vpack.c.bf16 %v4571, %v4570
  %v4585 = vpack.c.bf16 %v4572, %v4572
  %v4586 = vpack.c.bf16 %v4573, %v1233
  %v4587 = vpack.c.bf16 %v4575, %v4574
  %v4588 = vpack.c.bf16 %v4576, %v4576
  %v4589 = vmul.f32 %v4489, %v1291
  %v4590 = vmul.f32 %v4490, %v1292
  %v4591 = vmul.f32 %v4491, %v1293
  %v4592 = vmul.f32 %v4492, %v1290
  %v4593 = vmul.f32 %v4493, %v1291
  %v4594 = vmul.f32 %v4494, %v1292
  %v4595 = vmul.f32 %v4495, %v1293
  %v4596 = vmul.f32 %v4496, %v1290
  %v4597 = vmul.f32 %v4497, %v1291
  %v4598 = vmul.f32 %v4498, %v1292
  %v4599 = vmul.f32 %v4499, %v1293
  %v4600 = vmul.f32 %v4500, %v1290
  %v4601 = vmul.f32 %v4501, %v1291
  %v4602 = vmul.f32 %v4502, %v1292
  %v4603 = vmul.f32 %v4503, %v1293
  %v4604 = vmul.f32 %v4504, %v1290
  %v4605 = vpack.c.bf16 %v4589, %v1299
  %v4606 = vpack.c.bf16 %v4591, %v4590
  %v4607 = vpack.c.bf16 %v4592, %v4592
  %v4608 = vpack.c.bf16 %v4593, %v1304
  %v4609 = vpack.c.bf16 %v4595, %v4594
  %v4610 = vpack.c.bf16 %v4596, %v4596
  %v4611 = vpack.c.bf16 %v4597, %v1299
  %v4612 = vpack.c.bf16 %v4599, %v4598
  %v4613 = vpack.c.bf16 %v4600, %v4600
  %v4614 = vpack.c.bf16 %v4601, %v1304
  %v4615 = vpack.c.bf16 %v4603, %v4602
  %v4616 = vpack.c.bf16 %v4604, %v4604
  %v4617 = vmul.f32 %v4489, %v1355
  %v4618 = vmul.f32 %v4490, %v1362
  %v4619 = vmul.f32 %v4491, %v1363
  %v4620 = vmul.f32 %v4492, %v1364
  %v4621 = vmul.f32 %v4493, %v1355
  %v4622 = vmul.f32 %v4494, %v1362
  %v4623 = vmul.f32 %v4495, %v1363
  %v4624 = vmul.f32 %v4496, %v1364
  %v4625 = vmul.f32 %v4497, %v1355
  %v4626 = vmul.f32 %v4498, %v1362
  %v4627 = vmul.f32 %v4499, %v1363
  %v4628 = vmul.f32 %v4500, %v1364
  %v4629 = vmul.f32 %v4501, %v1355
  %v4630 = vmul.f32 %v4502, %v1362
  %v4631 = vmul.f32 %v4503, %v1363
  %v4632 = vmul.f32 %v4504, %v1364
  %v4633 = vpack.c.bf16 %v4618, %v4617
  %v4634 = vpack.c.bf16 %v4620, %v4619
  %v4635 = vpack.c.bf16 %v4622, %v4621
  %v4636 = vpack.c.bf16 %v4624, %v4623
  %v4637 = vpack.c.bf16 %v4626, %v4625
  %v4638 = vpack.c.bf16 %v4628, %v4627
  %v4639 = vpack.c.bf16 %v4630, %v4629
  %v4640 = vpack.c.bf16 %v4632, %v4631
  %v4641 = vmul.f32 %v4489, %v1424
  %v4642 = vmul.f32 %v4490, %v1431
  %v4643 = vmul.f32 %v4491, %v1432
  %v4644 = vmul.f32 %v4492, %v1433
  %v4645 = vmul.f32 %v4493, %v1424
  %v4646 = vmul.f32 %v4494, %v1431
  %v4647 = vmul.f32 %v4495, %v1432
  %v4648 = vmul.f32 %v4496, %v1433
  %v4649 = vmul.f32 %v4497, %v1424
  %v4650 = vmul.f32 %v4498, %v1431
  %v4651 = vmul.f32 %v4499, %v1432
  %v4652 = vmul.f32 %v4500, %v1433
  %v4653 = vmul.f32 %v4501, %v1424
  %v4654 = vmul.f32 %v4502, %v1431
  %v4655 = vmul.f32 %v4503, %v1432
  %v4656 = vmul.f32 %v4504, %v1433
  %v4657 = vpack.c.bf16 %v4642, %v4641
  %v4658 = vpack.c.bf16 %v4644, %v4643
  %v4659 = vpack.c.bf16 %v4646, %v4645
  %v4660 = vpack.c.bf16 %v4648, %v4647
  %v4661 = vpack.c.bf16 %v4650, %v4649
  %v4662 = vpack.c.bf16 %v4652, %v4651
  %v4663 = vpack.c.bf16 %v4654, %v4653
  %v4664 = vpack.c.bf16 %v4656, %v4655
  %v4665 = vmul.f32 %v4489, %v1493
  %v4666 = vmul.f32 %v4490, %v1500
  %v4667 = vmul.f32 %v4491, %v1501
  %v4668 = vmul.f32 %v4492, %v1502
  %v4669 = vmul.f32 %v4493, %v1493
  %v4670 = vmul.f32 %v4494, %v1500
  %v4671 = vmul.f32 %v4495, %v1501
  %v4672 = vmul.f32 %v4496, %v1502
  %v4673 = vmul.f32 %v4497, %v1493
  %v4674 = vmul.f32 %v4498, %v1500
  %v4675 = vmul.f32 %v4499, %v1501
  %v4676 = vmul.f32 %v4500, %v1502
  %v4677 = vmul.f32 %v4501, %v1493
  %v4678 = vmul.f32 %v4502, %v1500
  %v4679 = vmul.f32 %v4503, %v1501
  %v4680 = vmul.f32 %v4504, %v1502
  %v4681 = vpack.c.bf16 %v4666, %v4665
  %v4682 = vpack.c.bf16 %v4668, %v4667
  %v4683 = vpack.c.bf16 %v4670, %v4669
  %v4684 = vpack.c.bf16 %v4672, %v4671
  %v4685 = vpack.c.bf16 %v4674, %v4673
  %v4686 = vpack.c.bf16 %v4676, %v4675
  %v4687 = vpack.c.bf16 %v4678, %v4677
  %v4688 = vpack.c.bf16 %v4680, %v4679
  %v4689 = vmul.f32 %v4489, %v1562
  %v4690 = vmul.f32 %v4490, %v1569
  %v4691 = vmul.f32 %v4491, %v1570
  %v4692 = vmul.f32 %v4492, %v1571
  %v4693 = vmul.f32 %v4493, %v1562
  %v4694 = vmul.f32 %v4494, %v1569
  %v4695 = vmul.f32 %v4495, %v1570
  %v4696 = vmul.f32 %v4496, %v1571
  %v4697 = vmul.f32 %v4497, %v1562
  %v4698 = vmul.f32 %v4498, %v1569
  %v4699 = vmul.f32 %v4499, %v1570
  %v4700 = vmul.f32 %v4500, %v1571
  %v4701 = vmul.f32 %v4501, %v1562
  %v4702 = vmul.f32 %v4502, %v1569
  %v4703 = vmul.f32 %v4503, %v1570
  %v4704 = vmul.f32 %v4504, %v1571
  %v4705 = vpack.c.bf16 %v4690, %v4689
  %v4706 = vpack.c.bf16 %v4692, %v4691
  %v4707 = vpack.c.bf16 %v4694, %v4693
  %v4708 = vpack.c.bf16 %v4696, %v4695
  %v4709 = vpack.c.bf16 %v4698, %v4697
  %v4710 = vpack.c.bf16 %v4700, %v4699
  %v4711 = vpack.c.bf16 %v4702, %v4701
  %v4712 = vpack.c.bf16 %v4704, %v4703
  %v4725 = vunpack.c.l.b16 %v4521
  %v4726 = vunpack.c.h.b16 %v4521
  %v4727 = vunpack.c.l.b16 %v4522
  %v4728 = vunpack.c.h.b16 %v4522
  %v4729 = vunpack.c.l.b16 %v4523
  %v4730 = vunpack.c.l.b16 %v4524
  %v4731 = vunpack.c.h.b16 %v4524
  %v4732 = vunpack.c.l.b16 %v4525
  %v4733 = vunpack.c.h.b16 %v4525
  %v4734 = vunpack.c.l.b16 %v4526
  %v4735 = vunpack.c.l.b16 %v4527
  %v4736 = vunpack.c.h.b16 %v4527
  %v4737 = vunpack.c.l.b16 %v4528
  %v4738 = vunpack.c.h.b16 %v4528
  %v4739 = vunpack.c.l.b16 %v4529
  %v4740 = vunpack.c.l.b16 %v4530
  %v4741 = vunpack.c.h.b16 %v4530
  %v4742 = vunpack.c.l.b16 %v4531
  %v4743 = vunpack.c.h.b16 %v4531
  %v4744 = vunpack.c.l.b16 %v4532
  %v4745 = vpack.c.b16 %v4730, %v4725
  %v4746 = vpack.c.b16 %v4731, %v4726
  %v4747 = vpack.c.b16 %v4732, %v4727
  %v4748 = vpack.c.b16 %v4733, %v4728
  %v4749 = vpack.c.b16 %v4734, %v4729
  %v4750 = vpack.c.b16 %v4740, %v4735
  %v4751 = vpack.c.b16 %v4741, %v4736
  %v4752 = vpack.c.b16 %v4742, %v4737
  %v4753 = vpack.c.b16 %v4743, %v4738
  %v4754 = vpack.c.b16 %v4744, %v4739
  %v4767 = vunpack.c.l.b16 %v4549
  %v4768 = vunpack.c.h.b16 %v4549
  %v4769 = vunpack.c.l.b16 %v4550
  %v4770 = vunpack.c.h.b16 %v4550
  %v4771 = vunpack.c.l.b16 %v4551
  %v4772 = vunpack.c.l.b16 %v4552
  %v4773 = vunpack.c.h.b16 %v4552
  %v4774 = vunpack.c.l.b16 %v4553
  %v4775 = vunpack.c.h.b16 %v4553
  %v4776 = vunpack.c.l.b16 %v4554
  %v4777 = vunpack.c.l.b16 %v4555
  %v4778 = vunpack.c.h.b16 %v4555
  %v4779 = vunpack.c.l.b16 %v4556
  %v4780 = vunpack.c.h.b16 %v4556
  %v4781 = vunpack.c.l.b16 %v4557
  %v4782 = vunpack.c.l.b16 %v4558
  %v4783 = vunpack.c.h.b16 %v4558
  %v4784 = vunpack.c.l.b16 %v4559
  %v4785 = vunpack.c.h.b16 %v4559
  %v4786 = vunpack.c.l.b16 %v4560
  %v4787 = vpack.c.b16 %v4772, %v4767
  %v4788 = vpack.c.b16 %v4773, %v4768
  %v4789 = vpack.c.b16 %v4774, %v4769
  %v4790 = vpack.c.b16 %v4775, %v4770
  %v4791 = vpack.c.b16 %v4776, %v4771
  %v4792 = vpack.c.b16 %v4782, %v4777
  %v4793 = vpack.c.b16 %v4783, %v4778
  %v4794 = vpack.c.b16 %v4784, %v4779
  %v4795 = vpack.c.b16 %v4785, %v4780
  %v4796 = vpack.c.b16 %v4786, %v4781
  %4797 = vrot.lane.b32.xlu0 %v4787, 127
  %v4798 = vpop.permute.xlu0 %4797
  %4799 = vrot.lane.b32.xlu0 %v4788, 127
  %v4800 = vpop.permute.xlu0 %4799
  %4801 = vrot.lane.b32.xlu0 %v4789, 127
  %v4802 = vpop.permute.xlu0 %4801
  %4803 = vrot.lane.b32.xlu0 %v4790, 127
  %v4804 = vpop.permute.xlu0 %4803
  %4805 = vrot.lane.b32.xlu0 %v4791, 127
  %v4806 = vpop.permute.xlu0 %4805
  %4807 = vrot.lane.b32.xlu0 %v4792, 127
  %v4808 = vpop.permute.xlu0 %4807
  %4809 = vrot.lane.b32.xlu0 %v4793, 127
  %v4810 = vpop.permute.xlu0 %4809
  %4811 = vrot.lane.b32.xlu0 %v4794, 127
  %v4812 = vpop.permute.xlu0 %4811
  %4813 = vrot.lane.b32.xlu0 %v4795, 127
  %v4814 = vpop.permute.xlu0 %4813
  %4815 = vrot.lane.b32.xlu0 %v4796, 127
  %v4816 = vpop.permute.xlu0 %4815
  %v4817 = vsel %vm508, %v4798, %v4800
  %v4818 = vsel %vm508, %v4800, %v4802
  %v4819 = vsel %vm508, %v4802, %v4804
  %v4820 = vsel %vm508, %v4804, %v4806
  %v4821 = vsel %vm508, %v4808, %v4810
  %v4822 = vsel %vm508, %v4810, %v4812
  %v4823 = vsel %vm508, %v4812, %v4814
  %v4824 = vsel %vm508, %v4814, %v4816
  %v4837 = vunpack.c.l.b16 %v4577
  %v4838 = vunpack.c.h.b16 %v4577
  %v4839 = vunpack.c.l.b16 %v4578
  %v4840 = vunpack.c.h.b16 %v4578
  %v4841 = vunpack.c.l.b16 %v4579
  %v4842 = vunpack.c.l.b16 %v4580
  %v4843 = vunpack.c.h.b16 %v4580
  %v4844 = vunpack.c.l.b16 %v4581
  %v4845 = vunpack.c.h.b16 %v4581
  %v4846 = vunpack.c.l.b16 %v4582
  %v4847 = vunpack.c.l.b16 %v4583
  %v4848 = vunpack.c.h.b16 %v4583
  %v4849 = vunpack.c.l.b16 %v4584
  %v4850 = vunpack.c.h.b16 %v4584
  %v4851 = vunpack.c.l.b16 %v4585
  %v4852 = vunpack.c.l.b16 %v4586
  %v4853 = vunpack.c.h.b16 %v4586
  %v4854 = vunpack.c.l.b16 %v4587
  %v4855 = vunpack.c.h.b16 %v4587
  %v4856 = vunpack.c.l.b16 %v4588
  %v4857 = vpack.c.b16 %v4842, %v4837
  %v4858 = vpack.c.b16 %v4843, %v4838
  %v4859 = vpack.c.b16 %v4844, %v4839
  %v4860 = vpack.c.b16 %v4845, %v4840
  %v4861 = vpack.c.b16 %v4846, %v4841
  %v4862 = vpack.c.b16 %v4852, %v4847
  %v4863 = vpack.c.b16 %v4853, %v4848
  %v4864 = vpack.c.b16 %v4854, %v4849
  %v4865 = vpack.c.b16 %v4855, %v4850
  %v4866 = vpack.c.b16 %v4856, %v4851
  %4867 = vrot.lane.b32.xlu0 %v4857, 126
  %v4868 = vpop.permute.xlu0 %4867
  %4869 = vrot.lane.b32.xlu0 %v4858, 126
  %v4870 = vpop.permute.xlu0 %4869
  %4871 = vrot.lane.b32.xlu0 %v4859, 126
  %v4872 = vpop.permute.xlu0 %4871
  %4873 = vrot.lane.b32.xlu0 %v4860, 126
  %v4874 = vpop.permute.xlu0 %4873
  %4875 = vrot.lane.b32.xlu0 %v4861, 126
  %v4876 = vpop.permute.xlu0 %4875
  %4877 = vrot.lane.b32.xlu0 %v4862, 126
  %v4878 = vpop.permute.xlu0 %4877
  %4879 = vrot.lane.b32.xlu0 %v4863, 126
  %v4880 = vpop.permute.xlu0 %4879
  %4881 = vrot.lane.b32.xlu0 %v4864, 126
  %v4882 = vpop.permute.xlu0 %4881
  %4883 = vrot.lane.b32.xlu0 %v4865, 126
  %v4884 = vpop.permute.xlu0 %4883
  %4885 = vrot.lane.b32.xlu0 %v4866, 126
  %v4886 = vpop.permute.xlu0 %4885
  %v4887 = vsel %vm536, %v4868, %v4870
  %v4888 = vsel %vm536, %v4870, %v4872
  %v4889 = vsel %vm536, %v4872, %v4874
  %v4890 = vsel %vm536, %v4874, %v4876
  %v4891 = vsel %vm536, %v4878, %v4880
  %v4892 = vsel %vm536, %v4880, %v4882
  %v4893 = vsel %vm536, %v4882, %v4884
  %v4894 = vsel %vm536, %v4884, %v4886
  %v4907 = vunpack.c.l.b16 %v4605
  %v4908 = vunpack.c.h.b16 %v4605
  %v4909 = vunpack.c.l.b16 %v4606
  %v4910 = vunpack.c.h.b16 %v4606
  %v4911 = vunpack.c.l.b16 %v4607
  %v4912 = vunpack.c.l.b16 %v4608
  %v4913 = vunpack.c.h.b16 %v4608
  %v4914 = vunpack.c.l.b16 %v4609
  %v4915 = vunpack.c.h.b16 %v4609
  %v4916 = vunpack.c.l.b16 %v4610
  %v4917 = vunpack.c.l.b16 %v4611
  %v4918 = vunpack.c.h.b16 %v4611
  %v4919 = vunpack.c.l.b16 %v4612
  %v4920 = vunpack.c.h.b16 %v4612
  %v4921 = vunpack.c.l.b16 %v4613
  %v4922 = vunpack.c.l.b16 %v4614
  %v4923 = vunpack.c.h.b16 %v4614
  %v4924 = vunpack.c.l.b16 %v4615
  %v4925 = vunpack.c.h.b16 %v4615
  %v4926 = vunpack.c.l.b16 %v4616
  %v4927 = vpack.c.b16 %v4912, %v4907
  %v4928 = vpack.c.b16 %v4913, %v4908
  %v4929 = vpack.c.b16 %v4914, %v4909
  %v4930 = vpack.c.b16 %v4915, %v4910
  %v4931 = vpack.c.b16 %v4916, %v4911
  %v4932 = vpack.c.b16 %v4922, %v4917
  %v4933 = vpack.c.b16 %v4923, %v4918
  %v4934 = vpack.c.b16 %v4924, %v4919
  %v4935 = vpack.c.b16 %v4925, %v4920
  %v4936 = vpack.c.b16 %v4926, %v4921
  %4937 = vrot.lane.b32.xlu0 %v4927, 112
  %v4938 = vpop.permute.xlu0 %4937
  %4939 = vrot.lane.b32.xlu0 %v4928, 112
  %v4940 = vpop.permute.xlu0 %4939
  %4941 = vrot.lane.b32.xlu0 %v4929, 112
  %v4942 = vpop.permute.xlu0 %4941
  %4943 = vrot.lane.b32.xlu0 %v4930, 112
  %v4944 = vpop.permute.xlu0 %4943
  %4945 = vrot.lane.b32.xlu0 %v4931, 112
  %v4946 = vpop.permute.xlu0 %4945
  %4947 = vrot.lane.b32.xlu0 %v4932, 112
  %v4948 = vpop.permute.xlu0 %4947
  %4949 = vrot.lane.b32.xlu0 %v4933, 112
  %v4950 = vpop.permute.xlu0 %4949
  %4951 = vrot.lane.b32.xlu0 %v4934, 112
  %v4952 = vpop.permute.xlu0 %4951
  %4953 = vrot.lane.b32.xlu0 %v4935, 112
  %v4954 = vpop.permute.xlu0 %4953
  %4955 = vrot.lane.b32.xlu0 %v4936, 112
  %v4956 = vpop.permute.xlu0 %4955
  %v4957 = vsel %vm569, %v4938, %v4940
  %v4958 = vsel %vm569, %v4940, %v4942
  %v4959 = vsel %vm569, %v4942, %v4944
  %v4960 = vsel %vm569, %v4944, %v4946
  %v4961 = vsel %vm569, %v4948, %v4950
  %v4962 = vsel %vm569, %v4950, %v4952
  %v4963 = vsel %vm569, %v4952, %v4954
  %v4964 = vsel %vm569, %v4954, %v4956
  %4965 = vrot.lane.b32.xlu0 %v4473, 111
  %v4966 = vpop.permute.xlu0 %4965
  %4967 = vrot.lane.b32.xlu0 %v4474, 111
  %v4968 = vpop.permute.xlu0 %4967
  %4969 = vrot.lane.b32.xlu0 %v4475, 111
  %v4970 = vpop.permute.xlu0 %4969
  %4971 = vrot.lane.b32.xlu0 %v4476, 111
  %v4972 = vpop.permute.xlu0 %4971
  %4973 = vrot.lane.b32.xlu0 %v4477, 111
  %v4974 = vpop.permute.xlu0 %4973
  %4975 = vrot.lane.b32.xlu0 %v4478, 111
  %v4976 = vpop.permute.xlu0 %4975
  %4977 = vrot.lane.b32.xlu0 %v4479, 111
  %v4978 = vpop.permute.xlu0 %4977
  %4979 = vrot.lane.b32.xlu0 %v4480, 111
  %v4980 = vpop.permute.xlu0 %4979
  %v4981 = vsel %vm591, %v4966, %v4968
  %v4982 = vsel %vm591, %v4968, %v4970
  %v4983 = vsel %vm591, %v4970, %v4972
  %v4984 = vsel %vm591, %v4974, %v4976
  %v4985 = vsel %vm591, %v4976, %v4978
  %v4986 = vsel %vm591, %v4978, %v4980
  %v4995 = vunpack.c.l.b16 %v4633
  %v4996 = vunpack.c.h.b16 %v4633
  %v4997 = vunpack.c.l.b16 %v4634
  %v4998 = vunpack.c.h.b16 %v4634
  %v4999 = vunpack.c.l.b16 %v4635
  %v5000 = vunpack.c.h.b16 %v4635
  %v5001 = vunpack.c.l.b16 %v4636
  %v5002 = vunpack.c.h.b16 %v4636
  %v5003 = vunpack.c.l.b16 %v4637
  %v5004 = vunpack.c.h.b16 %v4637
  %v5005 = vunpack.c.l.b16 %v4638
  %v5006 = vunpack.c.h.b16 %v4638
  %v5007 = vunpack.c.l.b16 %v4639
  %v5008 = vunpack.c.h.b16 %v4639
  %v5009 = vunpack.c.l.b16 %v4640
  %v5010 = vunpack.c.h.b16 %v4640
  %v5011 = vpack.c.b16 %v4999, %v4995
  %v5012 = vpack.c.b16 %v5000, %v4996
  %v5013 = vpack.c.b16 %v5001, %v4997
  %v5014 = vpack.c.b16 %v5002, %v4998
  %v5015 = vpack.c.b16 %v5007, %v5003
  %v5016 = vpack.c.b16 %v5008, %v5004
  %v5017 = vpack.c.b16 %v5009, %v5005
  %v5018 = vpack.c.b16 %v5010, %v5006
  %5019 = vrot.lane.b32.xlu0 %v5011, 110
  %v5020 = vpop.permute.xlu0 %5019
  %5021 = vrot.lane.b32.xlu0 %v5012, 110
  %v5022 = vpop.permute.xlu0 %5021
  %5023 = vrot.lane.b32.xlu0 %v5013, 110
  %v5024 = vpop.permute.xlu0 %5023
  %5025 = vrot.lane.b32.xlu0 %v5014, 110
  %v5026 = vpop.permute.xlu0 %5025
  %5027 = vrot.lane.b32.xlu0 %v5015, 110
  %v5028 = vpop.permute.xlu0 %5027
  %5029 = vrot.lane.b32.xlu0 %v5016, 110
  %v5030 = vpop.permute.xlu0 %5029
  %5031 = vrot.lane.b32.xlu0 %v5017, 110
  %v5032 = vpop.permute.xlu0 %5031
  %5033 = vrot.lane.b32.xlu0 %v5018, 110
  %v5034 = vpop.permute.xlu0 %5033
  %v5035 = vsel %vm623, %v5020, %v5022
  %v5036 = vsel %vm623, %v5022, %v5024
  %v5037 = vsel %vm623, %v5024, %v5026
  %v5038 = vsel %vm623, %v5026, %v1925
  %v5039 = vsel %vm623, %v5028, %v5030
  %v5040 = vsel %vm623, %v5030, %v5032
  %v5041 = vsel %vm623, %v5032, %v5034
  %v5042 = vsel %vm623, %v5034, %v1925
  %v5051 = vunpack.c.l.b16 %v4657
  %v5052 = vunpack.c.h.b16 %v4657
  %v5053 = vunpack.c.l.b16 %v4658
  %v5054 = vunpack.c.h.b16 %v4658
  %v5055 = vunpack.c.l.b16 %v4659
  %v5056 = vunpack.c.h.b16 %v4659
  %v5057 = vunpack.c.l.b16 %v4660
  %v5058 = vunpack.c.h.b16 %v4660
  %v5059 = vunpack.c.l.b16 %v4661
  %v5060 = vunpack.c.h.b16 %v4661
  %v5061 = vunpack.c.l.b16 %v4662
  %v5062 = vunpack.c.h.b16 %v4662
  %v5063 = vunpack.c.l.b16 %v4663
  %v5064 = vunpack.c.h.b16 %v4663
  %v5065 = vunpack.c.l.b16 %v4664
  %v5066 = vunpack.c.h.b16 %v4664
  %v5067 = vpack.c.b16 %v5055, %v5051
  %v5068 = vpack.c.b16 %v5056, %v5052
  %v5069 = vpack.c.b16 %v5057, %v5053
  %v5070 = vpack.c.b16 %v5058, %v5054
  %v5071 = vpack.c.b16 %v5063, %v5059
  %v5072 = vpack.c.b16 %v5064, %v5060
  %v5073 = vpack.c.b16 %v5065, %v5061
  %v5074 = vpack.c.b16 %v5066, %v5062
  %5075 = vrot.lane.b32.xlu0 %v5067, 96
  %v5076 = vpop.permute.xlu0 %5075
  %5077 = vrot.lane.b32.xlu0 %v5068, 96
  %v5078 = vpop.permute.xlu0 %5077
  %5079 = vrot.lane.b32.xlu0 %v5069, 96
  %v5080 = vpop.permute.xlu0 %5079
  %5081 = vrot.lane.b32.xlu0 %v5070, 96
  %v5082 = vpop.permute.xlu0 %5081
  %5083 = vrot.lane.b32.xlu0 %v5071, 96
  %v5084 = vpop.permute.xlu0 %5083
  %5085 = vrot.lane.b32.xlu0 %v5072, 96
  %v5086 = vpop.permute.xlu0 %5085
  %5087 = vrot.lane.b32.xlu0 %v5073, 96
  %v5088 = vpop.permute.xlu0 %5087
  %5089 = vrot.lane.b32.xlu0 %v5074, 96
  %v5090 = vpop.permute.xlu0 %5089
  %v5091 = vsel %vm651, %v5076, %v5078
  %v5092 = vsel %vm651, %v5078, %v5080
  %v5093 = vsel %vm651, %v5080, %v5082
  %v5094 = vsel %vm651, %v5082, %v1988
  %v5095 = vsel %vm651, %v5084, %v5086
  %v5096 = vsel %vm651, %v5086, %v5088
  %v5097 = vsel %vm651, %v5088, %v5090
  %v5098 = vsel %vm651, %v5090, %v1988
  %v5107 = vunpack.c.l.b16 %v4681
  %v5108 = vunpack.c.h.b16 %v4681
  %v5109 = vunpack.c.l.b16 %v4682
  %v5110 = vunpack.c.h.b16 %v4682
  %v5111 = vunpack.c.l.b16 %v4683
  %v5112 = vunpack.c.h.b16 %v4683
  %v5113 = vunpack.c.l.b16 %v4684
  %v5114 = vunpack.c.h.b16 %v4684
  %v5115 = vunpack.c.l.b16 %v4685
  %v5116 = vunpack.c.h.b16 %v4685
  %v5117 = vunpack.c.l.b16 %v4686
  %v5118 = vunpack.c.h.b16 %v4686
  %v5119 = vunpack.c.l.b16 %v4687
  %v5120 = vunpack.c.h.b16 %v4687
  %v5121 = vunpack.c.l.b16 %v4688
  %v5122 = vunpack.c.h.b16 %v4688
  %v5123 = vpack.c.b16 %v5111, %v5107
  %v5124 = vpack.c.b16 %v5112, %v5108
  %v5125 = vpack.c.b16 %v5113, %v5109
  %v5126 = vpack.c.b16 %v5114, %v5110
  %v5127 = vpack.c.b16 %v5119, %v5115
  %v5128 = vpack.c.b16 %v5120, %v5116
  %v5129 = vpack.c.b16 %v5121, %v5117
  %v5130 = vpack.c.b16 %v5122, %v5118
  %5131 = vrot.lane.b32.xlu0 %v5123, 95
  %v5132 = vpop.permute.xlu0 %5131
  %5133 = vrot.lane.b32.xlu0 %v5124, 95
  %v5134 = vpop.permute.xlu0 %5133
  %5135 = vrot.lane.b32.xlu0 %v5125, 95
  %v5136 = vpop.permute.xlu0 %5135
  %5137 = vrot.lane.b32.xlu0 %v5126, 95
  %v5138 = vpop.permute.xlu0 %5137
  %5139 = vrot.lane.b32.xlu0 %v5127, 95
  %v5140 = vpop.permute.xlu0 %5139
  %5141 = vrot.lane.b32.xlu0 %v5128, 95
  %v5142 = vpop.permute.xlu0 %5141
  %5143 = vrot.lane.b32.xlu0 %v5129, 95
  %v5144 = vpop.permute.xlu0 %5143
  %5145 = vrot.lane.b32.xlu0 %v5130, 95
  %v5146 = vpop.permute.xlu0 %5145
  %v5147 = vsel %vm684, %v5132, %v5134
  %v5148 = vsel %vm684, %v5134, %v5136
  %v5149 = vsel %vm684, %v5136, %v5138
  %v5150 = vsel %vm684, %v5138, %v2051
  %v5151 = vsel %vm684, %v5140, %v5142
  %v5152 = vsel %vm684, %v5142, %v5144
  %v5153 = vsel %vm684, %v5144, %v5146
  %v5154 = vsel %vm684, %v5146, %v2051
  %v5163 = vunpack.c.l.b16 %v4705
  %v5164 = vunpack.c.h.b16 %v4705
  %v5165 = vunpack.c.l.b16 %v4706
  %v5166 = vunpack.c.h.b16 %v4706
  %v5167 = vunpack.c.l.b16 %v4707
  %v5168 = vunpack.c.h.b16 %v4707
  %v5169 = vunpack.c.l.b16 %v4708
  %v5170 = vunpack.c.h.b16 %v4708
  %v5171 = vunpack.c.l.b16 %v4709
  %v5172 = vunpack.c.h.b16 %v4709
  %v5173 = vunpack.c.l.b16 %v4710
  %v5174 = vunpack.c.h.b16 %v4710
  %v5175 = vunpack.c.l.b16 %v4711
  %v5176 = vunpack.c.h.b16 %v4711
  %v5177 = vunpack.c.l.b16 %v4712
  %v5178 = vunpack.c.h.b16 %v4712
  %v5179 = vpack.c.b16 %v5167, %v5163
  %v5180 = vpack.c.b16 %v5168, %v5164
  %v5181 = vpack.c.b16 %v5169, %v5165
  %v5182 = vpack.c.b16 %v5170, %v5166
  %v5183 = vpack.c.b16 %v5175, %v5171
  %v5184 = vpack.c.b16 %v5176, %v5172
  %v5185 = vpack.c.b16 %v5177, %v5173
  %v5186 = vpack.c.b16 %v5178, %v5174
  %5187 = vrot.lane.b32.xlu0 %v5179, 94
  %v5188 = vpop.permute.xlu0 %5187
  %5189 = vrot.lane.b32.xlu0 %v5180, 94
  %v5190 = vpop.permute.xlu0 %5189
  %5191 = vrot.lane.b32.xlu0 %v5181, 94
  %v5192 = vpop.permute.xlu0 %5191
  %5193 = vrot.lane.b32.xlu0 %v5182, 94
  %v5194 = vpop.permute.xlu0 %5193
  %5195 = vrot.lane.b32.xlu0 %v5183, 94
  %v5196 = vpop.permute.xlu0 %5195
  %5197 = vrot.lane.b32.xlu0 %v5184, 94
  %v5198 = vpop.permute.xlu0 %5197
  %5199 = vrot.lane.b32.xlu0 %v5185, 94
  %v5200 = vpop.permute.xlu0 %5199
  %5201 = vrot.lane.b32.xlu0 %v5186, 94
  %v5202 = vpop.permute.xlu0 %5201
  %v5203 = vsel %vm712, %v5188, %v5190
  %v5204 = vsel %vm712, %v5190, %v5192
  %v5205 = vsel %vm712, %v5192, %v5194
  %v5206 = vsel %vm712, %v5194, %v2114
  %v5207 = vsel %vm712, %v5196, %v5198
  %v5208 = vsel %vm712, %v5198, %v5200
  %v5209 = vsel %vm712, %v5200, %v5202
  %v5210 = vsel %vm712, %v5202, %v2114
  %5212 = vst [vmem:[#allocation1] ss:$4 sm:$0xff] %v4448
  %v5213 = vld.sshfl [vmem:[#allocation1] sm:$0xff pattern:$0x73625140]
  %v5214 = vld.sshfl [vmem:[#allocation1 + $0x8] sm:$0xff pattern:$0x73625140]
  %v5215 = vld.sshfl [vmem:[#allocation1 + $0x10] sm:$0xff pattern:$0x73625140]
  %5218 = vrot.lane.b32.xlu0 %v4745, 17
  %v5219 = vpop.permute.xlu0 %5218
  %5220 = vrot.lane.b32.xlu0 %v4746, 17
  %v5221 = vpop.permute.xlu0 %5220
  %5222 = vrot.lane.b32.xlu0 %v4747, 17
  %v5223 = vpop.permute.xlu0 %5222
  %5224 = vrot.lane.b32.xlu0 %v4748, 17
  %v5225 = vpop.permute.xlu0 %5224
  %5226 = vrot.lane.b32.xlu0 %v4749, 17
  %v5227 = vpop.permute.xlu0 %5226
  %5228 = vrot.lane.b32.xlu0 %v4750, 17
  %v5229 = vpop.permute.xlu0 %5228
  %5230 = vrot.lane.b32.xlu0 %v4751, 17
  %v5231 = vpop.permute.xlu0 %5230
  %5232 = vrot.lane.b32.xlu0 %v4752, 17
  %v5233 = vpop.permute.xlu0 %5232
  %5234 = vrot.lane.b32.xlu0 %v4753, 17
  %v5235 = vpop.permute.xlu0 %5234
  %5236 = vrot.lane.b32.xlu0 %v4754, 17
  %v5237 = vpop.permute.xlu0 %5236
  %5238 = vrot.lane.b32.xlu0 %v4817, 17
  %v5239 = vpop.permute.xlu0 %5238
  %5240 = vrot.lane.b32.xlu0 %v4818, 17
  %v5241 = vpop.permute.xlu0 %5240
  %5242 = vrot.lane.b32.xlu0 %v4819, 17
  %v5243 = vpop.permute.xlu0 %5242
  %5244 = vrot.lane.b32.xlu0 %v4820, 17
  %v5245 = vpop.permute.xlu0 %5244
  %5246 = vrot.lane.b32.xlu0 %v4806, 17
  %v5247 = vpop.permute.xlu0 %5246
  %5248 = vrot.lane.b32.xlu0 %v4821, 17
  %v5249 = vpop.permute.xlu0 %5248
  %5250 = vrot.lane.b32.xlu0 %v4822, 17
  %v5251 = vpop.permute.xlu0 %5250
  %5252 = vrot.lane.b32.xlu0 %v4823, 17
  %v5253 = vpop.permute.xlu0 %5252
  %5254 = vrot.lane.b32.xlu0 %v4824, 17
  %v5255 = vpop.permute.xlu0 %5254
  %5256 = vrot.lane.b32.xlu0 %v4816, 17
  %v5257 = vpop.permute.xlu0 %5256
  %5258 = vrot.lane.b32.xlu0 %v4887, 17
  %v5259 = vpop.permute.xlu0 %5258
  %5260 = vrot.lane.b32.xlu0 %v4888, 17
  %v5261 = vpop.permute.xlu0 %5260
  %5262 = vrot.lane.b32.xlu0 %v4889, 17
  %v5263 = vpop.permute.xlu0 %5262
  %5264 = vrot.lane.b32.xlu0 %v4890, 17
  %v5265 = vpop.permute.xlu0 %5264
  %5266 = vrot.lane.b32.xlu0 %v4876, 17
  %v5267 = vpop.permute.xlu0 %5266
  %5268 = vrot.lane.b32.xlu0 %v4891, 17
  %v5269 = vpop.permute.xlu0 %5268
  %5270 = vrot.lane.b32.xlu0 %v4892, 17
  %v5271 = vpop.permute.xlu0 %5270
  %5272 = vrot.lane.b32.xlu0 %v4893, 17
  %v5273 = vpop.permute.xlu0 %5272
  %5274 = vrot.lane.b32.xlu0 %v4894, 17
  %v5275 = vpop.permute.xlu0 %5274
  %5276 = vrot.lane.b32.xlu0 %v4886, 17
  %v5277 = vpop.permute.xlu0 %5276
  %5278 = vrot.lane.b32.xlu0 %v4957, 17
  %v5279 = vpop.permute.xlu0 %5278
  %5280 = vrot.lane.b32.xlu0 %v4958, 17
  %v5281 = vpop.permute.xlu0 %5280
  %5282 = vrot.lane.b32.xlu0 %v4959, 17
  %v5283 = vpop.permute.xlu0 %5282
  %5284 = vrot.lane.b32.xlu0 %v4960, 17
  %v5285 = vpop.permute.xlu0 %5284
  %5286 = vrot.lane.b32.xlu0 %v4946, 17
  %v5287 = vpop.permute.xlu0 %5286
  %5288 = vrot.lane.b32.xlu0 %v4961, 17
  %v5289 = vpop.permute.xlu0 %5288
  %5290 = vrot.lane.b32.xlu0 %v4962, 17
  %v5291 = vpop.permute.xlu0 %5290
  %5292 = vrot.lane.b32.xlu0 %v4963, 17
  %v5293 = vpop.permute.xlu0 %5292
  %5294 = vrot.lane.b32.xlu0 %v4964, 17
  %v5295 = vpop.permute.xlu0 %5294
  %5296 = vrot.lane.b32.xlu0 %v4956, 17
  %v5297 = vpop.permute.xlu0 %5296
  %5298 = vrot.lane.b32.xlu0 %v4966, 17
  %v5299 = vpop.permute.xlu0 %5298
  %5300 = vrot.lane.b32.xlu0 %v4981, 17
  %v5301 = vpop.permute.xlu0 %5300
  %5302 = vrot.lane.b32.xlu0 %v4982, 17
  %v5303 = vpop.permute.xlu0 %5302
  %5304 = vrot.lane.b32.xlu0 %v4983, 17
  %v5305 = vpop.permute.xlu0 %5304
  %5306 = vrot.lane.b32.xlu0 %v4972, 17
  %v5307 = vpop.permute.xlu0 %5306
  %5308 = vrot.lane.b32.xlu0 %v4974, 17
  %v5309 = vpop.permute.xlu0 %5308
  %5310 = vrot.lane.b32.xlu0 %v4984, 17
  %v5311 = vpop.permute.xlu0 %5310
  %5312 = vrot.lane.b32.xlu0 %v4985, 17
  %v5313 = vpop.permute.xlu0 %5312
  %5314 = vrot.lane.b32.xlu0 %v4986, 17
  %v5315 = vpop.permute.xlu0 %5314
  %5316 = vrot.lane.b32.xlu0 %v4980, 17
  %v5317 = vpop.permute.xlu0 %5316
  %5318 = vrot.lane.b32.xlu0 %v5020, 17
  %v5319 = vpop.permute.xlu0 %5318
  %5320 = vrot.lane.b32.xlu0 %v5035, 17
  %v5321 = vpop.permute.xlu0 %5320
  %5322 = vrot.lane.b32.xlu0 %v5036, 17
  %v5323 = vpop.permute.xlu0 %5322
  %5324 = vrot.lane.b32.xlu0 %v5037, 17
  %v5325 = vpop.permute.xlu0 %5324
  %5326 = vrot.lane.b32.xlu0 %v5038, 17
  %v5327 = vpop.permute.xlu0 %5326
  %5328 = vrot.lane.b32.xlu0 %v5028, 17
  %v5329 = vpop.permute.xlu0 %5328
  %5330 = vrot.lane.b32.xlu0 %v5039, 17
  %v5331 = vpop.permute.xlu0 %5330
  %5332 = vrot.lane.b32.xlu0 %v5040, 17
  %v5333 = vpop.permute.xlu0 %5332
  %5334 = vrot.lane.b32.xlu0 %v5041, 17
  %v5335 = vpop.permute.xlu0 %5334
  %5336 = vrot.lane.b32.xlu0 %v5042, 17
  %v5337 = vpop.permute.xlu0 %5336
  %5338 = vrot.lane.b32.xlu0 %v5076, 17
  %v5339 = vpop.permute.xlu0 %5338
  %5340 = vrot.lane.b32.xlu0 %v5091, 17
  %v5341 = vpop.permute.xlu0 %5340
  %5342 = vrot.lane.b32.xlu0 %v5092, 17
  %v5343 = vpop.permute.xlu0 %5342
  %5344 = vrot.lane.b32.xlu0 %v5093, 17
  %v5345 = vpop.permute.xlu0 %5344
  %5346 = vrot.lane.b32.xlu0 %v5094, 17
  %v5347 = vpop.permute.xlu0 %5346
  %5348 = vrot.lane.b32.xlu0 %v5084, 17
  %v5349 = vpop.permute.xlu0 %5348
  %5350 = vrot.lane.b32.xlu0 %v5095, 17
  %v5351 = vpop.permute.xlu0 %5350
  %5352 = vrot.lane.b32.xlu0 %v5096, 17
  %v5353 = vpop.permute.xlu0 %5352
  %5354 = vrot.lane.b32.xlu0 %v5097, 17
  %v5355 = vpop.permute.xlu0 %5354
  %5356 = vrot.lane.b32.xlu0 %v5098, 17
  %v5357 = vpop.permute.xlu0 %5356
  %5358 = vrot.lane.b32.xlu0 %v5132, 17
  %v5359 = vpop.permute.xlu0 %5358
  %5360 = vrot.lane.b32.xlu0 %v5147, 17
  %v5361 = vpop.permute.xlu0 %5360
  %5362 = vrot.lane.b32.xlu0 %v5148, 17
  %v5363 = vpop.permute.xlu0 %5362
  %5364 = vrot.lane.b32.xlu0 %v5149, 17
  %v5365 = vpop.permute.xlu0 %5364
  %5366 = vrot.lane.b32.xlu0 %v5150, 17
  %v5367 = vpop.permute.xlu0 %5366
  %5368 = vrot.lane.b32.xlu0 %v5140, 17
  %v5369 = vpop.permute.xlu0 %5368
  %5370 = vrot.lane.b32.xlu0 %v5151, 17
  %v5371 = vpop.permute.xlu0 %5370
  %5372 = vrot.lane.b32.xlu0 %v5152, 17
  %v5373 = vpop.permute.xlu0 %5372
  %5374 = vrot.lane.b32.xlu0 %v5153, 17
  %v5375 = vpop.permute.xlu0 %5374
  %5376 = vrot.lane.b32.xlu0 %v5154, 17
  %v5377 = vpop.permute.xlu0 %5376
  %5378 = vrot.lane.b32.xlu0 %v5188, 17
  %v5379 = vpop.permute.xlu0 %5378
  %5380 = vrot.lane.b32.xlu0 %v5203, 17
  %v5381 = vpop.permute.xlu0 %5380
  %5382 = vrot.lane.b32.xlu0 %v5204, 17
  %v5383 = vpop.permute.xlu0 %5382
  %5384 = vrot.lane.b32.xlu0 %v5205, 17
  %v5385 = vpop.permute.xlu0 %5384
  %5386 = vrot.lane.b32.xlu0 %v5206, 17
  %v5387 = vpop.permute.xlu0 %5386
  %5388 = vrot.lane.b32.xlu0 %v5196, 17
  %v5389 = vpop.permute.xlu0 %5388
  %5390 = vrot.lane.b32.xlu0 %v5207, 17
  %v5391 = vpop.permute.xlu0 %5390
  %5392 = vrot.lane.b32.xlu0 %v5208, 17
  %v5393 = vpop.permute.xlu0 %5392
  %5394 = vrot.lane.b32.xlu0 %v5209, 17
  %v5395 = vpop.permute.xlu0 %5394
  %5396 = vrot.lane.b32.xlu0 %v5210, 17
  %v5397 = vpop.permute.xlu0 %5396
  %v5398 = vsel %vm840, %v5219, %v5221
  %v5399 = vsel %vm840, %v5221, %v5223
  %v5400 = vsel %vm840, %v5223, %v5225
  %v5401 = vsel %vm840, %v5225, %v5227
  %v5402 = vsel %vm840, %v5229, %v5231
  %v5403 = vsel %vm840, %v5231, %v5233
  %v5404 = vsel %vm840, %v5233, %v5235
  %v5405 = vsel %vm840, %v5235, %v5237
  %v5406 = vsel %vm840, %v5239, %v5241
  %v5407 = vsel %vm840, %v5241, %v5243
  %v5408 = vsel %vm840, %v5243, %v5245
  %v5409 = vsel %vm840, %v5245, %v5247
  %v5410 = vsel %vm840, %v5249, %v5251
  %v5411 = vsel %vm840, %v5251, %v5253
  %v5412 = vsel %vm840, %v5253, %v5255
  %v5413 = vsel %vm840, %v5255, %v5257
  %v5414 = vsel %vm840, %v5259, %v5261
  %v5415 = vsel %vm840, %v5261, %v5263
  %v5416 = vsel %vm840, %v5263, %v5265
  %v5417 = vsel %vm840, %v5265, %v5267
  %v5418 = vsel %vm840, %v5269, %v5271
  %v5419 = vsel %vm840, %v5271, %v5273
  %v5420 = vsel %vm840, %v5273, %v5275
  %v5421 = vsel %vm840, %v5275, %v5277
  %v5422 = vsel %vm840, %v5279, %v5281
  %v5423 = vsel %vm840, %v5281, %v5283
  %v5424 = vsel %vm840, %v5283, %v5285
  %v5425 = vsel %vm840, %v5285, %v5287
  %v5426 = vsel %vm840, %v5289, %v5291
  %v5427 = vsel %vm840, %v5291, %v5293
  %v5428 = vsel %vm840, %v5293, %v5295
  %v5429 = vsel %vm840, %v5295, %v5297
  %v5430 = vsel %vm840, %v5299, %v5301
  %v5431 = vsel %vm840, %v5301, %v5303
  %v5432 = vsel %vm840, %v5303, %v5305
  %v5433 = vsel %vm840, %v5305, %v5307
  %v5434 = vsel %vm840, %v5309, %v5311
  %v5435 = vsel %vm840, %v5311, %v5313
  %v5436 = vsel %vm840, %v5313, %v5315
  %v5437 = vsel %vm840, %v5315, %v5317
  %v5438 = vsel %vm840, %v5319, %v5321
  %v5439 = vsel %vm840, %v5321, %v5323
  %v5440 = vsel %vm840, %v5323, %v5325
  %v5441 = vsel %vm840, %v5325, %v5327
  %v5442 = vsel %vm840, %v5329, %v5331
  %v5443 = vsel %vm840, %v5331, %v5333
  %v5444 = vsel %vm840, %v5333, %v5335
  %v5445 = vsel %vm840, %v5335, %v5337
  %v5446 = vsel %vm840, %v5339, %v5341
  %v5447 = vsel %vm840, %v5341, %v5343
  %v5448 = vsel %vm840, %v5343, %v5345
  %v5449 = vsel %vm840, %v5345, %v5347
  %v5450 = vsel %vm840, %v5349, %v5351
  %v5451 = vsel %vm840, %v5351, %v5353
  %v5452 = vsel %vm840, %v5353, %v5355
  %v5453 = vsel %vm840, %v5355, %v5357
  %v5454 = vsel %vm840, %v5359, %v5361
  %v5455 = vsel %vm840, %v5361, %v5363
  %v5456 = vsel %vm840, %v5363, %v5365
  %v5457 = vsel %vm840, %v5365, %v5367
  %v5458 = vsel %vm840, %v5369, %v5371
  %v5459 = vsel %vm840, %v5371, %v5373
  %v5460 = vsel %vm840, %v5373, %v5375
  %v5461 = vsel %vm840, %v5375, %v5377
  %v5462 = vsel %vm840, %v5379, %v5381
  %v5463 = vsel %vm840, %v5381, %v5383
  %v5464 = vsel %vm840, %v5383, %v5385
  %v5465 = vsel %vm840, %v5385, %v5387
  %v5466 = vsel %vm840, %v5389, %v5391
  %v5467 = vsel %vm840, %v5391, %v5393
  %v5468 = vsel %vm840, %v5393, %v5395
  %v5469 = vsel %vm840, %v5395, %v5397
  %v5542 = vsel %vm2485, %v5215, 0
  %5544 = vmatpush.bf16.msra.mxu0 %v5426
  %5545 = vmatpush.bf16.msra.mxu0 %v5422
  %5546 = vmatpush.bf16.msra.mxu0 %v5418
  %5547 = vmatpush.bf16.msra.mxu0 %v5414
  %5548 = vmatpush.bf16.msra.mxu0 %v5410
  %5549 = vmatpush.bf16.msra.mxu0 %v5406
  %5550 = vmatpush.bf16.msra.mxu0 %v5402
  %5551 = vmatpush.bf16.msra.mxu0 %v5398
  %5552 = vmatmul.bf16.gmra.mxu0 %v5213
  %v5553 = vpop.f32.mrf.mxu0
  %v5554 = vadd.f32 0.0, %v5553
  %v5555 = vpop.f32.mrf.mxu0
  %5556 = vdwg.mxu0
  %5557 = vmatpush.bf16.msra.mxu0 %v5458
  %5558 = vmatpush.bf16.msra.mxu0 %v5454
  %5559 = vmatpush.bf16.msra.mxu0 %v5450
  %5560 = vmatpush.bf16.msra.mxu0 %v5446
  %5561 = vmatpush.bf16.msra.mxu0 %v5442
  %5562 = vmatpush.bf16.msra.mxu0 %v5438
  %5563 = vmatpush.bf16.msra.mxu0 %v5434
  %5564 = vmatpush.bf16.msra.mxu0 %v5430
  %5565 = vmatmul.bf16.gmra.mxu0 %v5214
  %v5566 = vpop.f32.mrf.mxu0
  %v5567 = vadd.f32 %v5554, %v5566
  %v5568 = vpop.f32.mrf.mxu0
  %5569 = vdwg.mxu0
  %5570 = vmatpush.bf16.msra.mxu0 0
  %5571 = vmatpush.bf16.msra.mxu0 0
  %5572 = vmatpush.bf16.msra.mxu0 0
  %5573 = vmatpush.bf16.msra.mxu0 0
  %5574 = vmatpush.bf16.msra.mxu0 0
  %5575 = vmatpush.bf16.msra.mxu0 0
  %5576 = vmatpush.bf16.msra.mxu0 %v5466
  %5577 = vmatpush.bf16.msra.mxu0 %v5462
  %5578 = vmatmul.bf16.gmra.mxu0 %v5542
  %v5579 = vpop.f32.mrf.mxu0
  %v5580 = vadd.f32 %v5567, %v5579
  %v5581 = vpop.f32.mrf.mxu0
  %5582 = vdwg.mxu0
  %5583 = vmatpush.bf16.msra.mxu0 %v5427
  %5584 = vmatpush.bf16.msra.mxu0 %v5423
  %5585 = vmatpush.bf16.msra.mxu0 %v5419
  %5586 = vmatpush.bf16.msra.mxu0 %v5415
  %5587 = vmatpush.bf16.msra.mxu0 %v5411
  %5588 = vmatpush.bf16.msra.mxu0 %v5407
  %5589 = vmatpush.bf16.msra.mxu0 %v5403
  %5590 = vmatpush.bf16.msra.mxu0 %v5399
  %5591 = vmatmul.bf16.gmra.mxu0 %v5213
  %v5592 = vpop.f32.mrf.mxu0
  %v5593 = vadd.f32 0.0, %v5592
  %v5594 = vpop.f32.mrf.mxu0
  %5595 = vdwg.mxu0
  %5596 = vmatpush.bf16.msra.mxu0 %v5459
  %5597 = vmatpush.bf16.msra.mxu0 %v5455
  %5598 = vmatpush.bf16.msra.mxu0 %v5451
  %5599 = vmatpush.bf16.msra.mxu0 %v5447
  %5600 = vmatpush.bf16.msra.mxu0 %v5443
  %5601 = vmatpush.bf16.msra.mxu0 %v5439
  %5602 = vmatpush.bf16.msra.mxu0 %v5435
  %5603 = vmatpush.bf16.msra.mxu0 %v5431
  %5604 = vmatmul.bf16.gmra.mxu0 %v5214
  %v5605 = vpop.f32.mrf.mxu0
  %v5606 = vadd.f32 %v5593, %v5605
  %v5607 = vpop.f32.mrf.mxu0
  %5608 = vdwg.mxu0
  %5609 = vmatpush.bf16.msra.mxu0 0
  %5610 = vmatpush.bf16.msra.mxu0 0
  %5611 = vmatpush.bf16.msra.mxu0 0
  %5612 = vmatpush.bf16.msra.mxu0 0
  %5613 = vmatpush.bf16.msra.mxu0 0
  %5614 = vmatpush.bf16.msra.mxu0 0
  %5615 = vmatpush.bf16.msra.mxu0 %v5467
  %5616 = vmatpush.bf16.msra.mxu0 %v5463
  %5617 = vmatmul.bf16.gmra.mxu0 %v5542
  %v5618 = vpop.f32.mrf.mxu0
  %v5619 = vadd.f32 %v5606, %v5618
  %v5620 = vpop.f32.mrf.mxu0
  %5621 = vdwg.mxu0
  %5622 = vmatpush.bf16.msra.mxu0 %v5428
  %5623 = vmatpush.bf16.msra.mxu0 %v5424
  %5624 = vmatpush.bf16.msra.mxu0 %v5420
  %5625 = vmatpush.bf16.msra.mxu0 %v5416
  %5626 = vmatpush.bf16.msra.mxu0 %v5412
  %5627 = vmatpush.bf16.msra.mxu0 %v5408
  %5628 = vmatpush.bf16.msra.mxu0 %v5404
  %5629 = vmatpush.bf16.msra.mxu0 %v5400
  %5630 = vmatmul.bf16.gmra.mxu0 %v5213
  %v5631 = vpop.f32.mrf.mxu0
  %v5632 = vadd.f32 0.0, %v5631
  %v5633 = vpop.f32.mrf.mxu0
  %5634 = vdwg.mxu0
  %5635 = vmatpush.bf16.msra.mxu0 %v5460
  %5636 = vmatpush.bf16.msra.mxu0 %v5456
  %5637 = vmatpush.bf16.msra.mxu0 %v5452
  %5638 = vmatpush.bf16.msra.mxu0 %v5448
  %5639 = vmatpush.bf16.msra.mxu0 %v5444
  %5640 = vmatpush.bf16.msra.mxu0 %v5440
  %5641 = vmatpush.bf16.msra.mxu0 %v5436
  %5642 = vmatpush.bf16.msra.mxu0 %v5432
  %5643 = vmatmul.bf16.gmra.mxu0 %v5214
  %v5644 = vpop.f32.mrf.mxu0
  %v5645 = vadd.f32 %v5632, %v5644
  %v5646 = vpop.f32.mrf.mxu0
  %5647 = vdwg.mxu0
  %5648 = vmatpush.bf16.msra.mxu0 0
  %5649 = vmatpush.bf16.msra.mxu0 0
  %5650 = vmatpush.bf16.msra.mxu0 0
  %5651 = vmatpush.bf16.msra.mxu0 0
  %5652 = vmatpush.bf16.msra.mxu0 0
  %5653 = vmatpush.bf16.msra.mxu0 0
  %5654 = vmatpush.bf16.msra.mxu0 %v5468
  %5655 = vmatpush.bf16.msra.mxu0 %v5464
  %5656 = vmatmul.bf16.gmra.mxu0 %v5542
  %v5657 = vpop.f32.mrf.mxu0
  %v5658 = vadd.f32 %v5645, %v5657
  %v5659 = vpop.f32.mrf.mxu0
  %5660 = vdwg.mxu0
  %5661 = vmatpush.bf16.msra.mxu0 %v5429
  %5662 = vmatpush.bf16.msra.mxu0 %v5425
  %5663 = vmatpush.bf16.msra.mxu0 %v5421
  %5664 = vmatpush.bf16.msra.mxu0 %v5417
  %5665 = vmatpush.bf16.msra.mxu0 %v5413
  %5666 = vmatpush.bf16.msra.mxu0 %v5409
  %5667 = vmatpush.bf16.msra.mxu0 %v5405
  %5668 = vmatpush.bf16.msra.mxu0 %v5401
  %5669 = vmatmul.bf16.gmra.mxu0 %v5213
  %v5670 = vpop.f32.mrf.mxu0
  %v5671 = vadd.f32 0.0, %v5670
  %v5672 = vpop.f32.mrf.mxu0
  %5673 = vdwg.mxu0
  %5674 = vmatpush.bf16.msra.mxu0 %v5461
  %5675 = vmatpush.bf16.msra.mxu0 %v5457
  %5676 = vmatpush.bf16.msra.mxu0 %v5453
  %5677 = vmatpush.bf16.msra.mxu0 %v5449
  %5678 = vmatpush.bf16.msra.mxu0 %v5445
  %5679 = vmatpush.bf16.msra.mxu0 %v5441
  %5680 = vmatpush.bf16.msra.mxu0 %v5437
  %5681 = vmatpush.bf16.msra.mxu0 %v5433
  %5682 = vmatmul.bf16.gmra.mxu0 %v5214
  %v5683 = vpop.f32.mrf.mxu0
  %v5684 = vadd.f32 %v5671, %v5683
  %v5685 = vpop.f32.mrf.mxu0
  %5686 = vdwg.mxu0
  %5687 = vmatpush.bf16.msra.mxu0 0
  %5688 = vmatpush.bf16.msra.mxu0 0
  %5689 = vmatpush.bf16.msra.mxu0 0
  %5690 = vmatpush.bf16.msra.mxu0 0
  %5691 = vmatpush.bf16.msra.mxu0 0
  %5692 = vmatpush.bf16.msra.mxu0 0
  %5693 = vmatpush.bf16.msra.mxu0 %v5469
  %5694 = vmatpush.bf16.msra.mxu0 %v5465
  %5695 = vmatmul.bf16.gmra.mxu0 %v5542
  %v5696 = vpop.f32.mrf.mxu0
  %v5697 = vadd.f32 %v5684, %v5696
  %v5698 = vpop.f32.mrf.mxu0
  %5699 = vdwg.mxu0
  %v5704 = vrot.slane %v5619, 4
  %v5705 = vrot.slane %v5697, 4
  %v5706 = vsel %vm733, %v5580, %v5704
  %v5707 = vsel %vm733, %v5658, %v5705
  %5710 = vst [vmem:[%s6] sm:$0xff] %v5706
  %5711 = vst [vmem:[%s6 + $0x8] sm:$0xff] %v5707
  // Predicated region
  $region26: #{bf_cnn_forward.1} parent=0 // pred_check
    _
  $region27: #{bf_cnn_forward.1} parent=0 // pred_check_branch
    %5713 = sbr.rel (0) target = $region29
  $region28: #{bf_cnn_forward.1} parent=0 // pred_region
    _
  $region29: #{bf_cnn_forward.1} parent=0 // pred_fallthru
    _
  // Predicated region
  $region30: #{bf_cnn_forward.1} parent=0 // pred_check
    _
  $region31: #{bf_cnn_forward.1} parent=0 // pred_check_branch
    %5715 = sbr.rel (0) target = $region33
  $region32: #{bf_cnn_forward.1} parent=0 // pred_region
    _
  $region33: #{bf_cnn_forward.1} parent=0 // pred_fallthru
    _

</llo_original>
